<compile_context>
chip_gen: v7x
topology: tpu7x:2x2x1
jax: 0.10.0
libtpu: 0.0.40
codegen_flags: <defaults>
</compile_context>

<pallas_src>
import functools

import jax
import jax.numpy as jnp
from jax import lax
from jax.experimental import pallas as pl
from jax.experimental.pallas import tpu as pltpu

CHANNELS = (3, 32, 32, 16, 3)     # input, conv1..conv4 output channels
MAX_C = 32                        # widest activation held in the scratch
LANE = 128
MARGIN_L = 128                    # left pad margin (lanes) of the activation scratch


def _round_up(x, m):
    return (x + m - 1) // m * m


def _fused_kernel(mask_ref, x_ref,
                  w1_ref, b1_ref, w2_ref, b2_ref, w3_ref, b3_ref, w4_ref, b4_ref,
                  o_ref, act_ref, patch_ref, *, Wp, L, LBUF):
    """Fused conv3x3->relu x3 -> conv3x3->sigmoid for one block of B images.

    Activations are channel-major and lane-dense: (C, lanes).  The lane axis holds B
    zero-padded (Hp*Wp) pixel lattices back to back, starting at lane MARGIN_L.

      mask_ref : (1, L)          1.0 at lattice-interior pixels, 0.0 on the border
      x_ref    : (1, 3, L)       padded, lattice-flattened input block
      wi_ref   : (cout, 9*cin)   im2col-packed weights, column = (dy*3+dx)*cin + ci
      bi_ref   : (cout, 1)       bias
      o_ref    : (1, 3, L)       sigmoid output over the padded lattice (border junk
                                 is sliced off by the wrapper)
      act_ref  : (MAX_C, LBUF)   VMEM activation scratch (zero margins on both sides)
      patch_ref: (9*MAX_C, L)    VMEM im2col patch matrix
    """
    # Zero only the pad margins; they are never written below.  Shifted tap reads
    # that land in a margin only feed border output columns, but they must still be
    # finite zeros so no garbage (NaN) can survive the border-mask multiply.
    act_ref[:, 0:MARGIN_L] = jnp.zeros((MAX_C, MARGIN_L), jnp.float32)
    act_ref[:, MARGIN_L + L:LBUF] = jnp.zeros((MAX_C, LBUF - MARGIN_L - L),
                                              jnp.float32)

    mask = mask_ref[...]                                           # (1, L)

    # Stage the input (already border-zero) into channels 0:3 of the scratch.
    act_ref[0:CHANNELS[0], MARGIN_L:MARGIN_L + L] = x_ref[0]

    def conv3x3(cin, w_ref, b_ref):
        # Build the im2col patch: row block t = activation shifted by the tap offset.
        for t in range(9):
            dy, dx = t // 3, t % 3
            s = (dy - 1) * Wp + (dx - 1)                           # static lane shift
            patch_ref[t * cin:(t + 1) * cin, :] = (
                act_ref[0:cin, MARGIN_L + s:MARGIN_L + s + L])
        # One MXU matmul over the whole (tap x cin) reduction, f32 accumulate.
        out = jnp.dot(w_ref[...], patch_ref[0:9 * cin, :],
                      preferred_element_type=jnp.float32)
        return out + b_ref[...]                                    # (cout,L) + (cout,1)

    # conv1..conv3: ReLU, re-zero lattice borders, write back in storage layout
    # (no transpose: the (cout, L) accumulator IS the storage layout).
    a = jnp.maximum(conv3x3(CHANNELS[0], w1_ref, b1_ref), 0.0) * mask
    act_ref[0:CHANNELS[1], MARGIN_L:MARGIN_L + L] = a
    a = jnp.maximum(conv3x3(CHANNELS[1], w2_ref, b2_ref), 0.0) * mask
    act_ref[0:CHANNELS[2], MARGIN_L:MARGIN_L + L] = a
    a = jnp.maximum(conv3x3(CHANNELS[2], w3_ref, b3_ref), 0.0) * mask
    act_ref[0:CHANNELS[3], MARGIN_L:MARGIN_L + L] = a
    # conv4 + sigmoid (exp goes to the EUP slot), lane-dense store.
    a = conv3x3(CHANNELS[3], w4_ref, b4_ref)
    o_ref[0] = 1.0 / (1.0 + jnp.exp(-a))


def _pick_batch_block(n):
    """Largest B <= 8 dividing N, preferring >= 2 grid steps (v7x has 2 TensorCores)."""
    for b in (8, 4, 2, 1):
        if n % b == 0 and n // b >= 2:
            return b
    for b in (8, 4, 2, 1):
        if n % b == 0:
            return b
    return 1


@jax.jit
def image_enhancement_nn(x_nchw, params):
    """Forward pass equivalent to ImageEnhancementNN.forward (NCHW in, NCHW out).

    `params` = ((w1, b1), ..., (w4, b4)) with weights in PyTorch OIHW layout.
    """
    (w1, b1), (w2, b2), (w3, b3), (w4, b4) = params
    N, C, H, W = x_nchw.shape
    assert C == CHANNELS[0]
    B = _pick_batch_block(N)                 # images per grid step (folded into lanes)
    G = N // B
    Hp, Wp = H + 2, W + 2
    Lp = Hp * Wp                             # one zero-padded pixel lattice
    L = B * Lp                               # lane extent of one grid step
    LBUF = _round_up(MARGIN_L + L + Wp + 1, LANE)

    # --- tiny host/XLA-side prep (3-channel input, weights, border mask) -----------
    # Input: zero-pad spatially, flatten the padded lattice, fold B images into lanes.
    xp = jnp.pad(x_nchw.astype(jnp.float32), ((0, 0), (0, 0), (1, 1), (1, 1)))
    xp = xp.reshape(G, B, C, Lp).transpose(0, 2, 1, 3).reshape(G, C, L)

    def prep_w(w):   # OIHW -> im2col-packed (cout, 9*cin), column = (dy*3+dx)*cin + ci
        cout, cin = w.shape[0], w.shape[1]
        return jnp.transpose(w, (0, 2, 3, 1)).reshape(cout, 9 * cin).astype(jnp.float32)

    def prep_b(b):
        return b.reshape(-1, 1).astype(jnp.float32)

    ws = [prep_w(w) for w in (w1, w2, w3, w4)]
    bs = [prep_b(b) for b in (b1, b2, b3, b4)]

    # Border mask over one lattice, tiled across the B images of a block.
    yy = jnp.arange(Hp)[:, None]
    xx = jnp.arange(Wp)[None, :]
    m = ((yy >= 1) & (yy <= H) & (xx >= 1) & (xx <= W)).astype(jnp.float32)
    mask = jnp.tile(m.reshape(-1), B).reshape(1, L)

    def full(shape):  # whole-array block, identical for every grid step
        return pl.BlockSpec(shape, lambda g: (0,) * len(shape))

    in_specs = [full((1, L)),                                        # border mask
                pl.BlockSpec((1, C, L), lambda g: (g, 0, 0))]        # input block
    for i in range(4):
        in_specs.append(full((CHANNELS[i + 1], 9 * CHANNELS[i])))    # packed weights
        in_specs.append(full((CHANNELS[i + 1], 1)))                  # bias

    out = pl.pallas_call(
        functools.partial(_fused_kernel, Wp=Wp, L=L, LBUF=LBUF),
        grid=(G,),
        in_specs=in_specs,
        out_specs=pl.BlockSpec((1, CHANNELS[4], L), lambda g: (g, 0, 0)),
        out_shape=jax.ShapeDtypeStruct((G, CHANNELS[4], L), jnp.float32),
        scratch_shapes=[pltpu.VMEM((MAX_C, LBUF), jnp.float32),      # activations
                        pltpu.VMEM((9 * MAX_C, L), jnp.float32)],    # im2col patch
        compiler_params=pltpu.CompilerParams(
            dimension_semantics=("parallel",)),
    )(mask, xp, ws[0], bs[0], ws[1], bs[1], ws[2], bs[2], ws[3], bs[3])

    # (G, 3, B*Lp) padded-lattice output -> NCHW, drop the 1-pixel border (XLA side).
    out = out.reshape(G, CHANNELS[4], B, Hp, Wp).transpose(0, 2, 1, 3, 4)
    out = out.reshape(N, CHANNELS[4], Hp, Wp)
    return out[:, :, 1:H + 1, 1:W + 1]


def init_conv_params(key, cin, cout):
    """PyTorch Conv2d default init (uniform +-1/sqrt(fan_in)), OIHW layout."""
    k_w, k_b = jax.random.split(key)
    fan_in = cin * 3 * 3
    bound = 1.0 / float(fan_in) ** 0.5
    w = jax.random.uniform(k_w, (cout, cin, 3, 3), jnp.float32, -bound, bound)
    b = jax.random.uniform(k_b, (cout,), jnp.float32, -bound, bound)
    return w, b


def make_params(seed=0):
    keys = jax.random.split(jax.random.PRNGKey(seed), 4)
    return tuple(init_conv_params(keys[i], CHANNELS[i], CHANNELS[i + 1])
                 for i in range(4))


def _reference_forward(x_nchw, params):
    """Pure-JAX (XLA) reference used only for the correctness check."""
    def conv(x, w, b):
        y = lax.conv_general_dilated(x, w, (1, 1), "SAME",
                                     dimension_numbers=("NCHW", "OIHW", "NCHW"),
                                     precision=lax.Precision.HIGHEST)
        return y + b.reshape(1, -1, 1, 1)
    (w1, b1), (w2, b2), (w3, b3), (w4, b4) = params
    x = jax.nn.relu(conv(x_nchw, w1, b1))
    x = jax.nn.relu(conv(x, w2, b2))
    x = jax.nn.relu(conv(x, w3, b3))
    return jax.nn.sigmoid(conv(x, w4, b4))


if __name__ == "__main__":
    params = make_params(seed=0)

    # N=2 -> B=1 per grid step, 2 grid steps (both v7x TensorCores get work).
    x = jax.random.normal(jax.random.PRNGKey(0), (2, 3, 16, 16), jnp.float32)
    y = jax.block_until_ready(image_enhancement_nn(x, params))
    assert y.shape == (2, 3, 16, 16)
    assert bool(jnp.all((y >= 0.0) & (y <= 1.0)))           # sigmoid output range
    err = float(jnp.max(jnp.abs(y - _reference_forward(x, params))))
    assert err < 1e-3, f"mismatch vs XLA reference (N=2): max abs err {err}"

    # Batched path: N=8 -> B=4 images folded into the lane axis per grid step.
    x8 = jax.random.normal(jax.random.PRNGKey(1), (8, 3, 16, 16), jnp.float32)
    y8 = jax.block_until_ready(image_enhancement_nn(x8, params))
    err8 = float(jnp.max(jnp.abs(y8 - _reference_forward(x8, params))))
    assert err8 < 1e-3, f"mismatch vs XLA reference (N=8): max abs err {err8}"

    print("KERNEL_OK")
</pallas_src>

<mosaic_0001>
module attributes {stable_mosaic.version = 11 : i64} {
  func.func @_fused_kernel(%arg0: i32, %arg1: memref<1x324xf32, #tpu.memory_space<vmem>>, %arg2: memref<1x3x324xf32, #tpu.memory_space<vmem>>, %arg3: memref<32x27xf32, #tpu.memory_space<vmem>>, %arg4: memref<32x1xf32, #tpu.memory_space<vmem>>, %arg5: memref<32x288xf32, #tpu.memory_space<vmem>>, %arg6: memref<32x1xf32, #tpu.memory_space<vmem>>, %arg7: memref<16x288xf32, #tpu.memory_space<vmem>>, %arg8: memref<16x1xf32, #tpu.memory_space<vmem>>, %arg9: memref<3x144xf32, #tpu.memory_space<vmem>>, %arg10: memref<3x1xf32, #tpu.memory_space<vmem>>, %arg11: memref<1x3x324xf32, #tpu.memory_space<vmem>>, %arg12: memref<32x512xf32, #tpu.memory_space<vmem>>, %arg13: memref<288x324xf32, #tpu.memory_space<vmem>>) attributes {dimension_semantics = [#tpu.dimension_semantics<parallel>], iteration_bounds = array<i64: 2>, scalar_prefetch = 0 : i64, scratch_operands = 2 : i64, tpu.core_type = #tpu.core_type<tc>, window_params = [{pipeline_mode = #tpu.pipeline_mode<synchronous>, transform_indices = @transform_0, window_bounds = array<i64: 1, 324>}, {transform_indices = @transform_1, window_bounds = array<i64: 1, 3, 324>}, {pipeline_mode = #tpu.pipeline_mode<synchronous>, transform_indices = @transform_2, window_bounds = array<i64: 32, 27>}, {pipeline_mode = #tpu.pipeline_mode<synchronous>, transform_indices = @transform_3, window_bounds = array<i64: 32, 1>}, {pipeline_mode = #tpu.pipeline_mode<synchronous>, transform_indices = @transform_4, window_bounds = array<i64: 32, 288>}, {pipeline_mode = #tpu.pipeline_mode<synchronous>, transform_indices = @transform_5, window_bounds = array<i64: 32, 1>}, {pipeline_mode = #tpu.pipeline_mode<synchronous>, transform_indices = @transform_6, window_bounds = array<i64: 16, 288>}, {pipeline_mode = #tpu.pipeline_mode<synchronous>, transform_indices = @transform_7, window_bounds = array<i64: 16, 1>}, {pipeline_mode = #tpu.pipeline_mode<synchronous>, transform_indices = @transform_8, window_bounds = array<i64: 3, 144>}, {pipeline_mode = #tpu.pipeline_mode<synchronous>, transform_indices = @transform_9, window_bounds = array<i64: 3, 1>}, {transform_indices = @transform_10, window_bounds = array<i64: 1, 3, 324>}]} {
    %cst = arith.constant 0.000000e+00 : f32
    %0 = vector.broadcast %cst : f32 to vector<32x128xf32>
    %c0 = arith.constant 0 : index
    %c0_0 = arith.constant 0 : index
    %1 = vector.load %arg12[%c0, %c0_0] : memref<32x512xf32, #tpu.memory_space<vmem>>, vector<32x128xf32>
    tpu.vector_store %arg12[%c0, %c0_0], %0 {strides = array<i32>} : memref<32x512xf32, #tpu.memory_space<vmem>>, vector<32x128xf32>,
    %cst_1 = arith.constant 0.000000e+00 : f32
    %2 = vector.broadcast %cst_1 : f32 to vector<32x60xf32>
    %c0_2 = arith.constant 0 : index
    %c452 = arith.constant 452 : index
    %3 = vector.load %arg12[%c0_2, %c452] : memref<32x512xf32, #tpu.memory_space<vmem>>, vector<32x60xf32>
    tpu.vector_store %arg12[%c0_2, %c452], %2 {strides = array<i32>} : memref<32x512xf32, #tpu.memory_space<vmem>>, vector<32x60xf32>,
    %c0_3 = arith.constant 0 : index
    %c0_4 = arith.constant 0 : index
    %4 = vector.load %arg1[%c0_3, %c0_4] : memref<1x324xf32, #tpu.memory_space<vmem>>, vector<1x324xf32>
    %c0_5 = arith.constant 0 : index
    %c0_6 = arith.constant 0 : index
    %c0_7 = arith.constant 0 : index
    %5 = vector.load %arg2[%c0_5, %c0_6, %c0_7] : memref<1x3x324xf32, #tpu.memory_space<vmem>>, vector<1x3x324xf32>
    %6 = vector.shape_cast %5 : vector<1x3x324xf32> to vector<3x324xf32>
    %c0_8 = arith.constant 0 : index
    %c128 = arith.constant 128 : index
    %7 = vector.load %arg12[%c0_8, %c128] : memref<32x512xf32, #tpu.memory_space<vmem>>, vector<3x324xf32>
    tpu.vector_store %arg12[%c0_8, %c128], %6 {strides = array<i32>} : memref<32x512xf32, #tpu.memory_space<vmem>>, vector<3x324xf32>,
    %c0_9 = arith.constant 0 : index
    %c109 = arith.constant 109 : index
    %8 = vector.load %arg12[%c0_9, %c109] : memref<32x512xf32, #tpu.memory_space<vmem>>, vector<3x324xf32>
    %c0_10 = arith.constant 0 : index
    %c0_11 = arith.constant 0 : index
    %9 = vector.load %arg13[%c0_10, %c0_11] : memref<288x324xf32, #tpu.memory_space<vmem>>, vector<3x324xf32>
    tpu.vector_store %arg13[%c0_10, %c0_11], %8 {strides = array<i32>} : memref<288x324xf32, #tpu.memory_space<vmem>>, vector<3x324xf32>,
    %c0_12 = arith.constant 0 : index
    %c110 = arith.constant 110 : index
    %10 = vector.load %arg12[%c0_12, %c110] : memref<32x512xf32, #tpu.memory_space<vmem>>, vector<3x324xf32>
    %c3 = arith.constant 3 : index
    %c0_13 = arith.constant 0 : index
    %11 = vector.load %arg13[%c3, %c0_13] : memref<288x324xf32, #tpu.memory_space<vmem>>, vector<3x324xf32>
    tpu.vector_store %arg13[%c3, %c0_13], %10 {strides = array<i32>} : memref<288x324xf32, #tpu.memory_space<vmem>>, vector<3x324xf32>,
    %c0_14 = arith.constant 0 : index
    %c111 = arith.constant 111 : index
    %12 = vector.load %arg12[%c0_14, %c111] : memref<32x512xf32, #tpu.memory_space<vmem>>, vector<3x324xf32>
    %c6 = arith.constant 6 : index
    %c0_15 = arith.constant 0 : index
    %13 = vector.load %arg13[%c6, %c0_15] : memref<288x324xf32, #tpu.memory_space<vmem>>, vector<3x324xf32>
    tpu.vector_store %arg13[%c6, %c0_15], %12 {strides = array<i32>} : memref<288x324xf32, #tpu.memory_space<vmem>>, vector<3x324xf32>,
    %c0_16 = arith.constant 0 : index
    %c127 = arith.constant 127 : index
    %14 = vector.load %arg12[%c0_16, %c127] : memref<32x512xf32, #tpu.memory_space<vmem>>, vector<3x324xf32>
    %c9 = arith.constant 9 : index
    %c0_17 = arith.constant 0 : index
    %15 = vector.load %arg13[%c9, %c0_17] : memref<288x324xf32, #tpu.memory_space<vmem>>, vector<3x324xf32>
    tpu.vector_store %arg13[%c9, %c0_17], %14 {strides = array<i32>} : memref<288x324xf32, #tpu.memory_space<vmem>>, vector<3x324xf32>,
    %c0_18 = arith.constant 0 : index
    %c128_19 = arith.constant 128 : index
    %16 = vector.load %arg12[%c0_18, %c128_19] : memref<32x512xf32, #tpu.memory_space<vmem>>, vector<3x324xf32>
    %c12 = arith.constant 12 : index
    %c0_20 = arith.constant 0 : index
    %17 = vector.load %arg13[%c12, %c0_20] : memref<288x324xf32, #tpu.memory_space<vmem>>, vector<3x324xf32>
    tpu.vector_store %arg13[%c12, %c0_20], %16 {strides = array<i32>} : memref<288x324xf32, #tpu.memory_space<vmem>>, vector<3x324xf32>,
    %c0_21 = arith.constant 0 : index
    %c129 = arith.constant 129 : index
    %18 = vector.load %arg12[%c0_21, %c129] : memref<32x512xf32, #tpu.memory_space<vmem>>, vector<3x324xf32>
    %c15 = arith.constant 15 : index
    %c0_22 = arith.constant 0 : index
    %19 = vector.load %arg13[%c15, %c0_22] : memref<288x324xf32, #tpu.memory_space<vmem>>, vector<3x324xf32>
    tpu.vector_store %arg13[%c15, %c0_22], %18 {strides = array<i32>} : memref<288x324xf32, #tpu.memory_space<vmem>>, vector<3x324xf32>,
    %c0_23 = arith.constant 0 : index
    %c145 = arith.constant 145 : index
    %20 = vector.load %arg12[%c0_23, %c145] : memref<32x512xf32, #tpu.memory_space<vmem>>, vector<3x324xf32>
    %c18 = arith.constant 18 : index
    %c0_24 = arith.constant 0 : index
    %21 = vector.load %arg13[%c18, %c0_24] : memref<288x324xf32, #tpu.memory_space<vmem>>, vector<3x324xf32>
    tpu.vector_store %arg13[%c18, %c0_24], %20 {strides = array<i32>} : memref<288x324xf32, #tpu.memory_space<vmem>>, vector<3x324xf32>,
    %c0_25 = arith.constant 0 : index
    %c146 = arith.constant 146 : index
    %22 = vector.load %arg12[%c0_25, %c146] : memref<32x512xf32, #tpu.memory_space<vmem>>, vector<3x324xf32>
    %c21 = arith.constant 21 : index
    %c0_26 = arith.constant 0 : index
    %23 = vector.load %arg13[%c21, %c0_26] : memref<288x324xf32, #tpu.memory_space<vmem>>, vector<3x324xf32>
    tpu.vector_store %arg13[%c21, %c0_26], %22 {strides = array<i32>} : memref<288x324xf32, #tpu.memory_space<vmem>>, vector<3x324xf32>,
    %c0_27 = arith.constant 0 : index
    %c147 = arith.constant 147 : index
    %24 = vector.load %arg12[%c0_27, %c147] : memref<32x512xf32, #tpu.memory_space<vmem>>, vector<3x324xf32>
    %c24 = arith.constant 24 : index
    %c0_28 = arith.constant 0 : index
    %25 = vector.load %arg13[%c24, %c0_28] : memref<288x324xf32, #tpu.memory_space<vmem>>, vector<3x324xf32>
    tpu.vector_store %arg13[%c24, %c0_28], %24 {strides = array<i32>} : memref<288x324xf32, #tpu.memory_space<vmem>>, vector<3x324xf32>,
    %c0_29 = arith.constant 0 : index
    %c0_30 = arith.constant 0 : index
    %26 = vector.load %arg3[%c0_29, %c0_30] : memref<32x27xf32, #tpu.memory_space<vmem>>, vector<32x27xf32>
    %c0_31 = arith.constant 0 : index
    %c0_32 = arith.constant 0 : index
    %27 = vector.load %arg13[%c0_31, %c0_32] : memref<288x324xf32, #tpu.memory_space<vmem>>, vector<27x324xf32>
    %cst_33 = arith.constant dense<0.000000e+00> : vector<32x324xf32>
    %28 = tpu.matmul %26, %27, %cst_33 {dimension_numbers = #tpu.dot_dimension_numbers<[1], [0], [0], [1], [0, 0, 1, 1], [], []>} : vector<32x27xf32>, vector<27x324xf32>, vector<32x324xf32> -> vector<32x324xf32>
    %c0_34 = arith.constant 0 : index
    %c0_35 = arith.constant 0 : index
    %29 = vector.load %arg4[%c0_34, %c0_35] : memref<32x1xf32, #tpu.memory_space<vmem>>, vector<32x1xf32>
    %30 = vector.broadcast %29 : vector<32x1xf32> to vector<32x324xf32>
    %31 = arith.addf %28, %30 : vector<32x324xf32>
    %cst_36 = arith.constant 0.000000e+00 : f32
    %32 = vector.broadcast %cst_36 : f32 to vector<32x324xf32>
    %33 = arith.maximumf %31, %32 : vector<32x324xf32>
    %34 = vector.broadcast %4 : vector<1x324xf32> to vector<32x324xf32>
    %35 = arith.mulf %33, %34 : vector<32x324xf32>
    %c0_37 = arith.constant 0 : index
    %c128_38 = arith.constant 128 : index
    %36 = vector.load %arg12[%c0_37, %c128_38] : memref<32x512xf32, #tpu.memory_space<vmem>>, vector<32x324xf32>
    tpu.vector_store %arg12[%c0_37, %c128_38], %35 {strides = array<i32>} : memref<32x512xf32, #tpu.memory_space<vmem>>, vector<32x324xf32>,
    %c0_39 = arith.constant 0 : index
    %c109_40 = arith.constant 109 : index
    %37 = vector.load %arg12[%c0_39, %c109_40] : memref<32x512xf32, #tpu.memory_space<vmem>>, vector<32x324xf32>
    %c0_41 = arith.constant 0 : index
    %c0_42 = arith.constant 0 : index
    %38 = vector.load %arg13[%c0_41, %c0_42] : memref<288x324xf32, #tpu.memory_space<vmem>>, vector<32x324xf32>
    tpu.vector_store %arg13[%c0_41, %c0_42], %37 {strides = array<i32>} : memref<288x324xf32, #tpu.memory_space<vmem>>, vector<32x324xf32>,
    %c0_43 = arith.constant 0 : index
    %c110_44 = arith.constant 110 : index
    %39 = vector.load %arg12[%c0_43, %c110_44] : memref<32x512xf32, #tpu.memory_space<vmem>>, vector<32x324xf32>
    %c32 = arith.constant 32 : index
    %c0_45 = arith.constant 0 : index
    %40 = vector.load %arg13[%c32, %c0_45] : memref<288x324xf32, #tpu.memory_space<vmem>>, vector<32x324xf32>
    tpu.vector_store %arg13[%c32, %c0_45], %39 {strides = array<i32>} : memref<288x324xf32, #tpu.memory_space<vmem>>, vector<32x324xf32>,
    %c0_46 = arith.constant 0 : index
    %c111_47 = arith.constant 111 : index
    %41 = vector.load %arg12[%c0_46, %c111_47] : memref<32x512xf32, #tpu.memory_space<vmem>>, vector<32x324xf32>
    %c64 = arith.constant 64 : index
    %c0_48 = arith.constant 0 : index
    %42 = vector.load %arg13[%c64, %c0_48] : memref<288x324xf32, #tpu.memory_space<vmem>>, vector<32x324xf32>
    tpu.vector_store %arg13[%c64, %c0_48], %41 {strides = array<i32>} : memref<288x324xf32, #tpu.memory_space<vmem>>, vector<32x324xf32>,
    %c0_49 = arith.constant 0 : index
    %c127_50 = arith.constant 127 : index
    %43 = vector.load %arg12[%c0_49, %c127_50] : memref<32x512xf32, #tpu.memory_space<vmem>>, vector<32x324xf32>
    %c96 = arith.constant 96 : index
    %c0_51 = arith.constant 0 : index
    %44 = vector.load %arg13[%c96, %c0_51] : memref<288x324xf32, #tpu.memory_space<vmem>>, vector<32x324xf32>
    tpu.vector_store %arg13[%c96, %c0_51], %43 {strides = array<i32>} : memref<288x324xf32, #tpu.memory_space<vmem>>, vector<32x324xf32>,
    %c0_52 = arith.constant 0 : index
    %c128_53 = arith.constant 128 : index
    %45 = vector.load %arg12[%c0_52, %c128_53] : memref<32x512xf32, #tpu.memory_space<vmem>>, vector<32x324xf32>
    %c128_54 = arith.constant 128 : index
    %c0_55 = arith.constant 0 : index
    %46 = vector.load %arg13[%c128_54, %c0_55] : memref<288x324xf32, #tpu.memory_space<vmem>>, vector<32x324xf32>
    tpu.vector_store %arg13[%c128_54, %c0_55], %45 {strides = array<i32>} : memref<288x324xf32, #tpu.memory_space<vmem>>, vector<32x324xf32>,
    %c0_56 = arith.constant 0 : index
    %c129_57 = arith.constant 129 : index
    %47 = vector.load %arg12[%c0_56, %c129_57] : memref<32x512xf32, #tpu.memory_space<vmem>>, vector<32x324xf32>
    %c160 = arith.constant 160 : index
    %c0_58 = arith.constant 0 : index
    %48 = vector.load %arg13[%c160, %c0_58] : memref<288x324xf32, #tpu.memory_space<vmem>>, vector<32x324xf32>
    tpu.vector_store %arg13[%c160, %c0_58], %47 {strides = array<i32>} : memref<288x324xf32, #tpu.memory_space<vmem>>, vector<32x324xf32>,
    %c0_59 = arith.constant 0 : index
    %c145_60 = arith.constant 145 : index
    %49 = vector.load %arg12[%c0_59, %c145_60] : memref<32x512xf32, #tpu.memory_space<vmem>>, vector<32x324xf32>
    %c192 = arith.constant 192 : index
    %c0_61 = arith.constant 0 : index
    %50 = vector.load %arg13[%c192, %c0_61] : memref<288x324xf32, #tpu.memory_space<vmem>>, vector<32x324xf32>
    tpu.vector_store %arg13[%c192, %c0_61], %49 {strides = array<i32>} : memref<288x324xf32, #tpu.memory_space<vmem>>, vector<32x324xf32>,
    %c0_62 = arith.constant 0 : index
    %c146_63 = arith.constant 146 : index
    %51 = vector.load %arg12[%c0_62, %c146_63] : memref<32x512xf32, #tpu.memory_space<vmem>>, vector<32x324xf32>
    %c224 = arith.constant 224 : index
    %c0_64 = arith.constant 0 : index
    %52 = vector.load %arg13[%c224, %c0_64] : memref<288x324xf32, #tpu.memory_space<vmem>>, vector<32x324xf32>
    tpu.vector_store %arg13[%c224, %c0_64], %51 {strides = array<i32>} : memref<288x324xf32, #tpu.memory_space<vmem>>, vector<32x324xf32>,
    %c0_65 = arith.constant 0 : index
    %c147_66 = arith.constant 147 : index
    %53 = vector.load %arg12[%c0_65, %c147_66] : memref<32x512xf32, #tpu.memory_space<vmem>>, vector<32x324xf32>
    %c256 = arith.constant 256 : index
    %c0_67 = arith.constant 0 : index
    %54 = vector.load %arg13[%c256, %c0_67] : memref<288x324xf32, #tpu.memory_space<vmem>>, vector<32x324xf32>
    tpu.vector_store %arg13[%c256, %c0_67], %53 {strides = array<i32>} : memref<288x324xf32, #tpu.memory_space<vmem>>, vector<32x324xf32>,
    %c0_68 = arith.constant 0 : index
    %c0_69 = arith.constant 0 : index
    %55 = vector.load %arg5[%c0_68, %c0_69] : memref<32x288xf32, #tpu.memory_space<vmem>>, vector<32x288xf32>
    %c0_70 = arith.constant 0 : index
    %c0_71 = arith.constant 0 : index
    %56 = vector.load %arg13[%c0_70, %c0_71] : memref<288x324xf32, #tpu.memory_space<vmem>>, vector<288x324xf32>
    %cst_72 = arith.constant dense<0.000000e+00> : vector<32x324xf32>
    %57 = tpu.matmul %55, %56, %cst_72 {dimension_numbers = #tpu.dot_dimension_numbers<[1], [0], [0], [1], [0, 0, 1, 1], [], []>} : vector<32x288xf32>, vector<288x324xf32>, vector<32x324xf32> -> vector<32x324xf32>
    %c0_73 = arith.constant 0 : index
    %c0_74 = arith.constant 0 : index
    %58 = vector.load %arg6[%c0_73, %c0_74] : memref<32x1xf32, #tpu.memory_space<vmem>>, vector<32x1xf32>
    %59 = vector.broadcast %58 : vector<32x1xf32> to vector<32x324xf32>
    %60 = arith.addf %57, %59 : vector<32x324xf32>
    %cst_75 = arith.constant 0.000000e+00 : f32
    %61 = vector.broadcast %cst_75 : f32 to vector<32x324xf32>
    %62 = arith.maximumf %60, %61 : vector<32x324xf32>
    %63 = vector.broadcast %4 : vector<1x324xf32> to vector<32x324xf32>
    %64 = arith.mulf %62, %63 : vector<32x324xf32>
    %c0_76 = arith.constant 0 : index
    %c128_77 = arith.constant 128 : index
    %65 = vector.load %arg12[%c0_76, %c128_77] : memref<32x512xf32, #tpu.memory_space<vmem>>, vector<32x324xf32>
    tpu.vector_store %arg12[%c0_76, %c128_77], %64 {strides = array<i32>} : memref<32x512xf32, #tpu.memory_space<vmem>>, vector<32x324xf32>,
    %c0_78 = arith.constant 0 : index
    %c109_79 = arith.constant 109 : index
    %66 = vector.load %arg12[%c0_78, %c109_79] : memref<32x512xf32, #tpu.memory_space<vmem>>, vector<32x324xf32>
    %c0_80 = arith.constant 0 : index
    %c0_81 = arith.constant 0 : index
    %67 = vector.load %arg13[%c0_80, %c0_81] : memref<288x324xf32, #tpu.memory_space<vmem>>, vector<32x324xf32>
    tpu.vector_store %arg13[%c0_80, %c0_81], %66 {strides = array<i32>} : memref<288x324xf32, #tpu.memory_space<vmem>>, vector<32x324xf32>,
    %c0_82 = arith.constant 0 : index
    %c110_83 = arith.constant 110 : index
    %68 = vector.load %arg12[%c0_82, %c110_83] : memref<32x512xf32, #tpu.memory_space<vmem>>, vector<32x324xf32>
    %c32_84 = arith.constant 32 : index
    %c0_85 = arith.constant 0 : index
    %69 = vector.load %arg13[%c32_84, %c0_85] : memref<288x324xf32, #tpu.memory_space<vmem>>, vector<32x324xf32>
    tpu.vector_store %arg13[%c32_84, %c0_85], %68 {strides = array<i32>} : memref<288x324xf32, #tpu.memory_space<vmem>>, vector<32x324xf32>,
    %c0_86 = arith.constant 0 : index
    %c111_87 = arith.constant 111 : index
    %70 = vector.load %arg12[%c0_86, %c111_87] : memref<32x512xf32, #tpu.memory_space<vmem>>, vector<32x324xf32>
    %c64_88 = arith.constant 64 : index
    %c0_89 = arith.constant 0 : index
    %71 = vector.load %arg13[%c64_88, %c0_89] : memref<288x324xf32, #tpu.memory_space<vmem>>, vector<32x324xf32>
    tpu.vector_store %arg13[%c64_88, %c0_89], %70 {strides = array<i32>} : memref<288x324xf32, #tpu.memory_space<vmem>>, vector<32x324xf32>,
    %c0_90 = arith.constant 0 : index
    %c127_91 = arith.constant 127 : index
    %72 = vector.load %arg12[%c0_90, %c127_91] : memref<32x512xf32, #tpu.memory_space<vmem>>, vector<32x324xf32>
    %c96_92 = arith.constant 96 : index
    %c0_93 = arith.constant 0 : index
    %73 = vector.load %arg13[%c96_92, %c0_93] : memref<288x324xf32, #tpu.memory_space<vmem>>, vector<32x324xf32>
    tpu.vector_store %arg13[%c96_92, %c0_93], %72 {strides = array<i32>} : memref<288x324xf32, #tpu.memory_space<vmem>>, vector<32x324xf32>,
    %c0_94 = arith.constant 0 : index
    %c128_95 = arith.constant 128 : index
    %74 = vector.load %arg12[%c0_94, %c128_95] : memref<32x512xf32, #tpu.memory_space<vmem>>, vector<32x324xf32>
    %c128_96 = arith.constant 128 : index
    %c0_97 = arith.constant 0 : index
    %75 = vector.load %arg13[%c128_96, %c0_97] : memref<288x324xf32, #tpu.memory_space<vmem>>, vector<32x324xf32>
    tpu.vector_store %arg13[%c128_96, %c0_97], %74 {strides = array<i32>} : memref<288x324xf32, #tpu.memory_space<vmem>>, vector<32x324xf32>,
    %c0_98 = arith.constant 0 : index
    %c129_99 = arith.constant 129 : index
    %76 = vector.load %arg12[%c0_98, %c129_99] : memref<32x512xf32, #tpu.memory_space<vmem>>, vector<32x324xf32>
    %c160_100 = arith.constant 160 : index
    %c0_101 = arith.constant 0 : index
    %77 = vector.load %arg13[%c160_100, %c0_101] : memref<288x324xf32, #tpu.memory_space<vmem>>, vector<32x324xf32>
    tpu.vector_store %arg13[%c160_100, %c0_101], %76 {strides = array<i32>} : memref<288x324xf32, #tpu.memory_space<vmem>>, vector<32x324xf32>,
    %c0_102 = arith.constant 0 : index
    %c145_103 = arith.constant 145 : index
    %78 = vector.load %arg12[%c0_102, %c145_103] : memref<32x512xf32, #tpu.memory_space<vmem>>, vector<32x324xf32>
    %c192_104 = arith.constant 192 : index
    %c0_105 = arith.constant 0 : index
    %79 = vector.load %arg13[%c192_104, %c0_105] : memref<288x324xf32, #tpu.memory_space<vmem>>, vector<32x324xf32>
    tpu.vector_store %arg13[%c192_104, %c0_105], %78 {strides = array<i32>} : memref<288x324xf32, #tpu.memory_space<vmem>>, vector<32x324xf32>,
    %c0_106 = arith.constant 0 : index
    %c146_107 = arith.constant 146 : index
    %80 = vector.load %arg12[%c0_106, %c146_107] : memref<32x512xf32, #tpu.memory_space<vmem>>, vector<32x324xf32>
    %c224_108 = arith.constant 224 : index
    %c0_109 = arith.constant 0 : index
    %81 = vector.load %arg13[%c224_108, %c0_109] : memref<288x324xf32, #tpu.memory_space<vmem>>, vector<32x324xf32>
    tpu.vector_store %arg13[%c224_108, %c0_109], %80 {strides = array<i32>} : memref<288x324xf32, #tpu.memory_space<vmem>>, vector<32x324xf32>,
    %c0_110 = arith.constant 0 : index
    %c147_111 = arith.constant 147 : index
    %82 = vector.load %arg12[%c0_110, %c147_111] : memref<32x512xf32, #tpu.memory_space<vmem>>, vector<32x324xf32>
    %c256_112 = arith.constant 256 : index
    %c0_113 = arith.constant 0 : index
    %83 = vector.load %arg13[%c256_112, %c0_113] : memref<288x324xf32, #tpu.memory_space<vmem>>, vector<32x324xf32>
    tpu.vector_store %arg13[%c256_112, %c0_113], %82 {strides = array<i32>} : memref<288x324xf32, #tpu.memory_space<vmem>>, vector<32x324xf32>,
    %c0_114 = arith.constant 0 : index
    %c0_115 = arith.constant 0 : index
    %84 = vector.load %arg7[%c0_114, %c0_115] : memref<16x288xf32, #tpu.memory_space<vmem>>, vector<16x288xf32>
    %c0_116 = arith.constant 0 : index
    %c0_117 = arith.constant 0 : index
    %85 = vector.load %arg13[%c0_116, %c0_117] : memref<288x324xf32, #tpu.memory_space<vmem>>, vector<288x324xf32>
    %cst_118 = arith.constant dense<0.000000e+00> : vector<16x324xf32>
    %86 = tpu.matmul %84, %85, %cst_118 {dimension_numbers = #tpu.dot_dimension_numbers<[1], [0], [0], [1], [0, 0, 1, 1], [], []>} : vector<16x288xf32>, vector<288x324xf32>, vector<16x324xf32> -> vector<16x324xf32>
    %c0_119 = arith.constant 0 : index
    %c0_120 = arith.constant 0 : index
    %87 = vector.load %arg8[%c0_119, %c0_120] : memref<16x1xf32, #tpu.memory_space<vmem>>, vector<16x1xf32>
    %88 = vector.broadcast %87 : vector<16x1xf32> to vector<16x324xf32>
    %89 = arith.addf %86, %88 : vector<16x324xf32>
    %cst_121 = arith.constant 0.000000e+00 : f32
    %90 = vector.broadcast %cst_121 : f32 to vector<16x324xf32>
    %91 = arith.maximumf %89, %90 : vector<16x324xf32>
    %92 = vector.broadcast %4 : vector<1x324xf32> to vector<16x324xf32>
    %93 = arith.mulf %91, %92 : vector<16x324xf32>
    %c0_122 = arith.constant 0 : index
    %c128_123 = arith.constant 128 : index
    %94 = vector.load %arg12[%c0_122, %c128_123] : memref<32x512xf32, #tpu.memory_space<vmem>>, vector<16x324xf32>
    tpu.vector_store %arg12[%c0_122, %c128_123], %93 {strides = array<i32>} : memref<32x512xf32, #tpu.memory_space<vmem>>, vector<16x324xf32>,
    %c0_124 = arith.constant 0 : index
    %c109_125 = arith.constant 109 : index
    %95 = vector.load %arg12[%c0_124, %c109_125] : memref<32x512xf32, #tpu.memory_space<vmem>>, vector<16x324xf32>
    %c0_126 = arith.constant 0 : index
    %c0_127 = arith.constant 0 : index
    %96 = vector.load %arg13[%c0_126, %c0_127] : memref<288x324xf32, #tpu.memory_space<vmem>>, vector<16x324xf32>
    tpu.vector_store %arg13[%c0_126, %c0_127], %95 {strides = array<i32>} : memref<288x324xf32, #tpu.memory_space<vmem>>, vector<16x324xf32>,
    %c0_128 = arith.constant 0 : index
    %c110_129 = arith.constant 110 : index
    %97 = vector.load %arg12[%c0_128, %c110_129] : memref<32x512xf32, #tpu.memory_space<vmem>>, vector<16x324xf32>
    %c16 = arith.constant 16 : index
    %c0_130 = arith.constant 0 : index
    %98 = vector.load %arg13[%c16, %c0_130] : memref<288x324xf32, #tpu.memory_space<vmem>>, vector<16x324xf32>
    tpu.vector_store %arg13[%c16, %c0_130], %97 {strides = array<i32>} : memref<288x324xf32, #tpu.memory_space<vmem>>, vector<16x324xf32>,
    %c0_131 = arith.constant 0 : index
    %c111_132 = arith.constant 111 : index
    %99 = vector.load %arg12[%c0_131, %c111_132] : memref<32x512xf32, #tpu.memory_space<vmem>>, vector<16x324xf32>
    %c32_133 = arith.constant 32 : index
    %c0_134 = arith.constant 0 : index
    %100 = vector.load %arg13[%c32_133, %c0_134] : memref<288x324xf32, #tpu.memory_space<vmem>>, vector<16x324xf32>
    tpu.vector_store %arg13[%c32_133, %c0_134], %99 {strides = array<i32>} : memref<288x324xf32, #tpu.memory_space<vmem>>, vector<16x324xf32>,
    %c0_135 = arith.constant 0 : index
    %c127_136 = arith.constant 127 : index
    %101 = vector.load %arg12[%c0_135, %c127_136] : memref<32x512xf32, #tpu.memory_space<vmem>>, vector<16x324xf32>
    %c48 = arith.constant 48 : index
    %c0_137 = arith.constant 0 : index
    %102 = vector.load %arg13[%c48, %c0_137] : memref<288x324xf32, #tpu.memory_space<vmem>>, vector<16x324xf32>
    tpu.vector_store %arg13[%c48, %c0_137], %101 {strides = array<i32>} : memref<288x324xf32, #tpu.memory_space<vmem>>, vector<16x324xf32>,
    %c0_138 = arith.constant 0 : index
    %c128_139 = arith.constant 128 : index
    %103 = vector.load %arg12[%c0_138, %c128_139] : memref<32x512xf32, #tpu.memory_space<vmem>>, vector<16x324xf32>
    %c64_140 = arith.constant 64 : index
    %c0_141 = arith.constant 0 : index
    %104 = vector.load %arg13[%c64_140, %c0_141] : memref<288x324xf32, #tpu.memory_space<vmem>>, vector<16x324xf32>
    tpu.vector_store %arg13[%c64_140, %c0_141], %103 {strides = array<i32>} : memref<288x324xf32, #tpu.memory_space<vmem>>, vector<16x324xf32>,
    %c0_142 = arith.constant 0 : index
    %c129_143 = arith.constant 129 : index
    %105 = vector.load %arg12[%c0_142, %c129_143] : memref<32x512xf32, #tpu.memory_space<vmem>>, vector<16x324xf32>
    %c80 = arith.constant 80 : index
    %c0_144 = arith.constant 0 : index
    %106 = vector.load %arg13[%c80, %c0_144] : memref<288x324xf32, #tpu.memory_space<vmem>>, vector<16x324xf32>
    tpu.vector_store %arg13[%c80, %c0_144], %105 {strides = array<i32>} : memref<288x324xf32, #tpu.memory_space<vmem>>, vector<16x324xf32>,
    %c0_145 = arith.constant 0 : index
    %c145_146 = arith.constant 145 : index
    %107 = vector.load %arg12[%c0_145, %c145_146] : memref<32x512xf32, #tpu.memory_space<vmem>>, vector<16x324xf32>
    %c96_147 = arith.constant 96 : index
    %c0_148 = arith.constant 0 : index
    %108 = vector.load %arg13[%c96_147, %c0_148] : memref<288x324xf32, #tpu.memory_space<vmem>>, vector<16x324xf32>
    tpu.vector_store %arg13[%c96_147, %c0_148], %107 {strides = array<i32>} : memref<288x324xf32, #tpu.memory_space<vmem>>, vector<16x324xf32>,
    %c0_149 = arith.constant 0 : index
    %c146_150 = arith.constant 146 : index
    %109 = vector.load %arg12[%c0_149, %c146_150] : memref<32x512xf32, #tpu.memory_space<vmem>>, vector<16x324xf32>
    %c112 = arith.constant 112 : index
    %c0_151 = arith.constant 0 : index
    %110 = vector.load %arg13[%c112, %c0_151] : memref<288x324xf32, #tpu.memory_space<vmem>>, vector<16x324xf32>
    tpu.vector_store %arg13[%c112, %c0_151], %109 {strides = array<i32>} : memref<288x324xf32, #tpu.memory_space<vmem>>, vector<16x324xf32>,
    %c0_152 = arith.constant 0 : index
    %c147_153 = arith.constant 147 : index
    %111 = vector.load %arg12[%c0_152, %c147_153] : memref<32x512xf32, #tpu.memory_space<vmem>>, vector<16x324xf32>
    %c128_154 = arith.constant 128 : index
    %c0_155 = arith.constant 0 : index
    %112 = vector.load %arg13[%c128_154, %c0_155] : memref<288x324xf32, #tpu.memory_space<vmem>>, vector<16x324xf32>
    tpu.vector_store %arg13[%c128_154, %c0_155], %111 {strides = array<i32>} : memref<288x324xf32, #tpu.memory_space<vmem>>, vector<16x324xf32>,
    %c0_156 = arith.constant 0 : index
    %c0_157 = arith.constant 0 : index
    %113 = vector.load %arg9[%c0_156, %c0_157] : memref<3x144xf32, #tpu.memory_space<vmem>>, vector<3x144xf32>
    %c0_158 = arith.constant 0 : index
    %c0_159 = arith.constant 0 : index
    %114 = vector.load %arg13[%c0_158, %c0_159] : memref<288x324xf32, #tpu.memory_space<vmem>>, vector<144x324xf32>
    %cst_160 = arith.constant dense<0.000000e+00> : vector<3x324xf32>
    %115 = tpu.matmul %113, %114, %cst_160 {dimension_numbers = #tpu.dot_dimension_numbers<[1], [0], [0], [1], [0, 0, 1, 1], [], []>} : vector<3x144xf32>, vector<144x324xf32>, vector<3x324xf32> -> vector<3x324xf32>
    %c0_161 = arith.constant 0 : index
    %c0_162 = arith.constant 0 : index
    %116 = vector.load %arg10[%c0_161, %c0_162] : memref<3x1xf32, #tpu.memory_space<vmem>>, vector<3x1xf32>
    %117 = vector.broadcast %116 : vector<3x1xf32> to vector<3x324xf32>
    %118 = arith.addf %115, %117 : vector<3x324xf32>
    %cst_163 = arith.constant 0.000000e+00 : f32
    %119 = vector.broadcast %cst_163 : f32 to vector<3x324xf32>
    %120 = arith.subf %119, %118 : vector<3x324xf32>
    %121 = math.exp %120 : vector<3x324xf32>
    %cst_164 = arith.constant 1.000000e+00 : f32
    %122 = vector.broadcast %cst_164 : f32 to vector<3x324xf32>
    %123 = arith.addf %122, %121 : vector<3x324xf32>
    %cst_165 = arith.constant 1.000000e+00 : f32
    %124 = vector.broadcast %cst_165 : f32 to vector<3x324xf32>
    %125 = arith.divf %124, %123 : vector<3x324xf32>
    %c0_166 = arith.constant 0 : index
    %c0_167 = arith.constant 0 : index
    %c0_168 = arith.constant 0 : index
    %126 = vector.load %arg11[%c0_166, %c0_167, %c0_168] : memref<1x3x324xf32, #tpu.memory_space<vmem>>, vector<1x3x324xf32>
    %127 = vector.shape_cast %126 : vector<1x3x324xf32> to vector<3x324xf32>
    %128 = vector.shape_cast %125 : vector<3x324xf32> to vector<1x3x324xf32>
    tpu.vector_store %arg11[%c0_166, %c0_167, %c0_168], %128 {strides = array<i32>} : memref<1x3x324xf32, #tpu.memory_space<vmem>>, vector<1x3x324xf32>,
    return
  }
  func.func @transform_0(%arg0: i32) -> (i32, i32) {
    %c0_i32 = arith.constant 0 : i32
    %c0_i32_0 = arith.constant 0 : i32
    %c0_i32_1 = arith.constant 0 : i32
    return %c0_i32, %c0_i32_0 : i32, i32
  }
  func.func @transform_1(%arg0: i32) -> (i32, i32, i32) {
    %c0_i32 = arith.constant 0 : i32
    %c0_i32_0 = arith.constant 0 : i32
    %c0_i32_1 = arith.constant 0 : i32
    return %arg0, %c0_i32, %c0_i32_0 : i32, i32, i32
  }
  func.func @transform_2(%arg0: i32) -> (i32, i32) {
    %c0_i32 = arith.constant 0 : i32
    %c0_i32_0 = arith.constant 0 : i32
    %c0_i32_1 = arith.constant 0 : i32
    return %c0_i32, %c0_i32_0 : i32, i32
  }
  func.func @transform_3(%arg0: i32) -> (i32, i32) {
    %c0_i32 = arith.constant 0 : i32
    %c0_i32_0 = arith.constant 0 : i32
    %c0_i32_1 = arith.constant 0 : i32
    return %c0_i32, %c0_i32_0 : i32, i32
  }
  func.func @transform_4(%arg0: i32) -> (i32, i32) {
    %c0_i32 = arith.constant 0 : i32
    %c0_i32_0 = arith.constant 0 : i32
    %c0_i32_1 = arith.constant 0 : i32
    return %c0_i32, %c0_i32_0 : i32, i32
  }
  func.func @transform_5(%arg0: i32) -> (i32, i32) {
    %c0_i32 = arith.constant 0 : i32
    %c0_i32_0 = arith.constant 0 : i32
    %c0_i32_1 = arith.constant 0 : i32
    return %c0_i32, %c0_i32_0 : i32, i32
  }
  func.func @transform_6(%arg0: i32) -> (i32, i32) {
    %c0_i32 = arith.constant 0 : i32
    %c0_i32_0 = arith.constant 0 : i32
    %c0_i32_1 = arith.constant 0 : i32
    return %c0_i32, %c0_i32_0 : i32, i32
  }
  func.func @transform_7(%arg0: i32) -> (i32, i32) {
    %c0_i32 = arith.constant 0 : i32
    %c0_i32_0 = arith.constant 0 : i32
    %c0_i32_1 = arith.constant 0 : i32
    return %c0_i32, %c0_i32_0 : i32, i32
  }
  func.func @transform_8(%arg0: i32) -> (i32, i32) {
    %c0_i32 = arith.constant 0 : i32
    %c0_i32_0 = arith.constant 0 : i32
    %c0_i32_1 = arith.constant 0 : i32
    return %c0_i32, %c0_i32_0 : i32, i32
  }
  func.func @transform_9(%arg0: i32) -> (i32, i32) {
    %c0_i32 = arith.constant 0 : i32
    %c0_i32_0 = arith.constant 0 : i32
    %c0_i32_1 = arith.constant 0 : i32
    return %c0_i32, %c0_i32_0 : i32, i32
  }
  func.func @transform_10(%arg0: i32) -> (i32, i32, i32) {
    %c0_i32 = arith.constant 0 : i32
    %c0_i32_0 = arith.constant 0 : i32
    %c0_i32_1 = arith.constant 0 : i32
    return %arg0, %c0_i32, %c0_i32_0 : i32, i32, i32
  }
}

</mosaic_0001>

<llo_original>
// kernel: image_enhancement_nn.1
$region0: #{image_enhancement_nn.1}
  #allocation0 [shape = 'u32[]', space=smem, size = 0x4, offset = 0x4, fixed_abs, tag = 'smem constant byte address 0x4 - core index']
  #allocation1 [shape = 'u32[144,128]{1,0:T(1,128)}', space=vmem, size = 0x12000, scoped, tag = 'internal scratch']
  #allocation2 [shape = 'f32[32,512]{1,0:T(8,128)}', space=vmem, size = 0x10000, scoped, tag = 'scratch operand']
  #allocation3 [shape = 'f32[288,324]{1,0:T(8,128)}', space=vmem, size = 0x6c000, scoped, tag = 'scratch operand']
  %s0 = inlined_call_operand.vmem [shape: f32[1,324], index: 0, kind: input, shape index: {}]
  %s1 = inlined_call_operand.vmem [shape: f32[2,3,324], index: 1, kind: input, shape index: {}]
  %s2 = inlined_call_operand.vmem [shape: f32[32,27], index: 2, kind: input, shape index: {}]
  %s3 = inlined_call_operand.vmem [shape: f32[32,1], index: 3, kind: input, shape index: {}]
  %s4 = inlined_call_operand.vmem [shape: f32[32,288], index: 4, kind: input, shape index: {}]
  %s5 = inlined_call_operand.vmem [shape: f32[32,1], index: 5, kind: input, shape index: {}]
  %s6 = inlined_call_operand.vmem [shape: f32[16,288], index: 6, kind: input, shape index: {}]
  %s7 = inlined_call_operand.vmem [shape: f32[16,1], index: 7, kind: input, shape index: {}]
  %s8 = inlined_call_operand.vmem [shape: f32[3,144], index: 8, kind: input, shape index: {}]
  %s9 = inlined_call_operand.vmem [shape: f32[3,1], index: 9, kind: input, shape index: {}]
  %s10 = inlined_call_operand.vmem [shape: f32[2,3,324], index: 10, kind: output, shape index: {}]
  %s11 = sld [smem:[#allocation0]]
  $region73: #{image_enhancement_nn.1} parent=0
    _
  %s13 = ssub.s32 1, %s11
  %s14 = scalar_select 0, %s13, %s11
  loop: start=0, step=1, limit=4
  $region2: #{image_enhancement_nn.1} parent=0 // loop_pre_header
    _
  $region3: #{image_enhancement_nn.1} parent=0 // loop_header
    %s16 = sphi 0, %s20
    %p17 = scmp.ge.s32.totalorder %s16, 4
    %s24 = sphi 0, %s24
    %s26 = sphi 0, %s24
    %s27 = sphi 0, %s26
    %s41 = sphi 0, %s27
    %s47 = sphi 0, %s49
    %s50 = sphi 0, %s47
    %s51 = sphi 0, %s50
    %s67 = sphi 0, %s51
    %s71 = sphi 0, %s71
    %s73 = sphi 0, %s71
    %s74 = sphi 0, %s73
    %s88 = sphi 0, %s74
    %s92 = sphi 0, %s92
    %s94 = sphi 0, %s92
    %s95 = sphi 0, %s94
    %s109 = sphi 0, %s95
    %s113 = sphi 0, %s113
    %s115 = sphi 0, %s113
    %s116 = sphi 0, %s115
    %s130 = sphi 0, %s116
    %s134 = sphi 0, %s134
    %s136 = sphi 0, %s134
    %s137 = sphi 0, %s136
    %s151 = sphi 0, %s137
    %s155 = sphi 0, %s155
    %s157 = sphi 0, %s155
    %s158 = sphi 0, %s157
    %s172 = sphi 0, %s158
    %s176 = sphi 0, %s176
    %s178 = sphi 0, %s176
    %s179 = sphi 0, %s178
    %s193 = sphi 0, %s179
    %s197 = sphi 0, %s197
    %s199 = sphi 0, %s197
    %s200 = sphi 0, %s199
    %s214 = sphi 0, %s200
    %s218 = sphi 0, %s218
    %s220 = sphi 0, %s218
    %s221 = sphi 0, %s220
    %s235 = sphi 0, %s221
    %s241 = sphi 0, %s243
    %s244 = sphi 0, %s241
    %s245 = sphi 0, %s244
    %s261 = sphi 0, %s245
  $region4: #{image_enhancement_nn.1} parent=0 // loop_header_branch
    %19 = sbr.rel (%p17) target = $region8
  $region5: #{image_enhancement_nn.1} parent=0 // loop_body
    %s21 = ssub.s32 %s16, 1
    %s22 = ssub.s32 %s16, 2
    %s23 = sadd.s32 %s16, 1
    %s25 = sadd.s32 %s24, 1
    %p28 = scmp.eq.s32.totalorder %s16, 1
    %p29 = scmp.ne.s32.totalorder %s24, %s26
    %p30 = scmp.eq.s32.totalorder %s16, 0
    %p31 = por %p29, %p30
    %p32 = scmp.ne.s32.totalorder %s24, %s26
    %p33 = scmp.eq.s32.totalorder %s21, 1
    %p34 = por %p32, %p33
    %p35 = scmp.ne.s32.totalorder %s26, %s27
    %p36 = scmp.eq.s32.totalorder %s21, 0
    %p37 = por %p35, %p36
    %p38 = scmp.ne.s32.totalorder %s26, %s27
    %p39 = scmp.eq.s32.totalorder %s22, 1
    %p40 = por %p38, %p39
    %p42 = scmp.ne.s32.totalorder %s27, %s41
    %p43 = scmp.eq.s32.totalorder %s22, 0
    %p44 = por %p42, %p43
    %s45 = ssub.s32 %s16, %s23
    %p46 = scmp.eq.s32.totalorder %s45, 0
    %s48 = sadd.s32 %s47, 1
    %s49 = scalar_select %p46, %s47, %s48
    %p52 = pneg %p46
    %p53 = scmp.eq.s32.totalorder %s16, 1
    %p54 = por %p52, %p53
    %p55 = scmp.ne.s32.totalorder %s47, %s50
    %p56 = scmp.eq.s32.totalorder %s16, 0
    %p57 = por %p55, %p56
    %p58 = scmp.ne.s32.totalorder %s47, %s50
    %p59 = scmp.eq.s32.totalorder %s21, 1
    %p60 = por %p58, %p59
    %p61 = scmp.ne.s32.totalorder %s50, %s51
    %p62 = scmp.eq.s32.totalorder %s21, 0
    %p63 = por %p61, %p62
    %p64 = scmp.ne.s32.totalorder %s50, %s51
    %p65 = scmp.eq.s32.totalorder %s22, 1
    %p66 = por %p64, %p65
    %p68 = scmp.ne.s32.totalorder %s51, %s67
    %p69 = scmp.eq.s32.totalorder %s22, 0
    %p70 = por %p68, %p69
    %s72 = sadd.s32 %s71, 1
    %p75 = scmp.eq.s32.totalorder %s16, 1
    %p76 = scmp.ne.s32.totalorder %s71, %s73
    %p77 = scmp.eq.s32.totalorder %s16, 0
    %p78 = por %p76, %p77
    %p79 = scmp.ne.s32.totalorder %s71, %s73
    %p80 = scmp.eq.s32.totalorder %s21, 1
    %p81 = por %p79, %p80
    %p82 = scmp.ne.s32.totalorder %s73, %s74
    %p83 = scmp.eq.s32.totalorder %s21, 0
    %p84 = por %p82, %p83
    %p85 = scmp.ne.s32.totalorder %s73, %s74
    %p86 = scmp.eq.s32.totalorder %s22, 1
    %p87 = por %p85, %p86
    %p89 = scmp.ne.s32.totalorder %s74, %s88
    %p90 = scmp.eq.s32.totalorder %s22, 0
    %p91 = por %p89, %p90
    %s93 = sadd.s32 %s92, 1
    %p96 = scmp.eq.s32.totalorder %s16, 1
    %p97 = scmp.ne.s32.totalorder %s92, %s94
    %p98 = scmp.eq.s32.totalorder %s16, 0
    %p99 = por %p97, %p98
    %p100 = scmp.ne.s32.totalorder %s92, %s94
    %p101 = scmp.eq.s32.totalorder %s21, 1
    %p102 = por %p100, %p101
    %p103 = scmp.ne.s32.totalorder %s94, %s95
    %p104 = scmp.eq.s32.totalorder %s21, 0
    %p105 = por %p103, %p104
    %p106 = scmp.ne.s32.totalorder %s94, %s95
    %p107 = scmp.eq.s32.totalorder %s22, 1
    %p108 = por %p106, %p107
    %p110 = scmp.ne.s32.totalorder %s95, %s109
    %p111 = scmp.eq.s32.totalorder %s22, 0
    %p112 = por %p110, %p111
    %s114 = sadd.s32 %s113, 1
    %p117 = scmp.eq.s32.totalorder %s16, 1
    %p118 = scmp.ne.s32.totalorder %s113, %s115
    %p119 = scmp.eq.s32.totalorder %s16, 0
    %p120 = por %p118, %p119
    %p121 = scmp.ne.s32.totalorder %s113, %s115
    %p122 = scmp.eq.s32.totalorder %s21, 1
    %p123 = por %p121, %p122
    %p124 = scmp.ne.s32.totalorder %s115, %s116
    %p125 = scmp.eq.s32.totalorder %s21, 0
    %p126 = por %p124, %p125
    %p127 = scmp.ne.s32.totalorder %s115, %s116
    %p128 = scmp.eq.s32.totalorder %s22, 1
    %p129 = por %p127, %p128
    %p131 = scmp.ne.s32.totalorder %s116, %s130
    %p132 = scmp.eq.s32.totalorder %s22, 0
    %p133 = por %p131, %p132
    %s135 = sadd.s32 %s134, 1
    %p138 = scmp.eq.s32.totalorder %s16, 1
    %p139 = scmp.ne.s32.totalorder %s134, %s136
    %p140 = scmp.eq.s32.totalorder %s16, 0
    %p141 = por %p139, %p140
    %p142 = scmp.ne.s32.totalorder %s134, %s136
    %p143 = scmp.eq.s32.totalorder %s21, 1
    %p144 = por %p142, %p143
    %p145 = scmp.ne.s32.totalorder %s136, %s137
    %p146 = scmp.eq.s32.totalorder %s21, 0
    %p147 = por %p145, %p146
    %p148 = scmp.ne.s32.totalorder %s136, %s137
    %p149 = scmp.eq.s32.totalorder %s22, 1
    %p150 = por %p148, %p149
    %p152 = scmp.ne.s32.totalorder %s137, %s151
    %p153 = scmp.eq.s32.totalorder %s22, 0
    %p154 = por %p152, %p153
    %s156 = sadd.s32 %s155, 1
    %p159 = scmp.eq.s32.totalorder %s16, 1
    %p160 = scmp.ne.s32.totalorder %s155, %s157
    %p161 = scmp.eq.s32.totalorder %s16, 0
    %p162 = por %p160, %p161
    %p163 = scmp.ne.s32.totalorder %s155, %s157
    %p164 = scmp.eq.s32.totalorder %s21, 1
    %p165 = por %p163, %p164
    %p166 = scmp.ne.s32.totalorder %s157, %s158
    %p167 = scmp.eq.s32.totalorder %s21, 0
    %p168 = por %p166, %p167
    %p169 = scmp.ne.s32.totalorder %s157, %s158
    %p170 = scmp.eq.s32.totalorder %s22, 1
    %p171 = por %p169, %p170
    %p173 = scmp.ne.s32.totalorder %s158, %s172
    %p174 = scmp.eq.s32.totalorder %s22, 0
    %p175 = por %p173, %p174
    %s177 = sadd.s32 %s176, 1
    %p180 = scmp.eq.s32.totalorder %s16, 1
    %p181 = scmp.ne.s32.totalorder %s176, %s178
    %p182 = scmp.eq.s32.totalorder %s16, 0
    %p183 = por %p181, %p182
    %p184 = scmp.ne.s32.totalorder %s176, %s178
    %p185 = scmp.eq.s32.totalorder %s21, 1
    %p186 = por %p184, %p185
    %p187 = scmp.ne.s32.totalorder %s178, %s179
    %p188 = scmp.eq.s32.totalorder %s21, 0
    %p189 = por %p187, %p188
    %p190 = scmp.ne.s32.totalorder %s178, %s179
    %p191 = scmp.eq.s32.totalorder %s22, 1
    %p192 = por %p190, %p191
    %p194 = scmp.ne.s32.totalorder %s179, %s193
    %p195 = scmp.eq.s32.totalorder %s22, 0
    %p196 = por %p194, %p195
    %s198 = sadd.s32 %s197, 1
    %p201 = scmp.eq.s32.totalorder %s16, 1
    %p202 = scmp.ne.s32.totalorder %s197, %s199
    %p203 = scmp.eq.s32.totalorder %s16, 0
    %p204 = por %p202, %p203
    %p205 = scmp.ne.s32.totalorder %s197, %s199
    %p206 = scmp.eq.s32.totalorder %s21, 1
    %p207 = por %p205, %p206
    %p208 = scmp.ne.s32.totalorder %s199, %s200
    %p209 = scmp.eq.s32.totalorder %s21, 0
    %p210 = por %p208, %p209
    %p211 = scmp.ne.s32.totalorder %s199, %s200
    %p212 = scmp.eq.s32.totalorder %s22, 1
    %p213 = por %p211, %p212
    %p215 = scmp.ne.s32.totalorder %s200, %s214
    %p216 = scmp.eq.s32.totalorder %s22, 0
    %p217 = por %p215, %p216
    %s219 = sadd.s32 %s218, 1
    %p222 = scmp.eq.s32.totalorder %s16, 1
    %p223 = scmp.ne.s32.totalorder %s218, %s220
    %p224 = scmp.eq.s32.totalorder %s16, 0
    %p225 = por %p223, %p224
    %p226 = scmp.ne.s32.totalorder %s218, %s220
    %p227 = scmp.eq.s32.totalorder %s21, 1
    %p228 = por %p226, %p227
    %p229 = scmp.ne.s32.totalorder %s220, %s221
    %p230 = scmp.eq.s32.totalorder %s21, 0
    %p231 = por %p229, %p230
    %p232 = scmp.ne.s32.totalorder %s220, %s221
    %p233 = scmp.eq.s32.totalorder %s22, 1
    %p234 = por %p232, %p233
    %p236 = scmp.ne.s32.totalorder %s221, %s235
    %p237 = scmp.eq.s32.totalorder %s22, 0
    %p238 = por %p236, %p237
    %s239 = ssub.s32 %s16, %s23
    %p240 = scmp.eq.s32.totalorder %s239, 0
    %s242 = sadd.s32 %s241, 1
    %s243 = scalar_select %p240, %s241, %s242
    %p246 = pneg %p240
    %p247 = scmp.eq.s32.totalorder %s16, 1
    %p248 = por %p246, %p247
    %p249 = scmp.ne.s32.totalorder %s241, %s244
    %p250 = scmp.eq.s32.totalorder %s16, 0
    %p251 = por %p249, %p250
    %p252 = scmp.ne.s32.totalorder %s241, %s244
    %p253 = scmp.eq.s32.totalorder %s21, 1
    %p254 = por %p252, %p253
    %p255 = scmp.ne.s32.totalorder %s244, %s245
    %p256 = scmp.eq.s32.totalorder %s21, 0
    %p257 = por %p255, %p256
    %p258 = scmp.ne.s32.totalorder %s244, %s245
    %p259 = scmp.eq.s32.totalorder %s22, 1
    %p260 = por %p258, %p259
    %p262 = scmp.ne.s32.totalorder %s245, %s261
    %p263 = scmp.eq.s32.totalorder %s22, 0
    %p264 = por %p262, %p263
    %p265 = scmp.le.s32.totalorder 1, %s16
    %p266 = scmp.lt.s32.totalorder %s16, 3
    %p267 = pnand %p265, %p266
    %p268 = pneg %p267
    // Predicated region
    $region9: #{image_enhancement_nn.1} parent=5 // pred_check
      _
    $region10: #{image_enhancement_nn.1} parent=5 // pred_check_branch
      %270 = sbr.rel (%p267) target = $region12
    $region11: #{image_enhancement_nn.1} parent=5 // pred_region
      %s271 = ssub.s32 %s16, 1
      // Predicated region
      $region13: #{image_enhancement_nn.1} parent=11 // pred_check
        %p272 = pneg %p37
      $region14: #{image_enhancement_nn.1} parent=11 // pred_check_branch
        %274 = sbr.rel (%p272) target = $region16
      $region15: #{image_enhancement_nn.1} parent=11 // pred_region
        _
      $region16: #{image_enhancement_nn.1} parent=11 // pred_fallthru
        _
      // Predicated region
      $region17: #{image_enhancement_nn.1} parent=11 // pred_check
        %p275 = pneg %p84
      $region18: #{image_enhancement_nn.1} parent=11 // pred_check_branch
        %277 = sbr.rel (%p275) target = $region20
      $region19: #{image_enhancement_nn.1} parent=11 // pred_region
        _
      $region20: #{image_enhancement_nn.1} parent=11 // pred_fallthru
        _
      // Predicated region
      $region21: #{image_enhancement_nn.1} parent=11 // pred_check
        %p278 = pneg %p105
      $region22: #{image_enhancement_nn.1} parent=11 // pred_check_branch
        %280 = sbr.rel (%p278) target = $region24
      $region23: #{image_enhancement_nn.1} parent=11 // pred_region
        _
      $region24: #{image_enhancement_nn.1} parent=11 // pred_fallthru
        _
      // Predicated region
      $region25: #{image_enhancement_nn.1} parent=11 // pred_check
        %p281 = pneg %p126
      $region26: #{image_enhancement_nn.1} parent=11 // pred_check_branch
        %283 = sbr.rel (%p281) target = $region28
      $region27: #{image_enhancement_nn.1} parent=11 // pred_region
        _
      $region28: #{image_enhancement_nn.1} parent=11 // pred_fallthru
        _
      // Predicated region
      $region29: #{image_enhancement_nn.1} parent=11 // pred_check
        %p284 = pneg %p147
      $region30: #{image_enhancement_nn.1} parent=11 // pred_check_branch
        %286 = sbr.rel (%p284) target = $region32
      $region31: #{image_enhancement_nn.1} parent=11 // pred_region
        _
      $region32: #{image_enhancement_nn.1} parent=11 // pred_fallthru
        _
      // Predicated region
      $region33: #{image_enhancement_nn.1} parent=11 // pred_check
        %p287 = pneg %p168
      $region34: #{image_enhancement_nn.1} parent=11 // pred_check_branch
        %289 = sbr.rel (%p287) target = $region36
      $region35: #{image_enhancement_nn.1} parent=11 // pred_region
        _
      $region36: #{image_enhancement_nn.1} parent=11 // pred_fallthru
        _
      // Predicated region
      $region37: #{image_enhancement_nn.1} parent=11 // pred_check
        %p290 = pneg %p189
      $region38: #{image_enhancement_nn.1} parent=11 // pred_check_branch
        %292 = sbr.rel (%p290) target = $region40
      $region39: #{image_enhancement_nn.1} parent=11 // pred_region
        _
      $region40: #{image_enhancement_nn.1} parent=11 // pred_fallthru
        _
      // Predicated region
      $region41: #{image_enhancement_nn.1} parent=11 // pred_check
        %p293 = pneg %p210
      $region42: #{image_enhancement_nn.1} parent=11 // pred_check_branch
        %295 = sbr.rel (%p293) target = $region44
      $region43: #{image_enhancement_nn.1} parent=11 // pred_region
        _
      $region44: #{image_enhancement_nn.1} parent=11 // pred_fallthru
        _
      // Predicated region
      $region45: #{image_enhancement_nn.1} parent=11 // pred_check
        %p296 = pneg %p231
      $region46: #{image_enhancement_nn.1} parent=11 // pred_check_branch
        %298 = sbr.rel (%p296) target = $region48
      $region47: #{image_enhancement_nn.1} parent=11 // pred_region
        _
      $region48: #{image_enhancement_nn.1} parent=11 // pred_fallthru
        _
    $region12: #{image_enhancement_nn.1} parent=5 // pred_fallthru
      _
    %p299 = scmp.lt.s32.totalorder %s16, 2
    // Predicated region
    $region49: #{image_enhancement_nn.1} parent=5 // pred_check
      %p300 = pneg %p299
    $region50: #{image_enhancement_nn.1} parent=5 // pred_check_branch
      %302 = sbr.rel (%p300) target = $region52
    $region51: #{image_enhancement_nn.1} parent=5 // pred_region
      // Predicated region
      $region53: #{image_enhancement_nn.1} parent=51 // pred_check
        %p303 = pneg %p57
      $region54: #{image_enhancement_nn.1} parent=51 // pred_check_branch
        %305 = sbr.rel (%p303) target = $region56
      $region55: #{image_enhancement_nn.1} parent=51 // pred_region
        %p306 = scmp.lt.s32.totalorder %s16, 1
        %s307 = scalar_select %p306, %s16, 1
        %s308 = smul.addr %s307, 3
        %s309 = smul.addr %s308, 4
        %s310 = scalar_lea.vmem %s1, %s309
      $region56: #{image_enhancement_nn.1} parent=51 // pred_fallthru
        _
    $region52: #{image_enhancement_nn.1} parent=5 // pred_fallthru
      _
    %p311 = scmp.le.s32.totalorder 1, %s16
    %p312 = scmp.lt.s32.totalorder %s16, 3
    %p313 = pnand %p311, %p312
    %p314 = pneg %p313
    // Predicated region
    $region57: #{image_enhancement_nn.1} parent=5 // pred_check
      _
    $region58: #{image_enhancement_nn.1} parent=5 // pred_check_branch
      %316 = sbr.rel (%p313) target = $region60
    $region59: #{image_enhancement_nn.1} parent=5 // pred_region
      %s317 = ssub.s32 %s16, 1
      %p318 = pneg %p37
      %p319 = pneg %p34
      %p320 = scmp.lt.s32.totalorder %s21, 1
      %s321 = scalar_select %p320, %s21, 1
      %s322 = smul.addr %s321, 3
      %s323 = smul.addr %s322, 4
      %s324 = scalar_lea.vmem %s1, %s323
      %p325 = pneg %p63
      %p326 = pneg %p60
      %p327 = pneg %p84
      %p328 = pneg %p81
      %p329 = pneg %p105
      %p330 = pneg %p102
      %p331 = pneg %p126
      %p332 = pneg %p123
      %p333 = pneg %p147
      %p334 = pneg %p144
      %p335 = pneg %p168
      %p336 = pneg %p165
      %p337 = pneg %p189
      %p338 = pneg %p186
      %p339 = pneg %p210
      %p340 = pneg %p207
      %p341 = pneg %p231
      %p342 = pneg %p228
      %p343 = pneg %p257
      %p344 = pneg %p254
      %p345 = scmp.lt.s32.totalorder %s21, 1
      %s346 = scalar_select %p345, %s21, 1
      %s347 = smul.addr %s346, 3
      %s348 = smul.addr %s347, 4
      %s349 = scalar_lea.vmem %s10, %s348
      %p350 = scmp.lt.s32.totalorder %s21, 1
      %s351 = scalar_select %p350, %s21, 1
      %s352 = smul.addr %s351, 3
      %s353 = smul.addr %s352, 4
      %s354 = scalar_lea.vmem %s1, %s353
      %p355 = scmp.lt.s32.totalorder %s21, 1
      %s356 = scalar_select %p355, %s21, 1
      %s357 = smul.addr %s356, 3
      %s358 = smul.addr %s357, 4
      %s359 = scalar_lea.vmem %s10, %s358
      %360 = vst [vmem:[#allocation2] sm:$0xff] 0.0
      %361 = vst [vmem:[#allocation2 + $0x20] sm:$0xff] 0.0
      %362 = vst [vmem:[#allocation2 + $0x40] sm:$0xff] 0.0
      %363 = vst [vmem:[#allocation2 + $0x60] sm:$0xff] 0.0
      %vm364 = vcmask 1048096
      %365 = vst.msk [vmem:[#allocation2 + $0x18] sm:$0xff] %vm364, 0.0
      %366 = vst.msk [vmem:[#allocation2 + $0x38] sm:$0xff] %vm364, 0.0
      %367 = vst.msk [vmem:[#allocation2 + $0x58] sm:$0xff] %vm364, 0.0
      %368 = vst.msk [vmem:[#allocation2 + $0x78] sm:$0xff] %vm364, 0.0
      %v369 = vld [vmem:[%s0] sm:$0x7]
      %v370 = vld [vmem:[%s354] sm:$0x77]
      %v371 = vld [vmem:[%s354 + $0x8] sm:$0x7]
      %v373 = vcombine.high %v370, %v370
      %375 = vst [vmem:[#allocation2 + $0x8] sm:$0x7] %v370
      %376 = vst [vmem:[#allocation2 + $0x10] sm:$0x7] %v373
      %vm377 = vcmask 550912
      %378 = vst.msk [vmem:[#allocation2 + $0x18] sm:$0x7] %vm377, %v371
      %v379 = vld [vmem:[#allocation2] sm:$0x7]
      %v380 = vld [vmem:[#allocation2 + $0x8] sm:$0x7]
      %v381 = vld [vmem:[#allocation2 + $0x10] sm:$0x7]
      %v382 = vld [vmem:[#allocation2 + $0x18] sm:$0x7]
      %387 = vrot.lane.b32.xlu0 %v379, 19
      %v388 = vpop.permute.xlu0 %387
      %389 = vrot.lane.b32.xlu0 %v380, 19
      %v390 = vpop.permute.xlu0 %389
      %391 = vrot.lane.b32.xlu0 %v381, 19
      %v392 = vpop.permute.xlu0 %391
      %393 = vrot.lane.b32.xlu0 %v382, 19
      %v394 = vpop.permute.xlu0 %393
      %vm395 = vcmask 154624
      %v396 = vsel %vm395, %v388, %v390
      %v397 = vsel %vm395, %v390, %v392
      %v398 = vsel %vm395, %v392, %v394
      %402 = vst [vmem:[#allocation3] sm:$0x7] %v396
      %403 = vst [vmem:[#allocation3 + $0x8] sm:$0x7] %v397
      %404 = vst.msk [vmem:[#allocation3 + $0x10] sm:$0x7] %vm377, %v398
      %v405 = vld [vmem:[#allocation2] sm:$0x7]
      %v406 = vld [vmem:[#allocation2 + $0x8] sm:$0x7]
      %v407 = vld [vmem:[#allocation2 + $0x10] sm:$0x7]
      %v408 = vld [vmem:[#allocation2 + $0x18] sm:$0x7]
      %v413 = vrot.slane %v405, 5
      %v414 = vrot.slane %v406, 5
      %v415 = vrot.slane %v407, 5
      %v416 = vrot.slane %v408, 5
      %417 = vrot.lane.b32.xlu0 %v413, 18
      %v418 = vpop.permute.xlu0 %417
      %419 = vrot.lane.b32.xlu0 %v414, 18
      %v420 = vpop.permute.xlu0 %419
      %421 = vrot.lane.b32.xlu0 %v415, 18
      %v422 = vpop.permute.xlu0 %421
      %423 = vrot.lane.b32.xlu0 %v416, 18
      %v424 = vpop.permute.xlu0 %423
      %vm425 = vcmask 146432
      %v426 = vsel %vm425, %v418, %v420
      %v427 = vsel %vm425, %v420, %v422
      %v428 = vsel %vm425, %v422, %v424
      %432 = vst [vmem:[#allocation3] sm:$0x38] %v426
      %433 = vst [vmem:[#allocation3 + $0x8] sm:$0x38] %v427
      %vm434 = vcmask 553987
      %435 = vst.msk [vmem:[#allocation3 + $0x10] sm:$0x38] %vm434, %v428
      %v436 = vld [vmem:[#allocation2] sm:$0x7]
      %v437 = vld [vmem:[#allocation2 + $0x8] sm:$0x7]
      %v438 = vld [vmem:[#allocation2 + $0x10] sm:$0x7]
      %v439 = vld [vmem:[#allocation2 + $0x18] sm:$0x7]
      %v444 = vrot.slane %v436, 2
      %v445 = vrot.slane %v437, 2
      %v446 = vrot.slane %v438, 2
      %v447 = vrot.slane %v439, 2
      %448 = vrot.lane.b32.xlu0 %v444, 17
      %v449 = vpop.permute.xlu0 %448
      %450 = vrot.lane.b32.xlu0 %v445, 17
      %v451 = vpop.permute.xlu0 %450
      %452 = vrot.lane.b32.xlu0 %v446, 17
      %v453 = vpop.permute.xlu0 %452
      %454 = vrot.lane.b32.xlu0 %v447, 17
      %v455 = vpop.permute.xlu0 %454
      %vm456 = vcmask 138240
      %v457 = vsel %vm456, %v449, %v451
      %v458 = vsel %vm456, %v451, %v453
      %v459 = vsel %vm456, %v453, %v455
      %463 = vst [vmem:[#allocation3] sm:$0xc0] %v457
      %464 = vst [vmem:[#allocation3 + $0x8] sm:$0xc0] %v458
      %vm465 = vcmask 556038
      %466 = vst.msk [vmem:[#allocation3 + $0x10] sm:$0xc0] %vm465, %v459
      %467 = vst [vmem:[#allocation3 + $0x18] sm:$0x1] %v457
      %468 = vst [vmem:[#allocation3 + $0x20] sm:$0x1] %v458
      %vm469 = vcmask 548864
      %470 = vst.msk [vmem:[#allocation3 + $0x28] sm:$0x1] %vm469, %v459
      %v471 = vld [vmem:[#allocation2] sm:$0x7]
      %v472 = vld [vmem:[#allocation2 + $0x8] sm:$0x7]
      %v473 = vld [vmem:[#allocation2 + $0x10] sm:$0x7]
      %v474 = vld [vmem:[#allocation2 + $0x18] sm:$0x7]
      %v479 = vrot.slane %v471, 7
      %v480 = vrot.slane %v472, 7
      %v481 = vrot.slane %v473, 7
      %v482 = vrot.slane %v474, 7
      %483 = vrot.lane.b32.xlu0 %v479, 1
      %v484 = vpop.permute.xlu0 %483
      %485 = vrot.lane.b32.xlu0 %v480, 1
      %v486 = vpop.permute.xlu0 %485
      %487 = vrot.lane.b32.xlu0 %v481, 1
      %v488 = vpop.permute.xlu0 %487
      %489 = vrot.lane.b32.xlu0 %v482, 1
      %v490 = vpop.permute.xlu0 %489
      %vm491 = vcmask 7168
      %v492 = vsel %vm491, %v484, %v486
      %v493 = vsel %vm491, %v486, %v488
      %v494 = vsel %vm491, %v488, %v490
      %498 = vst [vmem:[#allocation3 + $0x18] sm:$0xe] %v492
      %499 = vst [vmem:[#allocation3 + $0x20] sm:$0xe] %v493
      %vm500 = vcmask 551937
      %501 = vst.msk [vmem:[#allocation3 + $0x28] sm:$0xe] %vm500, %v494
      %v502 = vld [vmem:[#allocation2 + $0x8] sm:$0x7]
      %v503 = vld [vmem:[#allocation2 + $0x10] sm:$0x7]
      %v504 = vld [vmem:[#allocation2 + $0x18] sm:$0x7]
      %v508 = vrot.slane %v502, 4
      %v509 = vrot.slane %v503, 4
      %v510 = vrot.slane %v504, 4
      %514 = vst [vmem:[#allocation3 + $0x18] sm:$0x70] %v508
      %515 = vst [vmem:[#allocation3 + $0x20] sm:$0x70] %v509
      %vm516 = vcmask 555012
      %517 = vst.msk [vmem:[#allocation3 + $0x28] sm:$0x70] %vm516, %v510
      %v518 = vld [vmem:[#allocation2 + $0x8] sm:$0x7]
      %v519 = vld [vmem:[#allocation2 + $0x10] sm:$0x7]
      %v520 = vld [vmem:[#allocation2 + $0x18] sm:$0x7]
      %v524 = vrot.slane %v518, 1
      %v525 = vrot.slane %v519, 1
      %v526 = vrot.slane %v520, 1
      %527 = vrot.lane.b32.xlu0 %v524, 127
      %v528 = vpop.permute.xlu0 %527
      %529 = vrot.lane.b32.xlu0 %v525, 127
      %v530 = vpop.permute.xlu0 %529
      %531 = vrot.lane.b32.xlu0 %v526, 127
      %v532 = vpop.permute.xlu0 %531
      %vm533 = vcmask 1039360
      %v534 = vsel %vm533, %v528, %v530
      %v535 = vsel %vm533, %v530, %v532
      %539 = vst [vmem:[#allocation3 + $0x18] sm:$0x80] %v534
      %540 = vst [vmem:[#allocation3 + $0x20] sm:$0x80] %v535
      %vm541 = vcmask 556039
      %542 = vst.msk [vmem:[#allocation3 + $0x28] sm:$0x80] %vm541, %v532
      %543 = vst [vmem:[#allocation3 + $0x30] sm:$0x3] %v534
      %544 = vst [vmem:[#allocation3 + $0x38] sm:$0x3] %v535
      %vm545 = vcmask 549888
      %546 = vst.msk [vmem:[#allocation3 + $0x40] sm:$0x3] %vm545, %v532
      %v547 = vld [vmem:[#allocation2 + $0x8] sm:$0x7]
      %v548 = vld [vmem:[#allocation2 + $0x10] sm:$0x7]
      %v549 = vld [vmem:[#allocation2 + $0x18] sm:$0x7]
      %v553 = vrot.slane %v547, 6
      %v554 = vrot.slane %v548, 6
      %v555 = vrot.slane %v549, 6
      %556 = vrot.lane.b32.xlu0 %v553, 111
      %v557 = vpop.permute.xlu0 %556
      %558 = vrot.lane.b32.xlu0 %v554, 111
      %v559 = vpop.permute.xlu0 %558
      %560 = vrot.lane.b32.xlu0 %v555, 111
      %v561 = vpop.permute.xlu0 %560
      %vm562 = vcmask 908288
      %v563 = vsel %vm562, %v557, %v559
      %v564 = vsel %vm562, %v559, %v561
      %568 = vst [vmem:[#allocation3 + $0x30] sm:$0x1c] %v563
      %569 = vst [vmem:[#allocation3 + $0x38] sm:$0x1c] %v564
      %vm570 = vcmask 552962
      %571 = vst.msk [vmem:[#allocation3 + $0x40] sm:$0x1c] %vm570, %v561
      %v572 = vld [vmem:[#allocation2 + $0x8] sm:$0x7]
      %v573 = vld [vmem:[#allocation2 + $0x10] sm:$0x7]
      %v574 = vld [vmem:[#allocation2 + $0x18] sm:$0x7]
      %v578 = vrot.slane %v572, 3
      %v579 = vrot.slane %v573, 3
      %v580 = vrot.slane %v574, 3
      %581 = vrot.lane.b32.xlu0 %v578, 110
      %v582 = vpop.permute.xlu0 %581
      %583 = vrot.lane.b32.xlu0 %v579, 110
      %v584 = vpop.permute.xlu0 %583
      %585 = vrot.lane.b32.xlu0 %v580, 110
      %v586 = vpop.permute.xlu0 %585
      %vm587 = vcmask 900096
      %v588 = vsel %vm587, %v582, %v584
      %v589 = vsel %vm587, %v584, %v586
      %593 = vst [vmem:[#allocation3 + $0x30] sm:$0xe0] %v588
      %594 = vst [vmem:[#allocation3 + $0x38] sm:$0xe0] %v589
      %vm595 = vcmask 556037
      %596 = vst.msk [vmem:[#allocation3 + $0x40] sm:$0xe0] %vm595, %v586
      %v597 = vld [vmem:[#allocation2 + $0x8] sm:$0x7]
      %v598 = vld [vmem:[#allocation2 + $0x10] sm:$0x7]
      %v599 = vld [vmem:[#allocation2 + $0x18] sm:$0x7]
      %603 = vrot.lane.b32.xlu0 %v597, 109
      %v604 = vpop.permute.xlu0 %603
      %605 = vrot.lane.b32.xlu0 %v598, 109
      %v606 = vpop.permute.xlu0 %605
      %607 = vrot.lane.b32.xlu0 %v599, 109
      %v608 = vpop.permute.xlu0 %607
      %vm609 = vcmask 891904
      %v610 = vsel %vm609, %v604, %v606
      %v611 = vsel %vm609, %v606, %v608
      %615 = vst [vmem:[#allocation3 + $0x48] sm:$0x7] %v610
      %616 = vst [vmem:[#allocation3 + $0x50] sm:$0x7] %v611
      %617 = vst.msk [vmem:[#allocation3 + $0x58] sm:$0x7] %vm377, %v608
      %v618 = vld [vmem:[%s2] sm:$0xff]
      %v619 = vld [vmem:[%s2 + $0x8] sm:$0xff]
      %v620 = vld [vmem:[%s2 + $0x10] sm:$0xff]
      %v621 = vld [vmem:[%s2 + $0x18] sm:$0xff]
      %v622 = vld [vmem:[#allocation3] sm:$0xff]
      %v623 = vld [vmem:[#allocation3 + $0x8] sm:$0xff]
      %v624 = vld [vmem:[#allocation3 + $0x10] sm:$0xff]
      %v625 = vld [vmem:[#allocation3 + $0x18] sm:$0xff]
      %v626 = vld [vmem:[#allocation3 + $0x20] sm:$0xff]
      %v627 = vld [vmem:[#allocation3 + $0x28] sm:$0xff]
      %v628 = vld [vmem:[#allocation3 + $0x30] sm:$0xff]
      %v629 = vld [vmem:[#allocation3 + $0x38] sm:$0xff]
      %v630 = vld [vmem:[#allocation3 + $0x40] sm:$0xff]
      %v631 = vld [vmem:[#allocation3 + $0x48] sm:$0x7]
      %v632 = vld [vmem:[#allocation3 + $0x50] sm:$0x7]
      %v633 = vld [vmem:[#allocation3 + $0x58] sm:$0x7]
      %v634 = vld [vmem:[%s3] sm:$0xff]
      %v635 = vld [vmem:[%s3 + $0x8] sm:$0xff]
      %v636 = vld [vmem:[%s3 + $0x10] sm:$0xff]
      %v637 = vld [vmem:[%s3 + $0x18] sm:$0xff]
      %639 = vset.pattern.permute.xlu0 0
      %640 = vperm.xlu0 %639, %v634
      %v641 = vpop.permute.xlu0 %640
      %644 = vset.pattern.permute.xlu0 0
      %645 = vperm.xlu0 %644, %v635
      %v646 = vpop.permute.xlu0 %645
      %649 = vset.pattern.permute.xlu0 0
      %650 = vperm.xlu0 %649, %v636
      %v651 = vpop.permute.xlu0 %650
      %654 = vset.pattern.permute.xlu0 0
      %655 = vperm.xlu0 %654, %v637
      %v656 = vpop.permute.xlu0 %655
      %vm658 = vcmask 220160
      %v660 = vsel %vm658, %v618, 0
      %v663 = vsel %vm658, %v619, 0
      %v666 = vsel %vm658, %v620, 0
      %v669 = vsel %vm658, %v621, 0
      %vm671 = vcmask 1042432
      %v673 = vsel %vm671, %v631, 0
      %v676 = vsel %vm671, %v632, 0
      %v679 = vsel %vm671, %v633, 0
      %681 = vmatprep.subr.mxu0 %v623
      %682 = vmatpush1.msra.mxu0 %v622
      %683 = vmatprep.subr.mxu0 %v626
      %684 = vmatpush1.msra.mxu0 %v625
      %685 = vmatprep.subr.mxu0 %v629
      %686 = vmatpush1.msra.mxu0 %v628
      %687 = vmatprep.subr.mxu0 %v676
      %688 = vmatpush1.msra.mxu0 %v673
      %689 = vmatprep.subr.mxu0 0.0
      %690 = vmatpush1.msra.mxu0 0.0
      %691 = vmatprep.subr.mxu0 0.0
      %692 = vmatpush1.msra.mxu0 0.0
      %693 = vmatprep.subr.mxu0 0.0
      %694 = vmatpush1.msra.mxu0 0.0
      %695 = vmatprep.subr.mxu0 0.0
      %696 = vmatpush1.msra.mxu0 0.0
      %697 = vmatprep.subr.mxu0 0.0
      %698 = vmatpush1.msra.mxu0 0.0
      %699 = vmatprep.subr.mxu0 0.0
      %700 = vmatpush1.msra.mxu0 0.0
      %701 = vmatprep.subr.mxu0 0.0
      %702 = vmatpush1.msra.mxu0 0.0
      %703 = vmatprep.subr.mxu0 0.0
      %704 = vmatpush1.msra.mxu0 0.0
      %705 = vmatprep.subr.mxu0 0.0
      %706 = vmatpush1.msra.mxu0 0.0
      %707 = vmatprep.subr.mxu0 0.0
      %708 = vmatpush1.msra.mxu0 0.0
      %709 = vmatprep.subr.mxu0 0.0
      %710 = vmatpush1.msra.mxu0 0.0
      %711 = vmatprep.subr.mxu0 0.0
      %712 = vmatpush1.msra.mxu0 0.0
      %713 = vmatprep.subr.mxu0 0.0
      %714 = vmatpush1.msra.mxu0 0.0
      %715 = vmatprep.subr.mxu0 0.0
      %716 = vmatpush1.msra.mxu0 0.0
      %717 = vmatprep.subr.mxu0 0.0
      %718 = vmatpush1.msra.mxu0 0.0
      %719 = vmatprep.subr.mxu0 0.0
      %720 = vmatpush1.msra.mxu0 0.0
      %721 = vmatprep.subr.mxu0 0.0
      %722 = vmatpush1.msra.mxu0 0.0
      %723 = vmatprep.subr.mxu0 0.0
      %724 = vmatpush1.msra.mxu0 0.0
      %725 = vmatprep.subr.mxu0 0.0
      %726 = vmatpush1.msra.mxu0 0.0
      %727 = vmatprep.subr.mxu0 0.0
      %728 = vmatpush1.msra.mxu0 0.0
      %729 = vmatprep.subr.mxu0 0.0
      %730 = vmatpush1.msra.mxu0 0.0
      %731 = vmatprep.subr.mxu0 0.0
      %732 = vmatpush1.msra.mxu0 0.0
      %733 = vmatprep.subr.mxu0 0.0
      %734 = vmatpush1.msra.mxu0 0.0
      %735 = vmatprep.subr.mxu0 0.0
      %736 = vmatpush1.msra.mxu0 0.0
      %737 = vmatprep.subr.mxu0 0.0
      %738 = vmatpush1.msra.mxu0 0.0
      %739 = vmatprep.subr.mxu0 0.0
      %740 = vmatpush1.msra.mxu0 0.0
      %741 = vmatprep.subr.mxu0 0.0
      %742 = vmatpush1.msra.mxu0 0.0
      %743 = vmatprep.subr.mxu0 0.0
      %744 = vmatpush1.msra.mxu0 0.0
      %745 = vmatprep.mubr.f32.mxu0 0.0
      %746 = vmatmul.mubr.f32.gmra.mrb[0].mxu0 %v660
      %v747 = vpop.f32.mrb[0].mxu0
      %v748 = vadd.f32 %v641, %v747
      %v749 = vpop.f32.mrb[0].mxu0
      %v750 = vadd.f32 %v641, %v749
      %751 = vmatprep.mubr.f32.mxu0 0.0
      %752 = vmatmul.mubr.f32.gmra.mrb[0].mxu0 %v663
      %v753 = vpop.f32.mrb[0].mxu0
      %v754 = vadd.f32 %v646, %v753
      %v755 = vpop.f32.mrb[0].mxu0
      %v756 = vadd.f32 %v646, %v755
      %757 = vmatprep.mubr.f32.mxu0 0.0
      %758 = vmatmul.mubr.f32.gmra.mrb[0].mxu0 %v666
      %v759 = vpop.f32.mrb[0].mxu0
      %v760 = vadd.f32 %v651, %v759
      %v761 = vpop.f32.mrb[0].mxu0
      %v762 = vadd.f32 %v651, %v761
      %763 = vmatprep.mubr.f32.mxu0 0.0
      %764 = vmatmul.mubr.f32.gmra.mrb[0].mxu0 %v669
      %v765 = vpop.f32.mrb[0].mxu0
      %v766 = vadd.f32 %v656, %v765
      %v767 = vpop.f32.mrb[0].mxu0
      %v768 = vadd.f32 %v656, %v767
      %769 = vdwg.mxu0
      %770 = vmatprep.subr.mxu0 0.0
      %771 = vmatpush1.msra.mxu0 %v624
      %772 = vmatprep.subr.mxu0 0.0
      %773 = vmatpush1.msra.mxu0 %v627
      %774 = vmatprep.subr.mxu0 0.0
      %775 = vmatpush1.msra.mxu0 %v630
      %776 = vmatprep.subr.mxu0 0.0
      %777 = vmatpush1.msra.mxu0 %v679
      %778 = vmatprep.subr.mxu0 0.0
      %779 = vmatpush1.msra.mxu0 0.0
      %780 = vmatprep.subr.mxu0 0.0
      %781 = vmatpush1.msra.mxu0 0.0
      %782 = vmatprep.subr.mxu0 0.0
      %783 = vmatpush1.msra.mxu0 0.0
      %784 = vmatprep.subr.mxu0 0.0
      %785 = vmatpush1.msra.mxu0 0.0
      %786 = vmatprep.subr.mxu0 0.0
      %787 = vmatpush1.msra.mxu0 0.0
      %788 = vmatprep.subr.mxu0 0.0
      %789 = vmatpush1.msra.mxu0 0.0
      %790 = vmatprep.subr.mxu0 0.0
      %791 = vmatpush1.msra.mxu0 0.0
      %792 = vmatprep.subr.mxu0 0.0
      %793 = vmatpush1.msra.mxu0 0.0
      %794 = vmatprep.subr.mxu0 0.0
      %795 = vmatpush1.msra.mxu0 0.0
      %796 = vmatprep.subr.mxu0 0.0
      %797 = vmatpush1.msra.mxu0 0.0
      %798 = vmatprep.subr.mxu0 0.0
      %799 = vmatpush1.msra.mxu0 0.0
      %800 = vmatprep.subr.mxu0 0.0
      %801 = vmatpush1.msra.mxu0 0.0
      %802 = vmatprep.subr.mxu0 0.0
      %803 = vmatpush1.msra.mxu0 0.0
      %804 = vmatprep.subr.mxu0 0.0
      %805 = vmatpush1.msra.mxu0 0.0
      %806 = vmatprep.subr.mxu0 0.0
      %807 = vmatpush1.msra.mxu0 0.0
      %808 = vmatprep.subr.mxu0 0.0
      %809 = vmatpush1.msra.mxu0 0.0
      %810 = vmatprep.subr.mxu0 0.0
      %811 = vmatpush1.msra.mxu0 0.0
      %812 = vmatprep.subr.mxu0 0.0
      %813 = vmatpush1.msra.mxu0 0.0
      %814 = vmatprep.subr.mxu0 0.0
      %815 = vmatpush1.msra.mxu0 0.0
      %816 = vmatprep.subr.mxu0 0.0
      %817 = vmatpush1.msra.mxu0 0.0
      %818 = vmatprep.subr.mxu0 0.0
      %819 = vmatpush1.msra.mxu0 0.0
      %820 = vmatprep.subr.mxu0 0.0
      %821 = vmatpush1.msra.mxu0 0.0
      %822 = vmatprep.subr.mxu0 0.0
      %823 = vmatpush1.msra.mxu0 0.0
      %824 = vmatprep.subr.mxu0 0.0
      %825 = vmatpush1.msra.mxu0 0.0
      %826 = vmatprep.subr.mxu0 0.0
      %827 = vmatpush1.msra.mxu0 0.0
      %828 = vmatprep.subr.mxu0 0.0
      %829 = vmatpush1.msra.mxu0 0.0
      %830 = vmatprep.subr.mxu0 0.0
      %831 = vmatpush1.msra.mxu0 0.0
      %832 = vmatprep.subr.mxu0 0.0
      %833 = vmatpush1.msra.mxu0 0.0
      %834 = vmatprep.mubr.f32.mxu0 0.0
      %835 = vmatmul.mubr.f32.gmra.mrb[0].mxu0 %v660
      %v836 = vpop.f32.mrb[0].mxu0
      %v837 = vadd.f32 %v641, %v836
      %v838 = vpop.f32.mrb[0].mxu0
      %839 = vmatprep.mubr.f32.mxu0 0.0
      %840 = vmatmul.mubr.f32.gmra.mrb[0].mxu0 %v663
      %v841 = vpop.f32.mrb[0].mxu0
      %v842 = vadd.f32 %v646, %v841
      %v843 = vpop.f32.mrb[0].mxu0
      %844 = vmatprep.mubr.f32.mxu0 0.0
      %845 = vmatmul.mubr.f32.gmra.mrb[0].mxu0 %v666
      %v846 = vpop.f32.mrb[0].mxu0
      %v847 = vadd.f32 %v651, %v846
      %v848 = vpop.f32.mrb[0].mxu0
      %849 = vmatprep.mubr.f32.mxu0 0.0
      %850 = vmatmul.mubr.f32.gmra.mrb[0].mxu0 %v669
      %v851 = vpop.f32.mrb[0].mxu0
      %v852 = vadd.f32 %v656, %v851
      %v853 = vpop.f32.mrb[0].mxu0
      %854 = vdwg.mxu0
      %v855 = vmax.f32 %v748, 0.0
      %v856 = vmax.f32 %v750, 0.0
      %v857 = vmax.f32 %v837, 0.0
      %v858 = vmax.f32 %v754, 0.0
      %v859 = vmax.f32 %v756, 0.0
      %v860 = vmax.f32 %v842, 0.0
      %v861 = vmax.f32 %v760, 0.0
      %v862 = vmax.f32 %v762, 0.0
      %v863 = vmax.f32 %v847, 0.0
      %v864 = vmax.f32 %v766, 0.0
      %v865 = vmax.f32 %v768, 0.0
      %v866 = vmax.f32 %v852, 0.0
      %v868 = vlaneseq
      %v869 = vshrl.u32 %v868, 7
      %v870 = vsub.s32 0, %v869
      %v871 = vrot.slane %v369, %v870
      %v872 = vlaneseq
      %v873 = vshrl.u32 %v872, 7
      %v874 = vsub.s32 1, %v873
      %v875 = vrot.slane %v369, %v874
      %v876 = vlaneseq
      %v877 = vshrl.u32 %v876, 7
      %v878 = vsub.s32 2, %v877
      %v879 = vrot.slane %v369, %v878
      %v883 = vmul.f32 %v855, %v871
      %v884 = vmul.f32 %v856, %v875
      %v885 = vmul.f32 %v857, %v879
      %v886 = vmul.f32 %v858, %v871
      %v887 = vmul.f32 %v859, %v875
      %v888 = vmul.f32 %v860, %v879
      %v889 = vmul.f32 %v861, %v871
      %v890 = vmul.f32 %v862, %v875
      %v891 = vmul.f32 %v863, %v879
      %v892 = vmul.f32 %v864, %v871
      %v893 = vmul.f32 %v865, %v875
      %v894 = vmul.f32 %v866, %v879
      %895 = vst [vmem:[#allocation2 + $0x8] sm:$0xff] %v883
      %896 = vst [vmem:[#allocation2 + $0x10] sm:$0xff] %v884
      %vm897 = vcmask 556032
      %898 = vst.msk [vmem:[#allocation2 + $0x18] sm:$0xff] %vm897, %v885
      %899 = vst [vmem:[#allocation2 + $0x28] sm:$0xff] %v886
      %900 = vst [vmem:[#allocation2 + $0x30] sm:$0xff] %v887
      %901 = vst.msk [vmem:[#allocation2 + $0x38] sm:$0xff] %vm897, %v888
      %902 = vst [vmem:[#allocation2 + $0x48] sm:$0xff] %v889
      %903 = vst [vmem:[#allocation2 + $0x50] sm:$0xff] %v890
      %904 = vst.msk [vmem:[#allocation2 + $0x58] sm:$0xff] %vm897, %v891
      %905 = vst [vmem:[#allocation2 + $0x68] sm:$0xff] %v892
      %906 = vst [vmem:[#allocation2 + $0x70] sm:$0xff] %v893
      %907 = vst.msk [vmem:[#allocation2 + $0x78] sm:$0xff] %vm897, %v894
      %v908 = vld [vmem:[#allocation2] sm:$0xff]
      %v909 = vld [vmem:[#allocation2 + $0x8] sm:$0xff]
      %v910 = vld [vmem:[#allocation2 + $0x10] sm:$0xff]
      %v911 = vld [vmem:[#allocation2 + $0x18] sm:$0xff]
      %v912 = vld [vmem:[#allocation2 + $0x20] sm:$0xff]
      %v913 = vld [vmem:[#allocation2 + $0x28] sm:$0xff]
      %v914 = vld [vmem:[#allocation2 + $0x30] sm:$0xff]
      %v915 = vld [vmem:[#allocation2 + $0x38] sm:$0xff]
      %v916 = vld [vmem:[#allocation2 + $0x40] sm:$0xff]
      %v917 = vld [vmem:[#allocation2 + $0x48] sm:$0xff]
      %v918 = vld [vmem:[#allocation2 + $0x50] sm:$0xff]
      %v919 = vld [vmem:[#allocation2 + $0x58] sm:$0xff]
      %v920 = vld [vmem:[#allocation2 + $0x60] sm:$0xff]
      %v921 = vld [vmem:[#allocation2 + $0x68] sm:$0xff]
      %v922 = vld [vmem:[#allocation2 + $0x70] sm:$0xff]
      %v923 = vld [vmem:[#allocation2 + $0x78] sm:$0xff]
      %940 = vrot.lane.b32.xlu0 %v908, 19
      %v941 = vpop.permute.xlu0 %940
      %942 = vrot.lane.b32.xlu0 %v909, 19
      %v943 = vpop.permute.xlu0 %942
      %944 = vrot.lane.b32.xlu0 %v910, 19
      %v945 = vpop.permute.xlu0 %944
      %946 = vrot.lane.b32.xlu0 %v911, 19
      %v947 = vpop.permute.xlu0 %946
      %948 = vrot.lane.b32.xlu0 %v912, 19
      %v949 = vpop.permute.xlu0 %948
      %950 = vrot.lane.b32.xlu0 %v913, 19
      %v951 = vpop.permute.xlu0 %950
      %952 = vrot.lane.b32.xlu0 %v914, 19
      %v953 = vpop.permute.xlu0 %952
      %954 = vrot.lane.b32.xlu0 %v915, 19
      %v955 = vpop.permute.xlu0 %954
      %956 = vrot.lane.b32.xlu0 %v916, 19
      %v957 = vpop.permute.xlu0 %956
      %958 = vrot.lane.b32.xlu0 %v917, 19
      %v959 = vpop.permute.xlu0 %958
      %960 = vrot.lane.b32.xlu0 %v918, 19
      %v961 = vpop.permute.xlu0 %960
      %962 = vrot.lane.b32.xlu0 %v919, 19
      %v963 = vpop.permute.xlu0 %962
      %964 = vrot.lane.b32.xlu0 %v920, 19
      %v965 = vpop.permute.xlu0 %964
      %966 = vrot.lane.b32.xlu0 %v921, 19
      %v967 = vpop.permute.xlu0 %966
      %968 = vrot.lane.b32.xlu0 %v922, 19
      %v969 = vpop.permute.xlu0 %968
      %970 = vrot.lane.b32.xlu0 %v923, 19
      %v971 = vpop.permute.xlu0 %970
      %v972 = vsel %vm395, %v941, %v943
      %v973 = vsel %vm395, %v943, %v945
      %v974 = vsel %vm395, %v945, %v947
      %v975 = vsel %vm395, %v949, %v951
      %v976 = vsel %vm395, %v951, %v953
      %v977 = vsel %vm395, %v953, %v955
      %v978 = vsel %vm395, %v957, %v959
      %v979 = vsel %vm395, %v959, %v961
      %v980 = vsel %vm395, %v961, %v963
      %v981 = vsel %vm395, %v965, %v967
      %v982 = vsel %vm395, %v967, %v969
      %v983 = vsel %vm395, %v969, %v971
      %996 = vst [vmem:[#allocation3] sm:$0xff] %v972
      %997 = vst [vmem:[#allocation3 + $0x8] sm:$0xff] %v973
      %998 = vst.msk [vmem:[#allocation3 + $0x10] sm:$0xff] %vm897, %v974
      %999 = vst [vmem:[#allocation3 + $0x18] sm:$0xff] %v975
      %1000 = vst [vmem:[#allocation3 + $0x20] sm:$0xff] %v976
      %1001 = vst.msk [vmem:[#allocation3 + $0x28] sm:$0xff] %vm897, %v977
      %1002 = vst [vmem:[#allocation3 + $0x30] sm:$0xff] %v978
      %1003 = vst [vmem:[#allocation3 + $0x38] sm:$0xff] %v979
      %1004 = vst.msk [vmem:[#allocation3 + $0x40] sm:$0xff] %vm897, %v980
      %1005 = vst [vmem:[#allocation3 + $0x48] sm:$0xff] %v981
      %1006 = vst [vmem:[#allocation3 + $0x50] sm:$0xff] %v982
      %1007 = vst.msk [vmem:[#allocation3 + $0x58] sm:$0xff] %vm897, %v983
      %v1008 = vld [vmem:[#allocation2] sm:$0xff]
      %v1009 = vld [vmem:[#allocation2 + $0x8] sm:$0xff]
      %v1010 = vld [vmem:[#allocation2 + $0x10] sm:$0xff]
      %v1011 = vld [vmem:[#allocation2 + $0x18] sm:$0xff]
      %v1012 = vld [vmem:[#allocation2 + $0x20] sm:$0xff]
      %v1013 = vld [vmem:[#allocation2 + $0x28] sm:$0xff]
      %v1014 = vld [vmem:[#allocation2 + $0x30] sm:$0xff]
      %v1015 = vld [vmem:[#allocation2 + $0x38] sm:$0xff]
      %v1016 = vld [vmem:[#allocation2 + $0x40] sm:$0xff]
      %v1017 = vld [vmem:[#allocation2 + $0x48] sm:$0xff]
      %v1018 = vld [vmem:[#allocation2 + $0x50] sm:$0xff]
      %v1019 = vld [vmem:[#allocation2 + $0x58] sm:$0xff]
      %v1020 = vld [vmem:[#allocation2 + $0x60] sm:$0xff]
      %v1021 = vld [vmem:[#allocation2 + $0x68] sm:$0xff]
      %v1022 = vld [vmem:[#allocation2 + $0x70] sm:$0xff]
      %v1023 = vld [vmem:[#allocation2 + $0x78] sm:$0xff]
      %1040 = vrot.lane.b32.xlu0 %v1008, 18
      %v1041 = vpop.permute.xlu0 %1040
      %1042 = vrot.lane.b32.xlu0 %v1009, 18
      %v1043 = vpop.permute.xlu0 %1042
      %1044 = vrot.lane.b32.xlu0 %v1010, 18
      %v1045 = vpop.permute.xlu0 %1044
      %1046 = vrot.lane.b32.xlu0 %v1011, 18
      %v1047 = vpop.permute.xlu0 %1046
      %1048 = vrot.lane.b32.xlu0 %v1012, 18
      %v1049 = vpop.permute.xlu0 %1048
      %1050 = vrot.lane.b32.xlu0 %v1013, 18
      %v1051 = vpop.permute.xlu0 %1050
      %1052 = vrot.lane.b32.xlu0 %v1014, 18
      %v1053 = vpop.permute.xlu0 %1052
      %1054 = vrot.lane.b32.xlu0 %v1015, 18
      %v1055 = vpop.permute.xlu0 %1054
      %1056 = vrot.lane.b32.xlu0 %v1016, 18
      %v1057 = vpop.permute.xlu0 %1056
      %1058 = vrot.lane.b32.xlu0 %v1017, 18
      %v1059 = vpop.permute.xlu0 %1058
      %1060 = vrot.lane.b32.xlu0 %v1018, 18
      %v1061 = vpop.permute.xlu0 %1060
      %1062 = vrot.lane.b32.xlu0 %v1019, 18
      %v1063 = vpop.permute.xlu0 %1062
      %1064 = vrot.lane.b32.xlu0 %v1020, 18
      %v1065 = vpop.permute.xlu0 %1064
      %1066 = vrot.lane.b32.xlu0 %v1021, 18
      %v1067 = vpop.permute.xlu0 %1066
      %1068 = vrot.lane.b32.xlu0 %v1022, 18
      %v1069 = vpop.permute.xlu0 %1068
      %1070 = vrot.lane.b32.xlu0 %v1023, 18
      %v1071 = vpop.permute.xlu0 %1070
      %v1072 = vsel %vm425, %v1041, %v1043
      %v1073 = vsel %vm425, %v1043, %v1045
      %v1074 = vsel %vm425, %v1045, %v1047
      %v1075 = vsel %vm425, %v1049, %v1051
      %v1076 = vsel %vm425, %v1051, %v1053
      %v1077 = vsel %vm425, %v1053, %v1055
      %v1078 = vsel %vm425, %v1057, %v1059
      %v1079 = vsel %vm425, %v1059, %v1061
      %v1080 = vsel %vm425, %v1061, %v1063
      %v1081 = vsel %vm425, %v1065, %v1067
      %v1082 = vsel %vm425, %v1067, %v1069
      %v1083 = vsel %vm425, %v1069, %v1071
      %1096 = vst [vmem:[#allocation3 + $0x60] sm:$0xff] %v1072
      %1097 = vst [vmem:[#allocation3 + $0x68] sm:$0xff] %v1073
      %1098 = vst.msk [vmem:[#allocation3 + $0x70] sm:$0xff] %vm897, %v1074
      %1099 = vst [vmem:[#allocation3 + $0x78] sm:$0xff] %v1075
      %1100 = vst [vmem:[#allocation3 + $0x80] sm:$0xff] %v1076
      %1101 = vst.msk [vmem:[#allocation3 + $0x88] sm:$0xff] %vm897, %v1077
      %1102 = vst [vmem:[#allocation3 + $0x90] sm:$0xff] %v1078
      %1103 = vst [vmem:[#allocation3 + $0x98] sm:$0xff] %v1079
      %1104 = vst.msk [vmem:[#allocation3 + $0xa0] sm:$0xff] %vm897, %v1080
      %1105 = vst [vmem:[#allocation3 + $0xa8] sm:$0xff] %v1081
      %1106 = vst [vmem:[#allocation3 + $0xb0] sm:$0xff] %v1082
      %1107 = vst.msk [vmem:[#allocation3 + $0xb8] sm:$0xff] %vm897, %v1083
      %v1108 = vld [vmem:[#allocation2] sm:$0xff]
      %v1109 = vld [vmem:[#allocation2 + $0x8] sm:$0xff]
      %v1110 = vld [vmem:[#allocation2 + $0x10] sm:$0xff]
      %v1111 = vld [vmem:[#allocation2 + $0x18] sm:$0xff]
      %v1112 = vld [vmem:[#allocation2 + $0x20] sm:$0xff]
      %v1113 = vld [vmem:[#allocation2 + $0x28] sm:$0xff]
      %v1114 = vld [vmem:[#allocation2 + $0x30] sm:$0xff]
      %v1115 = vld [vmem:[#allocation2 + $0x38] sm:$0xff]
      %v1116 = vld [vmem:[#allocation2 + $0x40] sm:$0xff]
      %v1117 = vld [vmem:[#allocation2 + $0x48] sm:$0xff]
      %v1118 = vld [vmem:[#allocation2 + $0x50] sm:$0xff]
      %v1119 = vld [vmem:[#allocation2 + $0x58] sm:$0xff]
      %v1120 = vld [vmem:[#allocation2 + $0x60] sm:$0xff]
      %v1121 = vld [vmem:[#allocation2 + $0x68] sm:$0xff]
      %v1122 = vld [vmem:[#allocation2 + $0x70] sm:$0xff]
      %v1123 = vld [vmem:[#allocation2 + $0x78] sm:$0xff]
      %1140 = vrot.lane.b32.xlu0 %v1108, 17
      %v1141 = vpop.permute.xlu0 %1140
      %1142 = vrot.lane.b32.xlu0 %v1109, 17
      %v1143 = vpop.permute.xlu0 %1142
      %1144 = vrot.lane.b32.xlu0 %v1110, 17
      %v1145 = vpop.permute.xlu0 %1144
      %1146 = vrot.lane.b32.xlu0 %v1111, 17
      %v1147 = vpop.permute.xlu0 %1146
      %1148 = vrot.lane.b32.xlu0 %v1112, 17
      %v1149 = vpop.permute.xlu0 %1148
      %1150 = vrot.lane.b32.xlu0 %v1113, 17
      %v1151 = vpop.permute.xlu0 %1150
      %1152 = vrot.lane.b32.xlu0 %v1114, 17
      %v1153 = vpop.permute.xlu0 %1152
      %1154 = vrot.lane.b32.xlu0 %v1115, 17
      %v1155 = vpop.permute.xlu0 %1154
      %1156 = vrot.lane.b32.xlu0 %v1116, 17
      %v1157 = vpop.permute.xlu0 %1156
      %1158 = vrot.lane.b32.xlu0 %v1117, 17
      %v1159 = vpop.permute.xlu0 %1158
      %1160 = vrot.lane.b32.xlu0 %v1118, 17
      %v1161 = vpop.permute.xlu0 %1160
      %1162 = vrot.lane.b32.xlu0 %v1119, 17
      %v1163 = vpop.permute.xlu0 %1162
      %1164 = vrot.lane.b32.xlu0 %v1120, 17
      %v1165 = vpop.permute.xlu0 %1164
      %1166 = vrot.lane.b32.xlu0 %v1121, 17
      %v1167 = vpop.permute.xlu0 %1166
      %1168 = vrot.lane.b32.xlu0 %v1122, 17
      %v1169 = vpop.permute.xlu0 %1168
      %1170 = vrot.lane.b32.xlu0 %v1123, 17
      %v1171 = vpop.permute.xlu0 %1170
      %v1172 = vsel %vm456, %v1141, %v1143
      %v1173 = vsel %vm456, %v1143, %v1145
      %v1174 = vsel %vm456, %v1145, %v1147
      %v1175 = vsel %vm456, %v1149, %v1151
      %v1176 = vsel %vm456, %v1151, %v1153
      %v1177 = vsel %vm456, %v1153, %v1155
      %v1178 = vsel %vm456, %v1157, %v1159
      %v1179 = vsel %vm456, %v1159, %v1161
      %v1180 = vsel %vm456, %v1161, %v1163
      %v1181 = vsel %vm456, %v1165, %v1167
      %v1182 = vsel %vm456, %v1167, %v1169
      %v1183 = vsel %vm456, %v1169, %v1171
      %1196 = vst [vmem:[#allocation3 + $0xc0] sm:$0xff] %v1172
      %1197 = vst [vmem:[#allocation3 + $0xc8] sm:$0xff] %v1173
      %1198 = vst.msk [vmem:[#allocation3 + $0xd0] sm:$0xff] %vm897, %v1174
      %1199 = vst [vmem:[#allocation3 + $0xd8] sm:$0xff] %v1175
      %1200 = vst [vmem:[#allocation3 + $0xe0] sm:$0xff] %v1176
      %1201 = vst.msk [vmem:[#allocation3 + $0xe8] sm:$0xff] %vm897, %v1177
      %1202 = vst [vmem:[#allocation3 + $0xf0] sm:$0xff] %v1178
      %1203 = vst [vmem:[#allocation3 + $0xf8] sm:$0xff] %v1179
      %1204 = vst.msk [vmem:[#allocation3 + $0x100] sm:$0xff] %vm897, %v1180
      %1205 = vst [vmem:[#allocation3 + $0x108] sm:$0xff] %v1181
      %1206 = vst [vmem:[#allocation3 + $0x110] sm:$0xff] %v1182
      %1207 = vst.msk [vmem:[#allocation3 + $0x118] sm:$0xff] %vm897, %v1183
      %v1208 = vld [vmem:[#allocation2] sm:$0xff]
      %v1209 = vld [vmem:[#allocation2 + $0x8] sm:$0xff]
      %v1210 = vld [vmem:[#allocation2 + $0x10] sm:$0xff]
      %v1211 = vld [vmem:[#allocation2 + $0x18] sm:$0xff]
      %v1212 = vld [vmem:[#allocation2 + $0x20] sm:$0xff]
      %v1213 = vld [vmem:[#allocation2 + $0x28] sm:$0xff]
      %v1214 = vld [vmem:[#allocation2 + $0x30] sm:$0xff]
      %v1215 = vld [vmem:[#allocation2 + $0x38] sm:$0xff]
      %v1216 = vld [vmem:[#allocation2 + $0x40] sm:$0xff]
      %v1217 = vld [vmem:[#allocation2 + $0x48] sm:$0xff]
      %v1218 = vld [vmem:[#allocation2 + $0x50] sm:$0xff]
      %v1219 = vld [vmem:[#allocation2 + $0x58] sm:$0xff]
      %v1220 = vld [vmem:[#allocation2 + $0x60] sm:$0xff]
      %v1221 = vld [vmem:[#allocation2 + $0x68] sm:$0xff]
      %v1222 = vld [vmem:[#allocation2 + $0x70] sm:$0xff]
      %v1223 = vld [vmem:[#allocation2 + $0x78] sm:$0xff]
      %1240 = vrot.lane.b32.xlu0 %v1208, 1
      %v1241 = vpop.permute.xlu0 %1240
      %1242 = vrot.lane.b32.xlu0 %v1209, 1
      %v1243 = vpop.permute.xlu0 %1242
      %1244 = vrot.lane.b32.xlu0 %v1210, 1
      %v1245 = vpop.permute.xlu0 %1244
      %1246 = vrot.lane.b32.xlu0 %v1211, 1
      %v1247 = vpop.permute.xlu0 %1246
      %1248 = vrot.lane.b32.xlu0 %v1212, 1
      %v1249 = vpop.permute.xlu0 %1248
      %1250 = vrot.lane.b32.xlu0 %v1213, 1
      %v1251 = vpop.permute.xlu0 %1250
      %1252 = vrot.lane.b32.xlu0 %v1214, 1
      %v1253 = vpop.permute.xlu0 %1252
      %1254 = vrot.lane.b32.xlu0 %v1215, 1
      %v1255 = vpop.permute.xlu0 %1254
      %1256 = vrot.lane.b32.xlu0 %v1216, 1
      %v1257 = vpop.permute.xlu0 %1256
      %1258 = vrot.lane.b32.xlu0 %v1217, 1
      %v1259 = vpop.permute.xlu0 %1258
      %1260 = vrot.lane.b32.xlu0 %v1218, 1
      %v1261 = vpop.permute.xlu0 %1260
      %1262 = vrot.lane.b32.xlu0 %v1219, 1
      %v1263 = vpop.permute.xlu0 %1262
      %1264 = vrot.lane.b32.xlu0 %v1220, 1
      %v1265 = vpop.permute.xlu0 %1264
      %1266 = vrot.lane.b32.xlu0 %v1221, 1
      %v1267 = vpop.permute.xlu0 %1266
      %1268 = vrot.lane.b32.xlu0 %v1222, 1
      %v1269 = vpop.permute.xlu0 %1268
      %1270 = vrot.lane.b32.xlu0 %v1223, 1
      %v1271 = vpop.permute.xlu0 %1270
      %v1272 = vsel %vm491, %v1241, %v1243
      %v1273 = vsel %vm491, %v1243, %v1245
      %v1274 = vsel %vm491, %v1245, %v1247
      %v1275 = vsel %vm491, %v1249, %v1251
      %v1276 = vsel %vm491, %v1251, %v1253
      %v1277 = vsel %vm491, %v1253, %v1255
      %v1278 = vsel %vm491, %v1257, %v1259
      %v1279 = vsel %vm491, %v1259, %v1261
      %v1280 = vsel %vm491, %v1261, %v1263
      %v1281 = vsel %vm491, %v1265, %v1267
      %v1282 = vsel %vm491, %v1267, %v1269
      %v1283 = vsel %vm491, %v1269, %v1271
      %1296 = vst [vmem:[#allocation3 + $0x120] sm:$0xff] %v1272
      %1297 = vst [vmem:[#allocation3 + $0x128] sm:$0xff] %v1273
      %1298 = vst.msk [vmem:[#allocation3 + $0x130] sm:$0xff] %vm897, %v1274
      %1299 = vst [vmem:[#allocation3 + $0x138] sm:$0xff] %v1275
      %1300 = vst [vmem:[#allocation3 + $0x140] sm:$0xff] %v1276
      %1301 = vst.msk [vmem:[#allocation3 + $0x148] sm:$0xff] %vm897, %v1277
      %1302 = vst [vmem:[#allocation3 + $0x150] sm:$0xff] %v1278
      %1303 = vst [vmem:[#allocation3 + $0x158] sm:$0xff] %v1279
      %1304 = vst.msk [vmem:[#allocation3 + $0x160] sm:$0xff] %vm897, %v1280
      %1305 = vst [vmem:[#allocation3 + $0x168] sm:$0xff] %v1281
      %1306 = vst [vmem:[#allocation3 + $0x170] sm:$0xff] %v1282
      %1307 = vst.msk [vmem:[#allocation3 + $0x178] sm:$0xff] %vm897, %v1283
      %v1308 = vld [vmem:[#allocation2 + $0x8] sm:$0xff]
      %v1309 = vld [vmem:[#allocation2 + $0x10] sm:$0xff]
      %v1310 = vld [vmem:[#allocation2 + $0x18] sm:$0xff]
      %v1311 = vld [vmem:[#allocation2 + $0x28] sm:$0xff]
      %v1312 = vld [vmem:[#allocation2 + $0x30] sm:$0xff]
      %v1313 = vld [vmem:[#allocation2 + $0x38] sm:$0xff]
      %v1314 = vld [vmem:[#allocation2 + $0x48] sm:$0xff]
      %v1315 = vld [vmem:[#allocation2 + $0x50] sm:$0xff]
      %v1316 = vld [vmem:[#allocation2 + $0x58] sm:$0xff]
      %v1317 = vld [vmem:[#allocation2 + $0x68] sm:$0xff]
      %v1318 = vld [vmem:[#allocation2 + $0x70] sm:$0xff]
      %v1319 = vld [vmem:[#allocation2 + $0x78] sm:$0xff]
      %1320 = vst [vmem:[#allocation3 + $0x180] sm:$0xff] %v1308
      %1321 = vst [vmem:[#allocation3 + $0x188] sm:$0xff] %v1309
      %1322 = vst.msk [vmem:[#allocation3 + $0x190] sm:$0xff] %vm897, %v1310
      %1323 = vst [vmem:[#allocation3 + $0x198] sm:$0xff] %v1311
      %1324 = vst [vmem:[#allocation3 + $0x1a0] sm:$0xff] %v1312
      %1325 = vst.msk [vmem:[#allocation3 + $0x1a8] sm:$0xff] %vm897, %v1313
      %1326 = vst [vmem:[#allocation3 + $0x1b0] sm:$0xff] %v1314
      %1327 = vst [vmem:[#allocation3 + $0x1b8] sm:$0xff] %v1315
      %1328 = vst.msk [vmem:[#allocation3 + $0x1c0] sm:$0xff] %vm897, %v1316
      %1329 = vst [vmem:[#allocation3 + $0x1c8] sm:$0xff] %v1317
      %1330 = vst [vmem:[#allocation3 + $0x1d0] sm:$0xff] %v1318
      %1331 = vst.msk [vmem:[#allocation3 + $0x1d8] sm:$0xff] %vm897, %v1319
      %v1332 = vld [vmem:[#allocation2 + $0x8] sm:$0xff]
      %v1333 = vld [vmem:[#allocation2 + $0x10] sm:$0xff]
      %v1334 = vld [vmem:[#allocation2 + $0x18] sm:$0xff]
      %v1335 = vld [vmem:[#allocation2 + $0x28] sm:$0xff]
      %v1336 = vld [vmem:[#allocation2 + $0x30] sm:$0xff]
      %v1337 = vld [vmem:[#allocation2 + $0x38] sm:$0xff]
      %v1338 = vld [vmem:[#allocation2 + $0x48] sm:$0xff]
      %v1339 = vld [vmem:[#allocation2 + $0x50] sm:$0xff]
      %v1340 = vld [vmem:[#allocation2 + $0x58] sm:$0xff]
      %v1341 = vld [vmem:[#allocation2 + $0x68] sm:$0xff]
      %v1342 = vld [vmem:[#allocation2 + $0x70] sm:$0xff]
      %v1343 = vld [vmem:[#allocation2 + $0x78] sm:$0xff]
      %1356 = vrot.lane.b32.xlu0 %v1332, 127
      %v1357 = vpop.permute.xlu0 %1356
      %1358 = vrot.lane.b32.xlu0 %v1333, 127
      %v1359 = vpop.permute.xlu0 %1358
      %1360 = vrot.lane.b32.xlu0 %v1334, 127
      %v1361 = vpop.permute.xlu0 %1360
      %1362 = vrot.lane.b32.xlu0 %v1335, 127
      %v1363 = vpop.permute.xlu0 %1362
      %1364 = vrot.lane.b32.xlu0 %v1336, 127
      %v1365 = vpop.permute.xlu0 %1364
      %1366 = vrot.lane.b32.xlu0 %v1337, 127
      %v1367 = vpop.permute.xlu0 %1366
      %1368 = vrot.lane.b32.xlu0 %v1338, 127
      %v1369 = vpop.permute.xlu0 %1368
      %1370 = vrot.lane.b32.xlu0 %v1339, 127
      %v1371 = vpop.permute.xlu0 %1370
      %1372 = vrot.lane.b32.xlu0 %v1340, 127
      %v1373 = vpop.permute.xlu0 %1372
      %1374 = vrot.lane.b32.xlu0 %v1341, 127
      %v1375 = vpop.permute.xlu0 %1374
      %1376 = vrot.lane.b32.xlu0 %v1342, 127
      %v1377 = vpop.permute.xlu0 %1376
      %1378 = vrot.lane.b32.xlu0 %v1343, 127
      %v1379 = vpop.permute.xlu0 %1378
      %v1380 = vsel %vm533, %v1357, %v1359
      %v1381 = vsel %vm533, %v1359, %v1361
      %v1382 = vsel %vm533, %v1363, %v1365
      %v1383 = vsel %vm533, %v1365, %v1367
      %v1384 = vsel %vm533, %v1369, %v1371
      %v1385 = vsel %vm533, %v1371, %v1373
      %v1386 = vsel %vm533, %v1375, %v1377
      %v1387 = vsel %vm533, %v1377, %v1379
      %1400 = vst [vmem:[#allocation3 + $0x1e0] sm:$0xff] %v1380
      %1401 = vst [vmem:[#allocation3 + $0x1e8] sm:$0xff] %v1381
      %1402 = vst.msk [vmem:[#allocation3 + $0x1f0] sm:$0xff] %vm897, %v1361
      %1403 = vst [vmem:[#allocation3 + $0x1f8] sm:$0xff] %v1382
      %1404 = vst [vmem:[#allocation3 + $0x200] sm:$0xff] %v1383
      %1405 = vst.msk [vmem:[#allocation3 + $0x208] sm:$0xff] %vm897, %v1367
      %1406 = vst [vmem:[#allocation3 + $0x210] sm:$0xff] %v1384
      %1407 = vst [vmem:[#allocation3 + $0x218] sm:$0xff] %v1385
      %1408 = vst.msk [vmem:[#allocation3 + $0x220] sm:$0xff] %vm897, %v1373
      %1409 = vst [vmem:[#allocation3 + $0x228] sm:$0xff] %v1386
      %1410 = vst [vmem:[#allocation3 + $0x230] sm:$0xff] %v1387
      %1411 = vst.msk [vmem:[#allocation3 + $0x238] sm:$0xff] %vm897, %v1379
      %v1412 = vld [vmem:[#allocation2 + $0x8] sm:$0xff]
      %v1413 = vld [vmem:[#allocation2 + $0x10] sm:$0xff]
      %v1414 = vld [vmem:[#allocation2 + $0x18] sm:$0xff]
      %v1415 = vld [vmem:[#allocation2 + $0x28] sm:$0xff]
      %v1416 = vld [vmem:[#allocation2 + $0x30] sm:$0xff]
      %v1417 = vld [vmem:[#allocation2 + $0x38] sm:$0xff]
      %v1418 = vld [vmem:[#allocation2 + $0x48] sm:$0xff]
      %v1419 = vld [vmem:[#allocation2 + $0x50] sm:$0xff]
      %v1420 = vld [vmem:[#allocation2 + $0x58] sm:$0xff]
      %v1421 = vld [vmem:[#allocation2 + $0x68] sm:$0xff]
      %v1422 = vld [vmem:[#allocation2 + $0x70] sm:$0xff]
      %v1423 = vld [vmem:[#allocation2 + $0x78] sm:$0xff]
      %1436 = vrot.lane.b32.xlu0 %v1412, 111
      %v1437 = vpop.permute.xlu0 %1436
      %1438 = vrot.lane.b32.xlu0 %v1413, 111
      %v1439 = vpop.permute.xlu0 %1438
      %1440 = vrot.lane.b32.xlu0 %v1414, 111
      %v1441 = vpop.permute.xlu0 %1440
      %1442 = vrot.lane.b32.xlu0 %v1415, 111
      %v1443 = vpop.permute.xlu0 %1442
      %1444 = vrot.lane.b32.xlu0 %v1416, 111
      %v1445 = vpop.permute.xlu0 %1444
      %1446 = vrot.lane.b32.xlu0 %v1417, 111
      %v1447 = vpop.permute.xlu0 %1446
      %1448 = vrot.lane.b32.xlu0 %v1418, 111
      %v1449 = vpop.permute.xlu0 %1448
      %1450 = vrot.lane.b32.xlu0 %v1419, 111
      %v1451 = vpop.permute.xlu0 %1450
      %1452 = vrot.lane.b32.xlu0 %v1420, 111
      %v1453 = vpop.permute.xlu0 %1452
      %1454 = vrot.lane.b32.xlu0 %v1421, 111
      %v1455 = vpop.permute.xlu0 %1454
      %1456 = vrot.lane.b32.xlu0 %v1422, 111
      %v1457 = vpop.permute.xlu0 %1456
      %1458 = vrot.lane.b32.xlu0 %v1423, 111
      %v1459 = vpop.permute.xlu0 %1458
      %v1460 = vsel %vm562, %v1437, %v1439
      %v1461 = vsel %vm562, %v1439, %v1441
      %v1462 = vsel %vm562, %v1443, %v1445
      %v1463 = vsel %vm562, %v1445, %v1447
      %v1464 = vsel %vm562, %v1449, %v1451
      %v1465 = vsel %vm562, %v1451, %v1453
      %v1466 = vsel %vm562, %v1455, %v1457
      %v1467 = vsel %vm562, %v1457, %v1459
      %1480 = vst [vmem:[#allocation3 + $0x240] sm:$0xff] %v1460
      %1481 = vst [vmem:[#allocation3 + $0x248] sm:$0xff] %v1461
      %1482 = vst.msk [vmem:[#allocation3 + $0x250] sm:$0xff] %vm897, %v1441
      %1483 = vst [vmem:[#allocation3 + $0x258] sm:$0xff] %v1462
      %1484 = vst [vmem:[#allocation3 + $0x260] sm:$0xff] %v1463
      %1485 = vst.msk [vmem:[#allocation3 + $0x268] sm:$0xff] %vm897, %v1447
      %1486 = vst [vmem:[#allocation3 + $0x270] sm:$0xff] %v1464
      %1487 = vst [vmem:[#allocation3 + $0x278] sm:$0xff] %v1465
      %1488 = vst.msk [vmem:[#allocation3 + $0x280] sm:$0xff] %vm897, %v1453
      %1489 = vst [vmem:[#allocation3 + $0x288] sm:$0xff] %v1466
      %1490 = vst [vmem:[#allocation3 + $0x290] sm:$0xff] %v1467
      %1491 = vst.msk [vmem:[#allocation3 + $0x298] sm:$0xff] %vm897, %v1459
      %v1492 = vld [vmem:[#allocation2 + $0x8] sm:$0xff]
      %v1493 = vld [vmem:[#allocation2 + $0x10] sm:$0xff]
      %v1494 = vld [vmem:[#allocation2 + $0x18] sm:$0xff]
      %v1495 = vld [vmem:[#allocation2 + $0x28] sm:$0xff]
      %v1496 = vld [vmem:[#allocation2 + $0x30] sm:$0xff]
      %v1497 = vld [vmem:[#allocation2 + $0x38] sm:$0xff]
      %v1498 = vld [vmem:[#allocation2 + $0x48] sm:$0xff]
      %v1499 = vld [vmem:[#allocation2 + $0x50] sm:$0xff]
      %v1500 = vld [vmem:[#allocation2 + $0x58] sm:$0xff]
      %v1501 = vld [vmem:[#allocation2 + $0x68] sm:$0xff]
      %v1502 = vld [vmem:[#allocation2 + $0x70] sm:$0xff]
      %v1503 = vld [vmem:[#allocation2 + $0x78] sm:$0xff]
      %1516 = vrot.lane.b32.xlu0 %v1492, 110
      %v1517 = vpop.permute.xlu0 %1516
      %1518 = vrot.lane.b32.xlu0 %v1493, 110
      %v1519 = vpop.permute.xlu0 %1518
      %1520 = vrot.lane.b32.xlu0 %v1494, 110
      %v1521 = vpop.permute.xlu0 %1520
      %1522 = vrot.lane.b32.xlu0 %v1495, 110
      %v1523 = vpop.permute.xlu0 %1522
      %1524 = vrot.lane.b32.xlu0 %v1496, 110
      %v1525 = vpop.permute.xlu0 %1524
      %1526 = vrot.lane.b32.xlu0 %v1497, 110
      %v1527 = vpop.permute.xlu0 %1526
      %1528 = vrot.lane.b32.xlu0 %v1498, 110
      %v1529 = vpop.permute.xlu0 %1528
      %1530 = vrot.lane.b32.xlu0 %v1499, 110
      %v1531 = vpop.permute.xlu0 %1530
      %1532 = vrot.lane.b32.xlu0 %v1500, 110
      %v1533 = vpop.permute.xlu0 %1532
      %1534 = vrot.lane.b32.xlu0 %v1501, 110
      %v1535 = vpop.permute.xlu0 %1534
      %1536 = vrot.lane.b32.xlu0 %v1502, 110
      %v1537 = vpop.permute.xlu0 %1536
      %1538 = vrot.lane.b32.xlu0 %v1503, 110
      %v1539 = vpop.permute.xlu0 %1538
      %v1540 = vsel %vm587, %v1517, %v1519
      %v1541 = vsel %vm587, %v1519, %v1521
      %v1542 = vsel %vm587, %v1523, %v1525
      %v1543 = vsel %vm587, %v1525, %v1527
      %v1544 = vsel %vm587, %v1529, %v1531
      %v1545 = vsel %vm587, %v1531, %v1533
      %v1546 = vsel %vm587, %v1535, %v1537
      %v1547 = vsel %vm587, %v1537, %v1539
      %1560 = vst [vmem:[#allocation3 + $0x2a0] sm:$0xff] %v1540
      %1561 = vst [vmem:[#allocation3 + $0x2a8] sm:$0xff] %v1541
      %1562 = vst.msk [vmem:[#allocation3 + $0x2b0] sm:$0xff] %vm897, %v1521
      %1563 = vst [vmem:[#allocation3 + $0x2b8] sm:$0xff] %v1542
      %1564 = vst [vmem:[#allocation3 + $0x2c0] sm:$0xff] %v1543
      %1565 = vst.msk [vmem:[#allocation3 + $0x2c8] sm:$0xff] %vm897, %v1527
      %1566 = vst [vmem:[#allocation3 + $0x2d0] sm:$0xff] %v1544
      %1567 = vst [vmem:[#allocation3 + $0x2d8] sm:$0xff] %v1545
      %1568 = vst.msk [vmem:[#allocation3 + $0x2e0] sm:$0xff] %vm897, %v1533
      %1569 = vst [vmem:[#allocation3 + $0x2e8] sm:$0xff] %v1546
      %1570 = vst [vmem:[#allocation3 + $0x2f0] sm:$0xff] %v1547
      %1571 = vst.msk [vmem:[#allocation3 + $0x2f8] sm:$0xff] %vm897, %v1539
      %v1572 = vld [vmem:[#allocation2 + $0x8] sm:$0xff]
      %v1573 = vld [vmem:[#allocation2 + $0x10] sm:$0xff]
      %v1574 = vld [vmem:[#allocation2 + $0x18] sm:$0xff]
      %v1575 = vld [vmem:[#allocation2 + $0x28] sm:$0xff]
      %v1576 = vld [vmem:[#allocation2 + $0x30] sm:$0xff]
      %v1577 = vld [vmem:[#allocation2 + $0x38] sm:$0xff]
      %v1578 = vld [vmem:[#allocation2 + $0x48] sm:$0xff]
      %v1579 = vld [vmem:[#allocation2 + $0x50] sm:$0xff]
      %v1580 = vld [vmem:[#allocation2 + $0x58] sm:$0xff]
      %v1581 = vld [vmem:[#allocation2 + $0x68] sm:$0xff]
      %v1582 = vld [vmem:[#allocation2 + $0x70] sm:$0xff]
      %v1583 = vld [vmem:[#allocation2 + $0x78] sm:$0xff]
      %1596 = vrot.lane.b32.xlu0 %v1572, 109
      %v1597 = vpop.permute.xlu0 %1596
      %1598 = vrot.lane.b32.xlu0 %v1573, 109
      %v1599 = vpop.permute.xlu0 %1598
      %1600 = vrot.lane.b32.xlu0 %v1574, 109
      %v1601 = vpop.permute.xlu0 %1600
      %1602 = vrot.lane.b32.xlu0 %v1575, 109
      %v1603 = vpop.permute.xlu0 %1602
      %1604 = vrot.lane.b32.xlu0 %v1576, 109
      %v1605 = vpop.permute.xlu0 %1604
      %1606 = vrot.lane.b32.xlu0 %v1577, 109
      %v1607 = vpop.permute.xlu0 %1606
      %1608 = vrot.lane.b32.xlu0 %v1578, 109
      %v1609 = vpop.permute.xlu0 %1608
      %1610 = vrot.lane.b32.xlu0 %v1579, 109
      %v1611 = vpop.permute.xlu0 %1610
      %1612 = vrot.lane.b32.xlu0 %v1580, 109
      %v1613 = vpop.permute.xlu0 %1612
      %1614 = vrot.lane.b32.xlu0 %v1581, 109
      %v1615 = vpop.permute.xlu0 %1614
      %1616 = vrot.lane.b32.xlu0 %v1582, 109
      %v1617 = vpop.permute.xlu0 %1616
      %1618 = vrot.lane.b32.xlu0 %v1583, 109
      %v1619 = vpop.permute.xlu0 %1618
      %v1620 = vsel %vm609, %v1597, %v1599
      %v1621 = vsel %vm609, %v1599, %v1601
      %v1622 = vsel %vm609, %v1603, %v1605
      %v1623 = vsel %vm609, %v1605, %v1607
      %v1624 = vsel %vm609, %v1609, %v1611
      %v1625 = vsel %vm609, %v1611, %v1613
      %v1626 = vsel %vm609, %v1615, %v1617
      %v1627 = vsel %vm609, %v1617, %v1619
      %1640 = vst [vmem:[#allocation3 + $0x300] sm:$0xff] %v1620
      %1641 = vst [vmem:[#allocation3 + $0x308] sm:$0xff] %v1621
      %1642 = vst.msk [vmem:[#allocation3 + $0x310] sm:$0xff] %vm897, %v1601
      %1643 = vst [vmem:[#allocation3 + $0x318] sm:$0xff] %v1622
      %1644 = vst [vmem:[#allocation3 + $0x320] sm:$0xff] %v1623
      %1645 = vst.msk [vmem:[#allocation3 + $0x328] sm:$0xff] %vm897, %v1607
      %1646 = vst [vmem:[#allocation3 + $0x330] sm:$0xff] %v1624
      %1647 = vst [vmem:[#allocation3 + $0x338] sm:$0xff] %v1625
      %1648 = vst.msk [vmem:[#allocation3 + $0x340] sm:$0xff] %vm897, %v1613
      %1649 = vst [vmem:[#allocation3 + $0x348] sm:$0xff] %v1626
      %1650 = vst [vmem:[#allocation3 + $0x350] sm:$0xff] %v1627
      %1651 = vst.msk [vmem:[#allocation3 + $0x358] sm:$0xff] %vm897, %v1619
      %v1652 = vld [vmem:[%s4] sm:$0xff]
      %v1653 = vld [vmem:[%s4 + $0x8] sm:$0xff]
      %v1654 = vld [vmem:[%s4 + $0x10] sm:$0xff]
      %v1655 = vld [vmem:[%s4 + $0x18] sm:$0xff]
      %v1656 = vld [vmem:[%s4 + $0x20] sm:$0xff]
      %v1657 = vld [vmem:[%s4 + $0x28] sm:$0xff]
      %v1658 = vld [vmem:[%s4 + $0x30] sm:$0xff]
      %v1659 = vld [vmem:[%s4 + $0x38] sm:$0xff]
      %v1660 = vld [vmem:[%s4 + $0x40] sm:$0xff]
      %v1661 = vld [vmem:[%s4 + $0x48] sm:$0xff]
      %v1662 = vld [vmem:[%s4 + $0x50] sm:$0xff]
      %v1663 = vld [vmem:[%s4 + $0x58] sm:$0xff]
      %v1664 = vld [vmem:[#allocation3] sm:$0xff]
      %v1665 = vld [vmem:[#allocation3 + $0x8] sm:$0xff]
      %v1666 = vld [vmem:[#allocation3 + $0x10] sm:$0xff]
      %v1667 = vld [vmem:[#allocation3 + $0x18] sm:$0xff]
      %v1668 = vld [vmem:[#allocation3 + $0x20] sm:$0xff]
      %v1669 = vld [vmem:[#allocation3 + $0x28] sm:$0xff]
      %v1670 = vld [vmem:[#allocation3 + $0x30] sm:$0xff]
      %v1671 = vld [vmem:[#allocation3 + $0x38] sm:$0xff]
      %v1672 = vld [vmem:[#allocation3 + $0x40] sm:$0xff]
      %v1673 = vld [vmem:[#allocation3 + $0x48] sm:$0xff]
      %v1674 = vld [vmem:[#allocation3 + $0x50] sm:$0xff]
      %v1675 = vld [vmem:[#allocation3 + $0x58] sm:$0xff]
      %v1676 = vld [vmem:[#allocation3 + $0x60] sm:$0xff]
      %v1677 = vld [vmem:[#allocation3 + $0x68] sm:$0xff]
      %v1678 = vld [vmem:[#allocation3 + $0x70] sm:$0xff]
      %v1679 = vld [vmem:[#allocation3 + $0x78] sm:$0xff]
      %v1680 = vld [vmem:[#allocation3 + $0x80] sm:$0xff]
      %v1681 = vld [vmem:[#allocation3 + $0x88] sm:$0xff]
      %v1682 = vld [vmem:[#allocation3 + $0x90] sm:$0xff]
      %v1683 = vld [vmem:[#allocation3 + $0x98] sm:$0xff]
      %v1684 = vld [vmem:[#allocation3 + $0xa0] sm:$0xff]
      %v1685 = vld [vmem:[#allocation3 + $0xa8] sm:$0xff]
      %v1686 = vld [vmem:[#allocation3 + $0xb0] sm:$0xff]
      %v1687 = vld [vmem:[#allocation3 + $0xb8] sm:$0xff]
      %v1688 = vld [vmem:[#allocation3 + $0xc0] sm:$0xff]
      %v1689 = vld [vmem:[#allocation3 + $0xc8] sm:$0xff]
      %v1690 = vld [vmem:[#allocation3 + $0xd0] sm:$0xff]
      %v1691 = vld [vmem:[#allocation3 + $0xd8] sm:$0xff]
      %v1692 = vld [vmem:[#allocation3 + $0xe0] sm:$0xff]
      %v1693 = vld [vmem:[#allocation3 + $0xe8] sm:$0xff]
      %v1694 = vld [vmem:[#allocation3 + $0xf0] sm:$0xff]
      %v1695 = vld [vmem:[#allocation3 + $0xf8] sm:$0xff]
      %v1696 = vld [vmem:[#allocation3 + $0x100] sm:$0xff]
      %v1697 = vld [vmem:[#allocation3 + $0x108] sm:$0xff]
      %v1698 = vld [vmem:[#allocation3 + $0x110] sm:$0xff]
      %v1699 = vld [vmem:[#allocation3 + $0x118] sm:$0xff]
      %v1700 = vld [vmem:[#allocation3 + $0x120] sm:$0xff]
      %v1701 = vld [vmem:[#allocation3 + $0x128] sm:$0xff]
      %v1702 = vld [vmem:[#allocation3 + $0x130] sm:$0xff]
      %v1703 = vld [vmem:[#allocation3 + $0x138] sm:$0xff]
      %v1704 = vld [vmem:[#allocation3 + $0x140] sm:$0xff]
      %v1705 = vld [vmem:[#allocation3 + $0x148] sm:$0xff]
      %v1706 = vld [vmem:[#allocation3 + $0x150] sm:$0xff]
      %v1707 = vld [vmem:[#allocation3 + $0x158] sm:$0xff]
      %v1708 = vld [vmem:[#allocation3 + $0x160] sm:$0xff]
      %v1709 = vld [vmem:[#allocation3 + $0x168] sm:$0xff]
      %v1710 = vld [vmem:[#allocation3 + $0x170] sm:$0xff]
      %v1711 = vld [vmem:[#allocation3 + $0x178] sm:$0xff]
      %v1712 = vld [vmem:[#allocation3 + $0x180] sm:$0xff]
      %v1713 = vld [vmem:[#allocation3 + $0x188] sm:$0xff]
      %v1714 = vld [vmem:[#allocation3 + $0x190] sm:$0xff]
      %v1715 = vld [vmem:[#allocation3 + $0x198] sm:$0xff]
      %v1716 = vld [vmem:[#allocation3 + $0x1a0] sm:$0xff]
      %v1717 = vld [vmem:[#allocation3 + $0x1a8] sm:$0xff]
      %v1718 = vld [vmem:[#allocation3 + $0x1b0] sm:$0xff]
      %v1719 = vld [vmem:[#allocation3 + $0x1b8] sm:$0xff]
      %v1720 = vld [vmem:[#allocation3 + $0x1c0] sm:$0xff]
      %v1721 = vld [vmem:[#allocation3 + $0x1c8] sm:$0xff]
      %v1722 = vld [vmem:[#allocation3 + $0x1d0] sm:$0xff]
      %v1723 = vld [vmem:[#allocation3 + $0x1d8] sm:$0xff]
      %v1724 = vld [vmem:[#allocation3 + $0x1e0] sm:$0xff]
      %v1725 = vld [vmem:[#allocation3 + $0x1e8] sm:$0xff]
      %v1726 = vld [vmem:[#allocation3 + $0x1f0] sm:$0xff]
      %v1727 = vld [vmem:[#allocation3 + $0x1f8] sm:$0xff]
      %v1728 = vld [vmem:[#allocation3 + $0x200] sm:$0xff]
      %v1729 = vld [vmem:[#allocation3 + $0x208] sm:$0xff]
      %v1730 = vld [vmem:[#allocation3 + $0x210] sm:$0xff]
      %v1731 = vld [vmem:[#allocation3 + $0x218] sm:$0xff]
      %v1732 = vld [vmem:[#allocation3 + $0x220] sm:$0xff]
      %v1733 = vld [vmem:[#allocation3 + $0x228] sm:$0xff]
      %v1734 = vld [vmem:[#allocation3 + $0x230] sm:$0xff]
      %v1735 = vld [vmem:[#allocation3 + $0x238] sm:$0xff]
      %v1736 = vld [vmem:[#allocation3 + $0x240] sm:$0xff]
      %v1737 = vld [vmem:[#allocation3 + $0x248] sm:$0xff]
      %v1738 = vld [vmem:[#allocation3 + $0x250] sm:$0xff]
      %v1739 = vld [vmem:[#allocation3 + $0x258] sm:$0xff]
      %v1740 = vld [vmem:[#allocation3 + $0x260] sm:$0xff]
      %v1741 = vld [vmem:[#allocation3 + $0x268] sm:$0xff]
      %v1742 = vld [vmem:[#allocation3 + $0x270] sm:$0xff]
      %v1743 = vld [vmem:[#allocation3 + $0x278] sm:$0xff]
      %v1744 = vld [vmem:[#allocation3 + $0x280] sm:$0xff]
      %v1745 = vld [vmem:[#allocation3 + $0x288] sm:$0xff]
      %v1746 = vld [vmem:[#allocation3 + $0x290] sm:$0xff]
      %v1747 = vld [vmem:[#allocation3 + $0x298] sm:$0xff]
      %v1748 = vld [vmem:[#allocation3 + $0x2a0] sm:$0xff]
      %v1749 = vld [vmem:[#allocation3 + $0x2a8] sm:$0xff]
      %v1750 = vld [vmem:[#allocation3 + $0x2b0] sm:$0xff]
      %v1751 = vld [vmem:[#allocation3 + $0x2b8] sm:$0xff]
      %v1752 = vld [vmem:[#allocation3 + $0x2c0] sm:$0xff]
      %v1753 = vld [vmem:[#allocation3 + $0x2c8] sm:$0xff]
      %v1754 = vld [vmem:[#allocation3 + $0x2d0] sm:$0xff]
      %v1755 = vld [vmem:[#allocation3 + $0x2d8] sm:$0xff]
      %v1756 = vld [vmem:[#allocation3 + $0x2e0] sm:$0xff]
      %v1757 = vld [vmem:[#allocation3 + $0x2e8] sm:$0xff]
      %v1758 = vld [vmem:[#allocation3 + $0x2f0] sm:$0xff]
      %v1759 = vld [vmem:[#allocation3 + $0x2f8] sm:$0xff]
      %v1760 = vld [vmem:[#allocation3 + $0x300] sm:$0xff]
      %v1761 = vld [vmem:[#allocation3 + $0x308] sm:$0xff]
      %v1762 = vld [vmem:[#allocation3 + $0x310] sm:$0xff]
      %v1763 = vld [vmem:[#allocation3 + $0x318] sm:$0xff]
      %v1764 = vld [vmem:[#allocation3 + $0x320] sm:$0xff]
      %v1765 = vld [vmem:[#allocation3 + $0x328] sm:$0xff]
      %v1766 = vld [vmem:[#allocation3 + $0x330] sm:$0xff]
      %v1767 = vld [vmem:[#allocation3 + $0x338] sm:$0xff]
      %v1768 = vld [vmem:[#allocation3 + $0x340] sm:$0xff]
      %v1769 = vld [vmem:[#allocation3 + $0x348] sm:$0xff]
      %v1770 = vld [vmem:[#allocation3 + $0x350] sm:$0xff]
      %v1771 = vld [vmem:[#allocation3 + $0x358] sm:$0xff]
      %v1772 = vld [vmem:[%s5] sm:$0xff]
      %v1773 = vld [vmem:[%s5 + $0x8] sm:$0xff]
      %v1774 = vld [vmem:[%s5 + $0x10] sm:$0xff]
      %v1775 = vld [vmem:[%s5 + $0x18] sm:$0xff]
      %1777 = vset.pattern.permute.xlu0 0
      %1778 = vperm.xlu0 %1777, %v1772
      %v1779 = vpop.permute.xlu0 %1778
      %1782 = vset.pattern.permute.xlu0 0
      %1783 = vperm.xlu0 %1782, %v1773
      %v1784 = vpop.permute.xlu0 %1783
      %1787 = vset.pattern.permute.xlu0 0
      %1788 = vperm.xlu0 %1787, %v1774
      %v1789 = vpop.permute.xlu0 %1788
      %1792 = vset.pattern.permute.xlu0 0
      %1793 = vperm.xlu0 %1792, %v1775
      %v1794 = vpop.permute.xlu0 %1793
      %vm1796 = vcmask 261120
      %v1798 = vsel %vm1796, %v1654, 0
      %v1801 = vsel %vm1796, %v1657, 0
      %v1804 = vsel %vm1796, %v1660, 0
      %v1807 = vsel %vm1796, %v1663, 0
      %1809 = vmatprep.subr.mxu0 %v1665
      %1810 = vmatpush1.msra.mxu0 %v1664
      %1811 = vmatprep.subr.mxu0 %v1668
      %1812 = vmatpush1.msra.mxu0 %v1667
      %1813 = vmatprep.subr.mxu0 %v1671
      %1814 = vmatpush1.msra.mxu0 %v1670
      %1815 = vmatprep.subr.mxu0 %v1674
      %1816 = vmatpush1.msra.mxu0 %v1673
      %1817 = vmatprep.subr.mxu0 %v1677
      %1818 = vmatpush1.msra.mxu0 %v1676
      %1819 = vmatprep.subr.mxu0 %v1680
      %1820 = vmatpush1.msra.mxu0 %v1679
      %1821 = vmatprep.subr.mxu0 %v1683
      %1822 = vmatpush1.msra.mxu0 %v1682
      %1823 = vmatprep.subr.mxu0 %v1686
      %1824 = vmatpush1.msra.mxu0 %v1685
      %1825 = vmatprep.subr.mxu0 %v1689
      %1826 = vmatpush1.msra.mxu0 %v1688
      %1827 = vmatprep.subr.mxu0 %v1692
      %1828 = vmatpush1.msra.mxu0 %v1691
      %1829 = vmatprep.subr.mxu0 %v1695
      %1830 = vmatpush1.msra.mxu0 %v1694
      %1831 = vmatprep.subr.mxu0 %v1698
      %1832 = vmatpush1.msra.mxu0 %v1697
      %1833 = vmatprep.subr.mxu0 %v1701
      %1834 = vmatpush1.msra.mxu0 %v1700
      %1835 = vmatprep.subr.mxu0 %v1704
      %1836 = vmatpush1.msra.mxu0 %v1703
      %1837 = vmatprep.subr.mxu0 %v1707
      %1838 = vmatpush1.msra.mxu0 %v1706
      %1839 = vmatprep.subr.mxu0 %v1710
      %1840 = vmatpush1.msra.mxu0 %v1709
      %1841 = vmatprep.subr.mxu0 %v1713
      %1842 = vmatpush1.msra.mxu0 %v1712
      %1843 = vmatprep.subr.mxu0 %v1716
      %1844 = vmatpush1.msra.mxu0 %v1715
      %1845 = vmatprep.subr.mxu0 %v1719
      %1846 = vmatpush1.msra.mxu0 %v1718
      %1847 = vmatprep.subr.mxu0 %v1722
      %1848 = vmatpush1.msra.mxu0 %v1721
      %1849 = vmatprep.subr.mxu0 %v1725
      %1850 = vmatpush1.msra.mxu0 %v1724
      %1851 = vmatprep.subr.mxu0 %v1728
      %1852 = vmatpush1.msra.mxu0 %v1727
      %1853 = vmatprep.subr.mxu0 %v1731
      %1854 = vmatpush1.msra.mxu0 %v1730
      %1855 = vmatprep.subr.mxu0 %v1734
      %1856 = vmatpush1.msra.mxu0 %v1733
      %1857 = vmatprep.subr.mxu0 %v1737
      %1858 = vmatpush1.msra.mxu0 %v1736
      %1859 = vmatprep.subr.mxu0 %v1740
      %1860 = vmatpush1.msra.mxu0 %v1739
      %1861 = vmatprep.subr.mxu0 %v1743
      %1862 = vmatpush1.msra.mxu0 %v1742
      %1863 = vmatprep.subr.mxu0 %v1746
      %1864 = vmatpush1.msra.mxu0 %v1745
      %1865 = vmatprep.subr.mxu0 %v1749
      %1866 = vmatpush1.msra.mxu0 %v1748
      %1867 = vmatprep.subr.mxu0 %v1752
      %1868 = vmatpush1.msra.mxu0 %v1751
      %1869 = vmatprep.subr.mxu0 %v1755
      %1870 = vmatpush1.msra.mxu0 %v1754
      %1871 = vmatprep.subr.mxu0 %v1758
      %1872 = vmatpush1.msra.mxu0 %v1757
      %1873 = vmatprep.mubr.f32.mxu0 %v1653
      %1874 = vmatmul.mubr.f32.gmra.mrb[0].mxu0 %v1652
      %v1875 = vpop.f32.mrb[0].mxu0
      %v1876 = vadd.f32 %v1779, %v1875
      %v1877 = vpop.f32.mrb[0].mxu0
      %v1878 = vadd.f32 %v1779, %v1877
      %1879 = vmatprep.mubr.f32.mxu0 %v1656
      %1880 = vmatmul.mubr.f32.gmra.mrb[0].mxu0 %v1655
      %v1881 = vpop.f32.mrb[0].mxu0
      %v1882 = vadd.f32 %v1784, %v1881
      %v1883 = vpop.f32.mrb[0].mxu0
      %v1884 = vadd.f32 %v1784, %v1883
      %1885 = vmatprep.mubr.f32.mxu0 %v1659
      %1886 = vmatmul.mubr.f32.gmra.mrb[0].mxu0 %v1658
      %v1887 = vpop.f32.mrb[0].mxu0
      %v1888 = vadd.f32 %v1789, %v1887
      %v1889 = vpop.f32.mrb[0].mxu0
      %v1890 = vadd.f32 %v1789, %v1889
      %1891 = vmatprep.mubr.f32.mxu0 %v1662
      %1892 = vmatmul.mubr.f32.gmra.mrb[0].mxu0 %v1661
      %v1893 = vpop.f32.mrb[0].mxu0
      %v1894 = vadd.f32 %v1794, %v1893
      %v1895 = vpop.f32.mrb[0].mxu0
      %v1896 = vadd.f32 %v1794, %v1895
      %1897 = vdwg.mxu0
      %1898 = vmatprep.subr.mxu0 %v1761
      %1899 = vmatpush1.msra.mxu0 %v1760
      %1900 = vmatprep.subr.mxu0 %v1764
      %1901 = vmatpush1.msra.mxu0 %v1763
      %1902 = vmatprep.subr.mxu0 %v1767
      %1903 = vmatpush1.msra.mxu0 %v1766
      %1904 = vmatprep.subr.mxu0 %v1770
      %1905 = vmatpush1.msra.mxu0 %v1769
      %1906 = vmatprep.subr.mxu0 0.0
      %1907 = vmatpush1.msra.mxu0 0.0
      %1908 = vmatprep.subr.mxu0 0.0
      %1909 = vmatpush1.msra.mxu0 0.0
      %1910 = vmatprep.subr.mxu0 0.0
      %1911 = vmatpush1.msra.mxu0 0.0
      %1912 = vmatprep.subr.mxu0 0.0
      %1913 = vmatpush1.msra.mxu0 0.0
      %1914 = vmatprep.subr.mxu0 0.0
      %1915 = vmatpush1.msra.mxu0 0.0
      %1916 = vmatprep.subr.mxu0 0.0
      %1917 = vmatpush1.msra.mxu0 0.0
      %1918 = vmatprep.subr.mxu0 0.0
      %1919 = vmatpush1.msra.mxu0 0.0
      %1920 = vmatprep.subr.mxu0 0.0
      %1921 = vmatpush1.msra.mxu0 0.0
      %1922 = vmatprep.subr.mxu0 0.0
      %1923 = vmatpush1.msra.mxu0 0.0
      %1924 = vmatprep.subr.mxu0 0.0
      %1925 = vmatpush1.msra.mxu0 0.0
      %1926 = vmatprep.subr.mxu0 0.0
      %1927 = vmatpush1.msra.mxu0 0.0
      %1928 = vmatprep.subr.mxu0 0.0
      %1929 = vmatpush1.msra.mxu0 0.0
      %1930 = vmatprep.subr.mxu0 0.0
      %1931 = vmatpush1.msra.mxu0 0.0
      %1932 = vmatprep.subr.mxu0 0.0
      %1933 = vmatpush1.msra.mxu0 0.0
      %1934 = vmatprep.subr.mxu0 0.0
      %1935 = vmatpush1.msra.mxu0 0.0
      %1936 = vmatprep.subr.mxu0 0.0
      %1937 = vmatpush1.msra.mxu0 0.0
      %1938 = vmatprep.subr.mxu0 0.0
      %1939 = vmatpush1.msra.mxu0 0.0
      %1940 = vmatprep.subr.mxu0 0.0
      %1941 = vmatpush1.msra.mxu0 0.0
      %1942 = vmatprep.subr.mxu0 0.0
      %1943 = vmatpush1.msra.mxu0 0.0
      %1944 = vmatprep.subr.mxu0 0.0
      %1945 = vmatpush1.msra.mxu0 0.0
      %1946 = vmatprep.subr.mxu0 0.0
      %1947 = vmatpush1.msra.mxu0 0.0
      %1948 = vmatprep.subr.mxu0 0.0
      %1949 = vmatpush1.msra.mxu0 0.0
      %1950 = vmatprep.subr.mxu0 0.0
      %1951 = vmatpush1.msra.mxu0 0.0
      %1952 = vmatprep.subr.mxu0 0.0
      %1953 = vmatpush1.msra.mxu0 0.0
      %1954 = vmatprep.subr.mxu0 0.0
      %1955 = vmatpush1.msra.mxu0 0.0
      %1956 = vmatprep.subr.mxu0 0.0
      %1957 = vmatpush1.msra.mxu0 0.0
      %1958 = vmatprep.subr.mxu0 0.0
      %1959 = vmatpush1.msra.mxu0 0.0
      %1960 = vmatprep.subr.mxu0 0.0
      %1961 = vmatpush1.msra.mxu0 0.0
      %1962 = vmatprep.mubr.f32.mxu0 0.0
      %1963 = vmatmul.mubr.f32.gmra.mrb[0].mxu0 %v1798
      %v1964 = vpop.f32.mrb[0].mxu0
      %v1965 = vadd.f32 %v1876, %v1964
      %v1966 = vpop.f32.mrb[0].mxu0
      %v1967 = vadd.f32 %v1878, %v1966
      %1968 = vmatprep.mubr.f32.mxu0 0.0
      %1969 = vmatmul.mubr.f32.gmra.mrb[0].mxu0 %v1801
      %v1970 = vpop.f32.mrb[0].mxu0
      %v1971 = vadd.f32 %v1882, %v1970
      %v1972 = vpop.f32.mrb[0].mxu0
      %v1973 = vadd.f32 %v1884, %v1972
      %1974 = vmatprep.mubr.f32.mxu0 0.0
      %1975 = vmatmul.mubr.f32.gmra.mrb[0].mxu0 %v1804
      %v1976 = vpop.f32.mrb[0].mxu0
      %v1977 = vadd.f32 %v1888, %v1976
      %v1978 = vpop.f32.mrb[0].mxu0
      %v1979 = vadd.f32 %v1890, %v1978
      %1980 = vmatprep.mubr.f32.mxu0 0.0
      %1981 = vmatmul.mubr.f32.gmra.mrb[0].mxu0 %v1807
      %v1982 = vpop.f32.mrb[0].mxu0
      %v1983 = vadd.f32 %v1894, %v1982
      %v1984 = vpop.f32.mrb[0].mxu0
      %v1985 = vadd.f32 %v1896, %v1984
      %1986 = vdwg.mxu0
      %1987 = vmatprep.subr.mxu0 0.0
      %1988 = vmatpush1.msra.mxu0 %v1666
      %1989 = vmatprep.subr.mxu0 0.0
      %1990 = vmatpush1.msra.mxu0 %v1669
      %1991 = vmatprep.subr.mxu0 0.0
      %1992 = vmatpush1.msra.mxu0 %v1672
      %1993 = vmatprep.subr.mxu0 0.0
      %1994 = vmatpush1.msra.mxu0 %v1675
      %1995 = vmatprep.subr.mxu0 0.0
      %1996 = vmatpush1.msra.mxu0 %v1678
      %1997 = vmatprep.subr.mxu0 0.0
      %1998 = vmatpush1.msra.mxu0 %v1681
      %1999 = vmatprep.subr.mxu0 0.0
      %2000 = vmatpush1.msra.mxu0 %v1684
      %2001 = vmatprep.subr.mxu0 0.0
      %2002 = vmatpush1.msra.mxu0 %v1687
      %2003 = vmatprep.subr.mxu0 0.0
      %2004 = vmatpush1.msra.mxu0 %v1690
      %2005 = vmatprep.subr.mxu0 0.0
      %2006 = vmatpush1.msra.mxu0 %v1693
      %2007 = vmatprep.subr.mxu0 0.0
      %2008 = vmatpush1.msra.mxu0 %v1696
      %2009 = vmatprep.subr.mxu0 0.0
      %2010 = vmatpush1.msra.mxu0 %v1699
      %2011 = vmatprep.subr.mxu0 0.0
      %2012 = vmatpush1.msra.mxu0 %v1702
      %2013 = vmatprep.subr.mxu0 0.0
      %2014 = vmatpush1.msra.mxu0 %v1705
      %2015 = vmatprep.subr.mxu0 0.0
      %2016 = vmatpush1.msra.mxu0 %v1708
      %2017 = vmatprep.subr.mxu0 0.0
      %2018 = vmatpush1.msra.mxu0 %v1711
      %2019 = vmatprep.subr.mxu0 0.0
      %2020 = vmatpush1.msra.mxu0 %v1714
      %2021 = vmatprep.subr.mxu0 0.0
      %2022 = vmatpush1.msra.mxu0 %v1717
      %2023 = vmatprep.subr.mxu0 0.0
      %2024 = vmatpush1.msra.mxu0 %v1720
      %2025 = vmatprep.subr.mxu0 0.0
      %2026 = vmatpush1.msra.mxu0 %v1723
      %2027 = vmatprep.subr.mxu0 0.0
      %2028 = vmatpush1.msra.mxu0 %v1726
      %2029 = vmatprep.subr.mxu0 0.0
      %2030 = vmatpush1.msra.mxu0 %v1729
      %2031 = vmatprep.subr.mxu0 0.0
      %2032 = vmatpush1.msra.mxu0 %v1732
      %2033 = vmatprep.subr.mxu0 0.0
      %2034 = vmatpush1.msra.mxu0 %v1735
      %2035 = vmatprep.subr.mxu0 0.0
      %2036 = vmatpush1.msra.mxu0 %v1738
      %2037 = vmatprep.subr.mxu0 0.0
      %2038 = vmatpush1.msra.mxu0 %v1741
      %2039 = vmatprep.subr.mxu0 0.0
      %2040 = vmatpush1.msra.mxu0 %v1744
      %2041 = vmatprep.subr.mxu0 0.0
      %2042 = vmatpush1.msra.mxu0 %v1747
      %2043 = vmatprep.subr.mxu0 0.0
      %2044 = vmatpush1.msra.mxu0 %v1750
      %2045 = vmatprep.subr.mxu0 0.0
      %2046 = vmatpush1.msra.mxu0 %v1753
      %2047 = vmatprep.subr.mxu0 0.0
      %2048 = vmatpush1.msra.mxu0 %v1756
      %2049 = vmatprep.subr.mxu0 0.0
      %2050 = vmatpush1.msra.mxu0 %v1759
      %2051 = vmatprep.mubr.f32.mxu0 %v1653
      %2052 = vmatmul.mubr.f32.gmra.mrb[0].mxu0 %v1652
      %v2053 = vpop.f32.mrb[0].mxu0
      %v2054 = vadd.f32 %v1779, %v2053
      %v2055 = vpop.f32.mrb[0].mxu0
      %2056 = vmatprep.mubr.f32.mxu0 %v1656
      %2057 = vmatmul.mubr.f32.gmra.mrb[0].mxu0 %v1655
      %v2058 = vpop.f32.mrb[0].mxu0
      %v2059 = vadd.f32 %v1784, %v2058
      %v2060 = vpop.f32.mrb[0].mxu0
      %2061 = vmatprep.mubr.f32.mxu0 %v1659
      %2062 = vmatmul.mubr.f32.gmra.mrb[0].mxu0 %v1658
      %v2063 = vpop.f32.mrb[0].mxu0
      %v2064 = vadd.f32 %v1789, %v2063
      %v2065 = vpop.f32.mrb[0].mxu0
      %2066 = vmatprep.mubr.f32.mxu0 %v1662
      %2067 = vmatmul.mubr.f32.gmra.mrb[0].mxu0 %v1661
      %v2068 = vpop.f32.mrb[0].mxu0
      %v2069 = vadd.f32 %v1794, %v2068
      %v2070 = vpop.f32.mrb[0].mxu0
      %2071 = vdwg.mxu0
      %2072 = vmatprep.subr.mxu0 0.0
      %2073 = vmatpush1.msra.mxu0 %v1762
      %2074 = vmatprep.subr.mxu0 0.0
      %2075 = vmatpush1.msra.mxu0 %v1765
      %2076 = vmatprep.subr.mxu0 0.0
      %2077 = vmatpush1.msra.mxu0 %v1768
      %2078 = vmatprep.subr.mxu0 0.0
      %2079 = vmatpush1.msra.mxu0 %v1771
      %2080 = vmatprep.subr.mxu0 0.0
      %2081 = vmatpush1.msra.mxu0 0.0
      %2082 = vmatprep.subr.mxu0 0.0
      %2083 = vmatpush1.msra.mxu0 0.0
      %2084 = vmatprep.subr.mxu0 0.0
      %2085 = vmatpush1.msra.mxu0 0.0
      %2086 = vmatprep.subr.mxu0 0.0
      %2087 = vmatpush1.msra.mxu0 0.0
      %2088 = vmatprep.subr.mxu0 0.0
      %2089 = vmatpush1.msra.mxu0 0.0
      %2090 = vmatprep.subr.mxu0 0.0
      %2091 = vmatpush1.msra.mxu0 0.0
      %2092 = vmatprep.subr.mxu0 0.0
      %2093 = vmatpush1.msra.mxu0 0.0
      %2094 = vmatprep.subr.mxu0 0.0
      %2095 = vmatpush1.msra.mxu0 0.0
      %2096 = vmatprep.subr.mxu0 0.0
      %2097 = vmatpush1.msra.mxu0 0.0
      %2098 = vmatprep.subr.mxu0 0.0
      %2099 = vmatpush1.msra.mxu0 0.0
      %2100 = vmatprep.subr.mxu0 0.0
      %2101 = vmatpush1.msra.mxu0 0.0
      %2102 = vmatprep.subr.mxu0 0.0
      %2103 = vmatpush1.msra.mxu0 0.0
      %2104 = vmatprep.subr.mxu0 0.0
      %2105 = vmatpush1.msra.mxu0 0.0
      %2106 = vmatprep.subr.mxu0 0.0
      %2107 = vmatpush1.msra.mxu0 0.0
      %2108 = vmatprep.subr.mxu0 0.0
      %2109 = vmatpush1.msra.mxu0 0.0
      %2110 = vmatprep.subr.mxu0 0.0
      %2111 = vmatpush1.msra.mxu0 0.0
      %2112 = vmatprep.subr.mxu0 0.0
      %2113 = vmatpush1.msra.mxu0 0.0
      %2114 = vmatprep.subr.mxu0 0.0
      %2115 = vmatpush1.msra.mxu0 0.0
      %2116 = vmatprep.subr.mxu0 0.0
      %2117 = vmatpush1.msra.mxu0 0.0
      %2118 = vmatprep.subr.mxu0 0.0
      %2119 = vmatpush1.msra.mxu0 0.0
      %2120 = vmatprep.subr.mxu0 0.0
      %2121 = vmatpush1.msra.mxu0 0.0
      %2122 = vmatprep.subr.mxu0 0.0
      %2123 = vmatpush1.msra.mxu0 0.0
      %2124 = vmatprep.subr.mxu0 0.0
      %2125 = vmatpush1.msra.mxu0 0.0
      %2126 = vmatprep.subr.mxu0 0.0
      %2127 = vmatpush1.msra.mxu0 0.0
      %2128 = vmatprep.subr.mxu0 0.0
      %2129 = vmatpush1.msra.mxu0 0.0
      %2130 = vmatprep.subr.mxu0 0.0
      %2131 = vmatpush1.msra.mxu0 0.0
      %2132 = vmatprep.subr.mxu0 0.0
      %2133 = vmatpush1.msra.mxu0 0.0
      %2134 = vmatprep.subr.mxu0 0.0
      %2135 = vmatpush1.msra.mxu0 0.0
      %2136 = vmatprep.mubr.f32.mxu0 0.0
      %2137 = vmatmul.mubr.f32.gmra.mrb[0].mxu0 %v1798
      %v2138 = vpop.f32.mrb[0].mxu0
      %v2139 = vadd.f32 %v2054, %v2138
      %v2140 = vpop.f32.mrb[0].mxu0
      %2141 = vmatprep.mubr.f32.mxu0 0.0
      %2142 = vmatmul.mubr.f32.gmra.mrb[0].mxu0 %v1801
      %v2143 = vpop.f32.mrb[0].mxu0
      %v2144 = vadd.f32 %v2059, %v2143
      %v2145 = vpop.f32.mrb[0].mxu0
      %2146 = vmatprep.mubr.f32.mxu0 0.0
      %2147 = vmatmul.mubr.f32.gmra.mrb[0].mxu0 %v1804
      %v2148 = vpop.f32.mrb[0].mxu0
      %v2149 = vadd.f32 %v2064, %v2148
      %v2150 = vpop.f32.mrb[0].mxu0
      %2151 = vmatprep.mubr.f32.mxu0 0.0
      %2152 = vmatmul.mubr.f32.gmra.mrb[0].mxu0 %v1807
      %v2153 = vpop.f32.mrb[0].mxu0
      %v2154 = vadd.f32 %v2069, %v2153
      %v2155 = vpop.f32.mrb[0].mxu0
      %2156 = vdwg.mxu0
      %v2157 = vmax.f32 %v1965, 0.0
      %v2158 = vmax.f32 %v1967, 0.0
      %v2159 = vmax.f32 %v2139, 0.0
      %v2160 = vmax.f32 %v1971, 0.0
      %v2161 = vmax.f32 %v1973, 0.0
      %v2162 = vmax.f32 %v2144, 0.0
      %v2163 = vmax.f32 %v1977, 0.0
      %v2164 = vmax.f32 %v1979, 0.0
      %v2165 = vmax.f32 %v2149, 0.0
      %v2166 = vmax.f32 %v1983, 0.0
      %v2167 = vmax.f32 %v1985, 0.0
      %v2168 = vmax.f32 %v2154, 0.0
      %v2169 = vmul.f32 %v2157, %v871
      %v2170 = vmul.f32 %v2158, %v875
      %v2171 = vmul.f32 %v2159, %v879
      %v2172 = vmul.f32 %v2160, %v871
      %v2173 = vmul.f32 %v2161, %v875
      %v2174 = vmul.f32 %v2162, %v879
      %v2175 = vmul.f32 %v2163, %v871
      %v2176 = vmul.f32 %v2164, %v875
      %v2177 = vmul.f32 %v2165, %v879
      %v2178 = vmul.f32 %v2166, %v871
      %v2179 = vmul.f32 %v2167, %v875
      %v2180 = vmul.f32 %v2168, %v879
      %2181 = vst [vmem:[#allocation2 + $0x8] sm:$0xff] %v2169
      %2182 = vst [vmem:[#allocation2 + $0x10] sm:$0xff] %v2170
      %2183 = vst.msk [vmem:[#allocation2 + $0x18] sm:$0xff] %vm897, %v2171
      %2184 = vst [vmem:[#allocation2 + $0x28] sm:$0xff] %v2172
      %2185 = vst [vmem:[#allocation2 + $0x30] sm:$0xff] %v2173
      %2186 = vst.msk [vmem:[#allocation2 + $0x38] sm:$0xff] %vm897, %v2174
      %2187 = vst [vmem:[#allocation2 + $0x48] sm:$0xff] %v2175
      %2188 = vst [vmem:[#allocation2 + $0x50] sm:$0xff] %v2176
      %2189 = vst.msk [vmem:[#allocation2 + $0x58] sm:$0xff] %vm897, %v2177
      %2190 = vst [vmem:[#allocation2 + $0x68] sm:$0xff] %v2178
      %2191 = vst [vmem:[#allocation2 + $0x70] sm:$0xff] %v2179
      %2192 = vst.msk [vmem:[#allocation2 + $0x78] sm:$0xff] %vm897, %v2180
      %v2193 = vld [vmem:[#allocation2] sm:$0xff]
      %v2194 = vld [vmem:[#allocation2 + $0x8] sm:$0xff]
      %v2195 = vld [vmem:[#allocation2 + $0x10] sm:$0xff]
      %v2196 = vld [vmem:[#allocation2 + $0x18] sm:$0xff]
      %v2197 = vld [vmem:[#allocation2 + $0x20] sm:$0xff]
      %v2198 = vld [vmem:[#allocation2 + $0x28] sm:$0xff]
      %v2199 = vld [vmem:[#allocation2 + $0x30] sm:$0xff]
      %v2200 = vld [vmem:[#allocation2 + $0x38] sm:$0xff]
      %v2201 = vld [vmem:[#allocation2 + $0x40] sm:$0xff]
      %v2202 = vld [vmem:[#allocation2 + $0x48] sm:$0xff]
      %v2203 = vld [vmem:[#allocation2 + $0x50] sm:$0xff]
      %v2204 = vld [vmem:[#allocation2 + $0x58] sm:$0xff]
      %v2205 = vld [vmem:[#allocation2 + $0x60] sm:$0xff]
      %v2206 = vld [vmem:[#allocation2 + $0x68] sm:$0xff]
      %v2207 = vld [vmem:[#allocation2 + $0x70] sm:$0xff]
      %v2208 = vld [vmem:[#allocation2 + $0x78] sm:$0xff]
      %2225 = vrot.lane.b32.xlu0 %v2193, 19
      %v2226 = vpop.permute.xlu0 %2225
      %2227 = vrot.lane.b32.xlu0 %v2194, 19
      %v2228 = vpop.permute.xlu0 %2227
      %2229 = vrot.lane.b32.xlu0 %v2195, 19
      %v2230 = vpop.permute.xlu0 %2229
      %2231 = vrot.lane.b32.xlu0 %v2196, 19
      %v2232 = vpop.permute.xlu0 %2231
      %2233 = vrot.lane.b32.xlu0 %v2197, 19
      %v2234 = vpop.permute.xlu0 %2233
      %2235 = vrot.lane.b32.xlu0 %v2198, 19
      %v2236 = vpop.permute.xlu0 %2235
      %2237 = vrot.lane.b32.xlu0 %v2199, 19
      %v2238 = vpop.permute.xlu0 %2237
      %2239 = vrot.lane.b32.xlu0 %v2200, 19
      %v2240 = vpop.permute.xlu0 %2239
      %2241 = vrot.lane.b32.xlu0 %v2201, 19
      %v2242 = vpop.permute.xlu0 %2241
      %2243 = vrot.lane.b32.xlu0 %v2202, 19
      %v2244 = vpop.permute.xlu0 %2243
      %2245 = vrot.lane.b32.xlu0 %v2203, 19
      %v2246 = vpop.permute.xlu0 %2245
      %2247 = vrot.lane.b32.xlu0 %v2204, 19
      %v2248 = vpop.permute.xlu0 %2247
      %2249 = vrot.lane.b32.xlu0 %v2205, 19
      %v2250 = vpop.permute.xlu0 %2249
      %2251 = vrot.lane.b32.xlu0 %v2206, 19
      %v2252 = vpop.permute.xlu0 %2251
      %2253 = vrot.lane.b32.xlu0 %v2207, 19
      %v2254 = vpop.permute.xlu0 %2253
      %2255 = vrot.lane.b32.xlu0 %v2208, 19
      %v2256 = vpop.permute.xlu0 %2255
      %v2257 = vsel %vm395, %v2226, %v2228
      %v2258 = vsel %vm395, %v2228, %v2230
      %v2259 = vsel %vm395, %v2230, %v2232
      %v2260 = vsel %vm395, %v2234, %v2236
      %v2261 = vsel %vm395, %v2236, %v2238
      %v2262 = vsel %vm395, %v2238, %v2240
      %v2263 = vsel %vm395, %v2242, %v2244
      %v2264 = vsel %vm395, %v2244, %v2246
      %v2265 = vsel %vm395, %v2246, %v2248
      %v2266 = vsel %vm395, %v2250, %v2252
      %v2267 = vsel %vm395, %v2252, %v2254
      %v2268 = vsel %vm395, %v2254, %v2256
      %2281 = vst [vmem:[#allocation3] sm:$0xff] %v2257
      %2282 = vst [vmem:[#allocation3 + $0x8] sm:$0xff] %v2258
      %2283 = vst.msk [vmem:[#allocation3 + $0x10] sm:$0xff] %vm897, %v2259
      %2284 = vst [vmem:[#allocation3 + $0x18] sm:$0xff] %v2260
      %2285 = vst [vmem:[#allocation3 + $0x20] sm:$0xff] %v2261
      %2286 = vst.msk [vmem:[#allocation3 + $0x28] sm:$0xff] %vm897, %v2262
      %2287 = vst [vmem:[#allocation3 + $0x30] sm:$0xff] %v2263
      %2288 = vst [vmem:[#allocation3 + $0x38] sm:$0xff] %v2264
      %2289 = vst.msk [vmem:[#allocation3 + $0x40] sm:$0xff] %vm897, %v2265
      %2290 = vst [vmem:[#allocation3 + $0x48] sm:$0xff] %v2266
      %2291 = vst [vmem:[#allocation3 + $0x50] sm:$0xff] %v2267
      %2292 = vst.msk [vmem:[#allocation3 + $0x58] sm:$0xff] %vm897, %v2268
      %v2293 = vld [vmem:[#allocation2] sm:$0xff]
      %v2294 = vld [vmem:[#allocation2 + $0x8] sm:$0xff]
      %v2295 = vld [vmem:[#allocation2 + $0x10] sm:$0xff]
      %v2296 = vld [vmem:[#allocation2 + $0x18] sm:$0xff]
      %v2297 = vld [vmem:[#allocation2 + $0x20] sm:$0xff]
      %v2298 = vld [vmem:[#allocation2 + $0x28] sm:$0xff]
      %v2299 = vld [vmem:[#allocation2 + $0x30] sm:$0xff]
      %v2300 = vld [vmem:[#allocation2 + $0x38] sm:$0xff]
      %v2301 = vld [vmem:[#allocation2 + $0x40] sm:$0xff]
      %v2302 = vld [vmem:[#allocation2 + $0x48] sm:$0xff]
      %v2303 = vld [vmem:[#allocation2 + $0x50] sm:$0xff]
      %v2304 = vld [vmem:[#allocation2 + $0x58] sm:$0xff]
      %v2305 = vld [vmem:[#allocation2 + $0x60] sm:$0xff]
      %v2306 = vld [vmem:[#allocation2 + $0x68] sm:$0xff]
      %v2307 = vld [vmem:[#allocation2 + $0x70] sm:$0xff]
      %v2308 = vld [vmem:[#allocation2 + $0x78] sm:$0xff]
      %2325 = vrot.lane.b32.xlu0 %v2293, 18
      %v2326 = vpop.permute.xlu0 %2325
      %2327 = vrot.lane.b32.xlu0 %v2294, 18
      %v2328 = vpop.permute.xlu0 %2327
      %2329 = vrot.lane.b32.xlu0 %v2295, 18
      %v2330 = vpop.permute.xlu0 %2329
      %2331 = vrot.lane.b32.xlu0 %v2296, 18
      %v2332 = vpop.permute.xlu0 %2331
      %2333 = vrot.lane.b32.xlu0 %v2297, 18
      %v2334 = vpop.permute.xlu0 %2333
      %2335 = vrot.lane.b32.xlu0 %v2298, 18
      %v2336 = vpop.permute.xlu0 %2335
      %2337 = vrot.lane.b32.xlu0 %v2299, 18
      %v2338 = vpop.permute.xlu0 %2337
      %2339 = vrot.lane.b32.xlu0 %v2300, 18
      %v2340 = vpop.permute.xlu0 %2339
      %2341 = vrot.lane.b32.xlu0 %v2301, 18
      %v2342 = vpop.permute.xlu0 %2341
      %2343 = vrot.lane.b32.xlu0 %v2302, 18
      %v2344 = vpop.permute.xlu0 %2343
      %2345 = vrot.lane.b32.xlu0 %v2303, 18
      %v2346 = vpop.permute.xlu0 %2345
      %2347 = vrot.lane.b32.xlu0 %v2304, 18
      %v2348 = vpop.permute.xlu0 %2347
      %2349 = vrot.lane.b32.xlu0 %v2305, 18
      %v2350 = vpop.permute.xlu0 %2349
      %2351 = vrot.lane.b32.xlu0 %v2306, 18
      %v2352 = vpop.permute.xlu0 %2351
      %2353 = vrot.lane.b32.xlu0 %v2307, 18
      %v2354 = vpop.permute.xlu0 %2353
      %2355 = vrot.lane.b32.xlu0 %v2308, 18
      %v2356 = vpop.permute.xlu0 %2355
      %v2357 = vsel %vm425, %v2326, %v2328
      %v2358 = vsel %vm425, %v2328, %v2330
      %v2359 = vsel %vm425, %v2330, %v2332
      %v2360 = vsel %vm425, %v2334, %v2336
      %v2361 = vsel %vm425, %v2336, %v2338
      %v2362 = vsel %vm425, %v2338, %v2340
      %v2363 = vsel %vm425, %v2342, %v2344
      %v2364 = vsel %vm425, %v2344, %v2346
      %v2365 = vsel %vm425, %v2346, %v2348
      %v2366 = vsel %vm425, %v2350, %v2352
      %v2367 = vsel %vm425, %v2352, %v2354
      %v2368 = vsel %vm425, %v2354, %v2356
      %2381 = vst [vmem:[#allocation3 + $0x60] sm:$0xff] %v2357
      %2382 = vst [vmem:[#allocation3 + $0x68] sm:$0xff] %v2358
      %2383 = vst.msk [vmem:[#allocation3 + $0x70] sm:$0xff] %vm897, %v2359
      %2384 = vst [vmem:[#allocation3 + $0x78] sm:$0xff] %v2360
      %2385 = vst [vmem:[#allocation3 + $0x80] sm:$0xff] %v2361
      %2386 = vst.msk [vmem:[#allocation3 + $0x88] sm:$0xff] %vm897, %v2362
      %2387 = vst [vmem:[#allocation3 + $0x90] sm:$0xff] %v2363
      %2388 = vst [vmem:[#allocation3 + $0x98] sm:$0xff] %v2364
      %2389 = vst.msk [vmem:[#allocation3 + $0xa0] sm:$0xff] %vm897, %v2365
      %2390 = vst [vmem:[#allocation3 + $0xa8] sm:$0xff] %v2366
      %2391 = vst [vmem:[#allocation3 + $0xb0] sm:$0xff] %v2367
      %2392 = vst.msk [vmem:[#allocation3 + $0xb8] sm:$0xff] %vm897, %v2368
      %v2393 = vld [vmem:[#allocation2] sm:$0xff]
      %v2394 = vld [vmem:[#allocation2 + $0x8] sm:$0xff]
      %v2395 = vld [vmem:[#allocation2 + $0x10] sm:$0xff]
      %v2396 = vld [vmem:[#allocation2 + $0x18] sm:$0xff]
      %v2397 = vld [vmem:[#allocation2 + $0x20] sm:$0xff]
      %v2398 = vld [vmem:[#allocation2 + $0x28] sm:$0xff]
      %v2399 = vld [vmem:[#allocation2 + $0x30] sm:$0xff]
      %v2400 = vld [vmem:[#allocation2 + $0x38] sm:$0xff]
      %v2401 = vld [vmem:[#allocation2 + $0x40] sm:$0xff]
      %v2402 = vld [vmem:[#allocation2 + $0x48] sm:$0xff]
      %v2403 = vld [vmem:[#allocation2 + $0x50] sm:$0xff]
      %v2404 = vld [vmem:[#allocation2 + $0x58] sm:$0xff]
      %v2405 = vld [vmem:[#allocation2 + $0x60] sm:$0xff]
      %v2406 = vld [vmem:[#allocation2 + $0x68] sm:$0xff]
      %v2407 = vld [vmem:[#allocation2 + $0x70] sm:$0xff]
      %v2408 = vld [vmem:[#allocation2 + $0x78] sm:$0xff]
      %2425 = vrot.lane.b32.xlu0 %v2393, 17
      %v2426 = vpop.permute.xlu0 %2425
      %2427 = vrot.lane.b32.xlu0 %v2394, 17
      %v2428 = vpop.permute.xlu0 %2427
      %2429 = vrot.lane.b32.xlu0 %v2395, 17
      %v2430 = vpop.permute.xlu0 %2429
      %2431 = vrot.lane.b32.xlu0 %v2396, 17
      %v2432 = vpop.permute.xlu0 %2431
      %2433 = vrot.lane.b32.xlu0 %v2397, 17
      %v2434 = vpop.permute.xlu0 %2433
      %2435 = vrot.lane.b32.xlu0 %v2398, 17
      %v2436 = vpop.permute.xlu0 %2435
      %2437 = vrot.lane.b32.xlu0 %v2399, 17
      %v2438 = vpop.permute.xlu0 %2437
      %2439 = vrot.lane.b32.xlu0 %v2400, 17
      %v2440 = vpop.permute.xlu0 %2439
      %2441 = vrot.lane.b32.xlu0 %v2401, 17
      %v2442 = vpop.permute.xlu0 %2441
      %2443 = vrot.lane.b32.xlu0 %v2402, 17
      %v2444 = vpop.permute.xlu0 %2443
      %2445 = vrot.lane.b32.xlu0 %v2403, 17
      %v2446 = vpop.permute.xlu0 %2445
      %2447 = vrot.lane.b32.xlu0 %v2404, 17
      %v2448 = vpop.permute.xlu0 %2447
      %2449 = vrot.lane.b32.xlu0 %v2405, 17
      %v2450 = vpop.permute.xlu0 %2449
      %2451 = vrot.lane.b32.xlu0 %v2406, 17
      %v2452 = vpop.permute.xlu0 %2451
      %2453 = vrot.lane.b32.xlu0 %v2407, 17
      %v2454 = vpop.permute.xlu0 %2453
      %2455 = vrot.lane.b32.xlu0 %v2408, 17
      %v2456 = vpop.permute.xlu0 %2455
      %v2457 = vsel %vm456, %v2426, %v2428
      %v2458 = vsel %vm456, %v2428, %v2430
      %v2459 = vsel %vm456, %v2430, %v2432
      %v2460 = vsel %vm456, %v2434, %v2436
      %v2461 = vsel %vm456, %v2436, %v2438
      %v2462 = vsel %vm456, %v2438, %v2440
      %v2463 = vsel %vm456, %v2442, %v2444
      %v2464 = vsel %vm456, %v2444, %v2446
      %v2465 = vsel %vm456, %v2446, %v2448
      %v2466 = vsel %vm456, %v2450, %v2452
      %v2467 = vsel %vm456, %v2452, %v2454
      %v2468 = vsel %vm456, %v2454, %v2456
      %2481 = vst [vmem:[#allocation3 + $0xc0] sm:$0xff] %v2457
      %2482 = vst [vmem:[#allocation3 + $0xc8] sm:$0xff] %v2458
      %2483 = vst.msk [vmem:[#allocation3 + $0xd0] sm:$0xff] %vm897, %v2459
      %2484 = vst [vmem:[#allocation3 + $0xd8] sm:$0xff] %v2460
      %2485 = vst [vmem:[#allocation3 + $0xe0] sm:$0xff] %v2461
      %2486 = vst.msk [vmem:[#allocation3 + $0xe8] sm:$0xff] %vm897, %v2462
      %2487 = vst [vmem:[#allocation3 + $0xf0] sm:$0xff] %v2463
      %2488 = vst [vmem:[#allocation3 + $0xf8] sm:$0xff] %v2464
      %2489 = vst.msk [vmem:[#allocation3 + $0x100] sm:$0xff] %vm897, %v2465
      %2490 = vst [vmem:[#allocation3 + $0x108] sm:$0xff] %v2466
      %2491 = vst [vmem:[#allocation3 + $0x110] sm:$0xff] %v2467
      %2492 = vst.msk [vmem:[#allocation3 + $0x118] sm:$0xff] %vm897, %v2468
      %v2493 = vld [vmem:[#allocation2] sm:$0xff]
      %v2494 = vld [vmem:[#allocation2 + $0x8] sm:$0xff]
      %v2495 = vld [vmem:[#allocation2 + $0x10] sm:$0xff]
      %v2496 = vld [vmem:[#allocation2 + $0x18] sm:$0xff]
      %v2497 = vld [vmem:[#allocation2 + $0x20] sm:$0xff]
      %v2498 = vld [vmem:[#allocation2 + $0x28] sm:$0xff]
      %v2499 = vld [vmem:[#allocation2 + $0x30] sm:$0xff]
      %v2500 = vld [vmem:[#allocation2 + $0x38] sm:$0xff]
      %v2501 = vld [vmem:[#allocation2 + $0x40] sm:$0xff]
      %v2502 = vld [vmem:[#allocation2 + $0x48] sm:$0xff]
      %v2503 = vld [vmem:[#allocation2 + $0x50] sm:$0xff]
      %v2504 = vld [vmem:[#allocation2 + $0x58] sm:$0xff]
      %v2505 = vld [vmem:[#allocation2 + $0x60] sm:$0xff]
      %v2506 = vld [vmem:[#allocation2 + $0x68] sm:$0xff]
      %v2507 = vld [vmem:[#allocation2 + $0x70] sm:$0xff]
      %v2508 = vld [vmem:[#allocation2 + $0x78] sm:$0xff]
      %2525 = vrot.lane.b32.xlu0 %v2493, 1
      %v2526 = vpop.permute.xlu0 %2525
      %2527 = vrot.lane.b32.xlu0 %v2494, 1
      %v2528 = vpop.permute.xlu0 %2527
      %2529 = vrot.lane.b32.xlu0 %v2495, 1
      %v2530 = vpop.permute.xlu0 %2529
      %2531 = vrot.lane.b32.xlu0 %v2496, 1
      %v2532 = vpop.permute.xlu0 %2531
      %2533 = vrot.lane.b32.xlu0 %v2497, 1
      %v2534 = vpop.permute.xlu0 %2533
      %2535 = vrot.lane.b32.xlu0 %v2498, 1
      %v2536 = vpop.permute.xlu0 %2535
      %2537 = vrot.lane.b32.xlu0 %v2499, 1
      %v2538 = vpop.permute.xlu0 %2537
      %2539 = vrot.lane.b32.xlu0 %v2500, 1
      %v2540 = vpop.permute.xlu0 %2539
      %2541 = vrot.lane.b32.xlu0 %v2501, 1
      %v2542 = vpop.permute.xlu0 %2541
      %2543 = vrot.lane.b32.xlu0 %v2502, 1
      %v2544 = vpop.permute.xlu0 %2543
      %2545 = vrot.lane.b32.xlu0 %v2503, 1
      %v2546 = vpop.permute.xlu0 %2545
      %2547 = vrot.lane.b32.xlu0 %v2504, 1
      %v2548 = vpop.permute.xlu0 %2547
      %2549 = vrot.lane.b32.xlu0 %v2505, 1
      %v2550 = vpop.permute.xlu0 %2549
      %2551 = vrot.lane.b32.xlu0 %v2506, 1
      %v2552 = vpop.permute.xlu0 %2551
      %2553 = vrot.lane.b32.xlu0 %v2507, 1
      %v2554 = vpop.permute.xlu0 %2553
      %2555 = vrot.lane.b32.xlu0 %v2508, 1
      %v2556 = vpop.permute.xlu0 %2555
      %v2557 = vsel %vm491, %v2526, %v2528
      %v2558 = vsel %vm491, %v2528, %v2530
      %v2559 = vsel %vm491, %v2530, %v2532
      %v2560 = vsel %vm491, %v2534, %v2536
      %v2561 = vsel %vm491, %v2536, %v2538
      %v2562 = vsel %vm491, %v2538, %v2540
      %v2563 = vsel %vm491, %v2542, %v2544
      %v2564 = vsel %vm491, %v2544, %v2546
      %v2565 = vsel %vm491, %v2546, %v2548
      %v2566 = vsel %vm491, %v2550, %v2552
      %v2567 = vsel %vm491, %v2552, %v2554
      %v2568 = vsel %vm491, %v2554, %v2556
      %2581 = vst [vmem:[#allocation3 + $0x120] sm:$0xff] %v2557
      %2582 = vst [vmem:[#allocation3 + $0x128] sm:$0xff] %v2558
      %2583 = vst.msk [vmem:[#allocation3 + $0x130] sm:$0xff] %vm897, %v2559
      %2584 = vst [vmem:[#allocation3 + $0x138] sm:$0xff] %v2560
      %2585 = vst [vmem:[#allocation3 + $0x140] sm:$0xff] %v2561
      %2586 = vst.msk [vmem:[#allocation3 + $0x148] sm:$0xff] %vm897, %v2562
      %2587 = vst [vmem:[#allocation3 + $0x150] sm:$0xff] %v2563
      %2588 = vst [vmem:[#allocation3 + $0x158] sm:$0xff] %v2564
      %2589 = vst.msk [vmem:[#allocation3 + $0x160] sm:$0xff] %vm897, %v2565
      %2590 = vst [vmem:[#allocation3 + $0x168] sm:$0xff] %v2566
      %2591 = vst [vmem:[#allocation3 + $0x170] sm:$0xff] %v2567
      %2592 = vst.msk [vmem:[#allocation3 + $0x178] sm:$0xff] %vm897, %v2568
      %v2593 = vld [vmem:[#allocation2 + $0x8] sm:$0xff]
      %v2594 = vld [vmem:[#allocation2 + $0x10] sm:$0xff]
      %v2595 = vld [vmem:[#allocation2 + $0x18] sm:$0xff]
      %v2596 = vld [vmem:[#allocation2 + $0x28] sm:$0xff]
      %v2597 = vld [vmem:[#allocation2 + $0x30] sm:$0xff]
      %v2598 = vld [vmem:[#allocation2 + $0x38] sm:$0xff]
      %v2599 = vld [vmem:[#allocation2 + $0x48] sm:$0xff]
      %v2600 = vld [vmem:[#allocation2 + $0x50] sm:$0xff]
      %v2601 = vld [vmem:[#allocation2 + $0x58] sm:$0xff]
      %v2602 = vld [vmem:[#allocation2 + $0x68] sm:$0xff]
      %v2603 = vld [vmem:[#allocation2 + $0x70] sm:$0xff]
      %v2604 = vld [vmem:[#allocation2 + $0x78] sm:$0xff]
      %2605 = vst [vmem:[#allocation3 + $0x180] sm:$0xff] %v2593
      %2606 = vst [vmem:[#allocation3 + $0x188] sm:$0xff] %v2594
      %2607 = vst.msk [vmem:[#allocation3 + $0x190] sm:$0xff] %vm897, %v2595
      %2608 = vst [vmem:[#allocation3 + $0x198] sm:$0xff] %v2596
      %2609 = vst [vmem:[#allocation3 + $0x1a0] sm:$0xff] %v2597
      %2610 = vst.msk [vmem:[#allocation3 + $0x1a8] sm:$0xff] %vm897, %v2598
      %2611 = vst [vmem:[#allocation3 + $0x1b0] sm:$0xff] %v2599
      %2612 = vst [vmem:[#allocation3 + $0x1b8] sm:$0xff] %v2600
      %2613 = vst.msk [vmem:[#allocation3 + $0x1c0] sm:$0xff] %vm897, %v2601
      %2614 = vst [vmem:[#allocation3 + $0x1c8] sm:$0xff] %v2602
      %2615 = vst [vmem:[#allocation3 + $0x1d0] sm:$0xff] %v2603
      %2616 = vst.msk [vmem:[#allocation3 + $0x1d8] sm:$0xff] %vm897, %v2604
      %v2617 = vld [vmem:[#allocation2 + $0x8] sm:$0xff]
      %v2618 = vld [vmem:[#allocation2 + $0x10] sm:$0xff]
      %v2619 = vld [vmem:[#allocation2 + $0x18] sm:$0xff]
      %v2620 = vld [vmem:[#allocation2 + $0x28] sm:$0xff]
      %v2621 = vld [vmem:[#allocation2 + $0x30] sm:$0xff]
      %v2622 = vld [vmem:[#allocation2 + $0x38] sm:$0xff]
      %v2623 = vld [vmem:[#allocation2 + $0x48] sm:$0xff]
      %v2624 = vld [vmem:[#allocation2 + $0x50] sm:$0xff]
      %v2625 = vld [vmem:[#allocation2 + $0x58] sm:$0xff]
      %v2626 = vld [vmem:[#allocation2 + $0x68] sm:$0xff]
      %v2627 = vld [vmem:[#allocation2 + $0x70] sm:$0xff]
      %v2628 = vld [vmem:[#allocation2 + $0x78] sm:$0xff]
      %2641 = vrot.lane.b32.xlu0 %v2617, 127
      %v2642 = vpop.permute.xlu0 %2641
      %2643 = vrot.lane.b32.xlu0 %v2618, 127
      %v2644 = vpop.permute.xlu0 %2643
      %2645 = vrot.lane.b32.xlu0 %v2619, 127
      %v2646 = vpop.permute.xlu0 %2645
      %2647 = vrot.lane.b32.xlu0 %v2620, 127
      %v2648 = vpop.permute.xlu0 %2647
      %2649 = vrot.lane.b32.xlu0 %v2621, 127
      %v2650 = vpop.permute.xlu0 %2649
      %2651 = vrot.lane.b32.xlu0 %v2622, 127
      %v2652 = vpop.permute.xlu0 %2651
      %2653 = vrot.lane.b32.xlu0 %v2623, 127
      %v2654 = vpop.permute.xlu0 %2653
      %2655 = vrot.lane.b32.xlu0 %v2624, 127
      %v2656 = vpop.permute.xlu0 %2655
      %2657 = vrot.lane.b32.xlu0 %v2625, 127
      %v2658 = vpop.permute.xlu0 %2657
      %2659 = vrot.lane.b32.xlu0 %v2626, 127
      %v2660 = vpop.permute.xlu0 %2659
      %2661 = vrot.lane.b32.xlu0 %v2627, 127
      %v2662 = vpop.permute.xlu0 %2661
      %2663 = vrot.lane.b32.xlu0 %v2628, 127
      %v2664 = vpop.permute.xlu0 %2663
      %v2665 = vsel %vm533, %v2642, %v2644
      %v2666 = vsel %vm533, %v2644, %v2646
      %v2667 = vsel %vm533, %v2648, %v2650
      %v2668 = vsel %vm533, %v2650, %v2652
      %v2669 = vsel %vm533, %v2654, %v2656
      %v2670 = vsel %vm533, %v2656, %v2658
      %v2671 = vsel %vm533, %v2660, %v2662
      %v2672 = vsel %vm533, %v2662, %v2664
      %2685 = vst [vmem:[#allocation3 + $0x1e0] sm:$0xff] %v2665
      %2686 = vst [vmem:[#allocation3 + $0x1e8] sm:$0xff] %v2666
      %2687 = vst.msk [vmem:[#allocation3 + $0x1f0] sm:$0xff] %vm897, %v2646
      %2688 = vst [vmem:[#allocation3 + $0x1f8] sm:$0xff] %v2667
      %2689 = vst [vmem:[#allocation3 + $0x200] sm:$0xff] %v2668
      %2690 = vst.msk [vmem:[#allocation3 + $0x208] sm:$0xff] %vm897, %v2652
      %2691 = vst [vmem:[#allocation3 + $0x210] sm:$0xff] %v2669
      %2692 = vst [vmem:[#allocation3 + $0x218] sm:$0xff] %v2670
      %2693 = vst.msk [vmem:[#allocation3 + $0x220] sm:$0xff] %vm897, %v2658
      %2694 = vst [vmem:[#allocation3 + $0x228] sm:$0xff] %v2671
      %2695 = vst [vmem:[#allocation3 + $0x230] sm:$0xff] %v2672
      %2696 = vst.msk [vmem:[#allocation3 + $0x238] sm:$0xff] %vm897, %v2664
      %v2697 = vld [vmem:[#allocation2 + $0x8] sm:$0xff]
      %v2698 = vld [vmem:[#allocation2 + $0x10] sm:$0xff]
      %v2699 = vld [vmem:[#allocation2 + $0x18] sm:$0xff]
      %v2700 = vld [vmem:[#allocation2 + $0x28] sm:$0xff]
      %v2701 = vld [vmem:[#allocation2 + $0x30] sm:$0xff]
      %v2702 = vld [vmem:[#allocation2 + $0x38] sm:$0xff]
      %v2703 = vld [vmem:[#allocation2 + $0x48] sm:$0xff]
      %v2704 = vld [vmem:[#allocation2 + $0x50] sm:$0xff]
      %v2705 = vld [vmem:[#allocation2 + $0x58] sm:$0xff]
      %v2706 = vld [vmem:[#allocation2 + $0x68] sm:$0xff]
      %v2707 = vld [vmem:[#allocation2 + $0x70] sm:$0xff]
      %v2708 = vld [vmem:[#allocation2 + $0x78] sm:$0xff]
      %2721 = vrot.lane.b32.xlu0 %v2697, 111
      %v2722 = vpop.permute.xlu0 %2721
      %2723 = vrot.lane.b32.xlu0 %v2698, 111
      %v2724 = vpop.permute.xlu0 %2723
      %2725 = vrot.lane.b32.xlu0 %v2699, 111
      %v2726 = vpop.permute.xlu0 %2725
      %2727 = vrot.lane.b32.xlu0 %v2700, 111
      %v2728 = vpop.permute.xlu0 %2727
      %2729 = vrot.lane.b32.xlu0 %v2701, 111
      %v2730 = vpop.permute.xlu0 %2729
      %2731 = vrot.lane.b32.xlu0 %v2702, 111
      %v2732 = vpop.permute.xlu0 %2731
      %2733 = vrot.lane.b32.xlu0 %v2703, 111
      %v2734 = vpop.permute.xlu0 %2733
      %2735 = vrot.lane.b32.xlu0 %v2704, 111
      %v2736 = vpop.permute.xlu0 %2735
      %2737 = vrot.lane.b32.xlu0 %v2705, 111
      %v2738 = vpop.permute.xlu0 %2737
      %2739 = vrot.lane.b32.xlu0 %v2706, 111
      %v2740 = vpop.permute.xlu0 %2739
      %2741 = vrot.lane.b32.xlu0 %v2707, 111
      %v2742 = vpop.permute.xlu0 %2741
      %2743 = vrot.lane.b32.xlu0 %v2708, 111
      %v2744 = vpop.permute.xlu0 %2743
      %v2745 = vsel %vm562, %v2722, %v2724
      %v2746 = vsel %vm562, %v2724, %v2726
      %v2747 = vsel %vm562, %v2728, %v2730
      %v2748 = vsel %vm562, %v2730, %v2732
      %v2749 = vsel %vm562, %v2734, %v2736
      %v2750 = vsel %vm562, %v2736, %v2738
      %v2751 = vsel %vm562, %v2740, %v2742
      %v2752 = vsel %vm562, %v2742, %v2744
      %2765 = vst [vmem:[#allocation3 + $0x240] sm:$0xff] %v2745
      %2766 = vst [vmem:[#allocation3 + $0x248] sm:$0xff] %v2746
      %2767 = vst.msk [vmem:[#allocation3 + $0x250] sm:$0xff] %vm897, %v2726
      %2768 = vst [vmem:[#allocation3 + $0x258] sm:$0xff] %v2747
      %2769 = vst [vmem:[#allocation3 + $0x260] sm:$0xff] %v2748
      %2770 = vst.msk [vmem:[#allocation3 + $0x268] sm:$0xff] %vm897, %v2732
      %2771 = vst [vmem:[#allocation3 + $0x270] sm:$0xff] %v2749
      %2772 = vst [vmem:[#allocation3 + $0x278] sm:$0xff] %v2750
      %2773 = vst.msk [vmem:[#allocation3 + $0x280] sm:$0xff] %vm897, %v2738
      %2774 = vst [vmem:[#allocation3 + $0x288] sm:$0xff] %v2751
      %2775 = vst [vmem:[#allocation3 + $0x290] sm:$0xff] %v2752
      %2776 = vst.msk [vmem:[#allocation3 + $0x298] sm:$0xff] %vm897, %v2744
      %v2777 = vld [vmem:[#allocation2 + $0x8] sm:$0xff]
      %v2778 = vld [vmem:[#allocation2 + $0x10] sm:$0xff]
      %v2779 = vld [vmem:[#allocation2 + $0x18] sm:$0xff]
      %v2780 = vld [vmem:[#allocation2 + $0x28] sm:$0xff]
      %v2781 = vld [vmem:[#allocation2 + $0x30] sm:$0xff]
      %v2782 = vld [vmem:[#allocation2 + $0x38] sm:$0xff]
      %v2783 = vld [vmem:[#allocation2 + $0x48] sm:$0xff]
      %v2784 = vld [vmem:[#allocation2 + $0x50] sm:$0xff]
      %v2785 = vld [vmem:[#allocation2 + $0x58] sm:$0xff]
      %v2786 = vld [vmem:[#allocation2 + $0x68] sm:$0xff]
      %v2787 = vld [vmem:[#allocation2 + $0x70] sm:$0xff]
      %v2788 = vld [vmem:[#allocation2 + $0x78] sm:$0xff]
      %2801 = vrot.lane.b32.xlu0 %v2777, 110
      %v2802 = vpop.permute.xlu0 %2801
      %2803 = vrot.lane.b32.xlu0 %v2778, 110
      %v2804 = vpop.permute.xlu0 %2803
      %2805 = vrot.lane.b32.xlu0 %v2779, 110
      %v2806 = vpop.permute.xlu0 %2805
      %2807 = vrot.lane.b32.xlu0 %v2780, 110
      %v2808 = vpop.permute.xlu0 %2807
      %2809 = vrot.lane.b32.xlu0 %v2781, 110
      %v2810 = vpop.permute.xlu0 %2809
      %2811 = vrot.lane.b32.xlu0 %v2782, 110
      %v2812 = vpop.permute.xlu0 %2811
      %2813 = vrot.lane.b32.xlu0 %v2783, 110
      %v2814 = vpop.permute.xlu0 %2813
      %2815 = vrot.lane.b32.xlu0 %v2784, 110
      %v2816 = vpop.permute.xlu0 %2815
      %2817 = vrot.lane.b32.xlu0 %v2785, 110
      %v2818 = vpop.permute.xlu0 %2817
      %2819 = vrot.lane.b32.xlu0 %v2786, 110
      %v2820 = vpop.permute.xlu0 %2819
      %2821 = vrot.lane.b32.xlu0 %v2787, 110
      %v2822 = vpop.permute.xlu0 %2821
      %2823 = vrot.lane.b32.xlu0 %v2788, 110
      %v2824 = vpop.permute.xlu0 %2823
      %v2825 = vsel %vm587, %v2802, %v2804
      %v2826 = vsel %vm587, %v2804, %v2806
      %v2827 = vsel %vm587, %v2808, %v2810
      %v2828 = vsel %vm587, %v2810, %v2812
      %v2829 = vsel %vm587, %v2814, %v2816
      %v2830 = vsel %vm587, %v2816, %v2818
      %v2831 = vsel %vm587, %v2820, %v2822
      %v2832 = vsel %vm587, %v2822, %v2824
      %2845 = vst [vmem:[#allocation3 + $0x2a0] sm:$0xff] %v2825
      %2846 = vst [vmem:[#allocation3 + $0x2a8] sm:$0xff] %v2826
      %2847 = vst.msk [vmem:[#allocation3 + $0x2b0] sm:$0xff] %vm897, %v2806
      %2848 = vst [vmem:[#allocation3 + $0x2b8] sm:$0xff] %v2827
      %2849 = vst [vmem:[#allocation3 + $0x2c0] sm:$0xff] %v2828
      %2850 = vst.msk [vmem:[#allocation3 + $0x2c8] sm:$0xff] %vm897, %v2812
      %2851 = vst [vmem:[#allocation3 + $0x2d0] sm:$0xff] %v2829
      %2852 = vst [vmem:[#allocation3 + $0x2d8] sm:$0xff] %v2830
      %2853 = vst.msk [vmem:[#allocation3 + $0x2e0] sm:$0xff] %vm897, %v2818
      %2854 = vst [vmem:[#allocation3 + $0x2e8] sm:$0xff] %v2831
      %2855 = vst [vmem:[#allocation3 + $0x2f0] sm:$0xff] %v2832
      %2856 = vst.msk [vmem:[#allocation3 + $0x2f8] sm:$0xff] %vm897, %v2824
      %v2857 = vld [vmem:[#allocation2 + $0x8] sm:$0xff]
      %v2858 = vld [vmem:[#allocation2 + $0x10] sm:$0xff]
      %v2859 = vld [vmem:[#allocation2 + $0x18] sm:$0xff]
      %v2860 = vld [vmem:[#allocation2 + $0x28] sm:$0xff]
      %v2861 = vld [vmem:[#allocation2 + $0x30] sm:$0xff]
      %v2862 = vld [vmem:[#allocation2 + $0x38] sm:$0xff]
      %v2863 = vld [vmem:[#allocation2 + $0x48] sm:$0xff]
      %v2864 = vld [vmem:[#allocation2 + $0x50] sm:$0xff]
      %v2865 = vld [vmem:[#allocation2 + $0x58] sm:$0xff]
      %v2866 = vld [vmem:[#allocation2 + $0x68] sm:$0xff]
      %v2867 = vld [vmem:[#allocation2 + $0x70] sm:$0xff]
      %v2868 = vld [vmem:[#allocation2 + $0x78] sm:$0xff]
      %2881 = vrot.lane.b32.xlu0 %v2857, 109
      %v2882 = vpop.permute.xlu0 %2881
      %2883 = vrot.lane.b32.xlu0 %v2858, 109
      %v2884 = vpop.permute.xlu0 %2883
      %2885 = vrot.lane.b32.xlu0 %v2859, 109
      %v2886 = vpop.permute.xlu0 %2885
      %2887 = vrot.lane.b32.xlu0 %v2860, 109
      %v2888 = vpop.permute.xlu0 %2887
      %2889 = vrot.lane.b32.xlu0 %v2861, 109
      %v2890 = vpop.permute.xlu0 %2889
      %2891 = vrot.lane.b32.xlu0 %v2862, 109
      %v2892 = vpop.permute.xlu0 %2891
      %2893 = vrot.lane.b32.xlu0 %v2863, 109
      %v2894 = vpop.permute.xlu0 %2893
      %2895 = vrot.lane.b32.xlu0 %v2864, 109
      %v2896 = vpop.permute.xlu0 %2895
      %2897 = vrot.lane.b32.xlu0 %v2865, 109
      %v2898 = vpop.permute.xlu0 %2897
      %2899 = vrot.lane.b32.xlu0 %v2866, 109
      %v2900 = vpop.permute.xlu0 %2899
      %2901 = vrot.lane.b32.xlu0 %v2867, 109
      %v2902 = vpop.permute.xlu0 %2901
      %2903 = vrot.lane.b32.xlu0 %v2868, 109
      %v2904 = vpop.permute.xlu0 %2903
      %v2905 = vsel %vm609, %v2882, %v2884
      %v2906 = vsel %vm609, %v2884, %v2886
      %v2907 = vsel %vm609, %v2888, %v2890
      %v2908 = vsel %vm609, %v2890, %v2892
      %v2909 = vsel %vm609, %v2894, %v2896
      %v2910 = vsel %vm609, %v2896, %v2898
      %v2911 = vsel %vm609, %v2900, %v2902
      %v2912 = vsel %vm609, %v2902, %v2904
      %2925 = vst [vmem:[#allocation3 + $0x300] sm:$0xff] %v2905
      %2926 = vst [vmem:[#allocation3 + $0x308] sm:$0xff] %v2906
      %2927 = vst.msk [vmem:[#allocation3 + $0x310] sm:$0xff] %vm897, %v2886
      %2928 = vst [vmem:[#allocation3 + $0x318] sm:$0xff] %v2907
      %2929 = vst [vmem:[#allocation3 + $0x320] sm:$0xff] %v2908
      %2930 = vst.msk [vmem:[#allocation3 + $0x328] sm:$0xff] %vm897, %v2892
      %2931 = vst [vmem:[#allocation3 + $0x330] sm:$0xff] %v2909
      %2932 = vst [vmem:[#allocation3 + $0x338] sm:$0xff] %v2910
      %2933 = vst.msk [vmem:[#allocation3 + $0x340] sm:$0xff] %vm897, %v2898
      %2934 = vst [vmem:[#allocation3 + $0x348] sm:$0xff] %v2911
      %2935 = vst [vmem:[#allocation3 + $0x350] sm:$0xff] %v2912
      %2936 = vst.msk [vmem:[#allocation3 + $0x358] sm:$0xff] %vm897, %v2904
      %v2937 = vld [vmem:[%s6] sm:$0xff]
      %v2938 = vld [vmem:[%s6 + $0x8] sm:$0xff]
      %v2939 = vld [vmem:[%s6 + $0x10] sm:$0xff]
      %v2940 = vld [vmem:[%s6 + $0x18] sm:$0xff]
      %v2941 = vld [vmem:[%s6 + $0x20] sm:$0xff]
      %v2942 = vld [vmem:[%s6 + $0x28] sm:$0xff]
      %v2943 = vld [vmem:[#allocation3] sm:$0xff]
      %v2944 = vld [vmem:[#allocation3 + $0x8] sm:$0xff]
      %v2945 = vld [vmem:[#allocation3 + $0x10] sm:$0xff]
      %v2946 = vld [vmem:[#allocation3 + $0x18] sm:$0xff]
      %v2947 = vld [vmem:[#allocation3 + $0x20] sm:$0xff]
      %v2948 = vld [vmem:[#allocation3 + $0x28] sm:$0xff]
      %v2949 = vld [vmem:[#allocation3 + $0x30] sm:$0xff]
      %v2950 = vld [vmem:[#allocation3 + $0x38] sm:$0xff]
      %v2951 = vld [vmem:[#allocation3 + $0x40] sm:$0xff]
      %v2952 = vld [vmem:[#allocation3 + $0x48] sm:$0xff]
      %v2953 = vld [vmem:[#allocation3 + $0x50] sm:$0xff]
      %v2954 = vld [vmem:[#allocation3 + $0x58] sm:$0xff]
      %v2955 = vld [vmem:[#allocation3 + $0x60] sm:$0xff]
      %v2956 = vld [vmem:[#allocation3 + $0x68] sm:$0xff]
      %v2957 = vld [vmem:[#allocation3 + $0x70] sm:$0xff]
      %v2958 = vld [vmem:[#allocation3 + $0x78] sm:$0xff]
      %v2959 = vld [vmem:[#allocation3 + $0x80] sm:$0xff]
      %v2960 = vld [vmem:[#allocation3 + $0x88] sm:$0xff]
      %v2961 = vld [vmem:[#allocation3 + $0x90] sm:$0xff]
      %v2962 = vld [vmem:[#allocation3 + $0x98] sm:$0xff]
      %v2963 = vld [vmem:[#allocation3 + $0xa0] sm:$0xff]
      %v2964 = vld [vmem:[#allocation3 + $0xa8] sm:$0xff]
      %v2965 = vld [vmem:[#allocation3 + $0xb0] sm:$0xff]
      %v2966 = vld [vmem:[#allocation3 + $0xb8] sm:$0xff]
      %v2967 = vld [vmem:[#allocation3 + $0xc0] sm:$0xff]
      %v2968 = vld [vmem:[#allocation3 + $0xc8] sm:$0xff]
      %v2969 = vld [vmem:[#allocation3 + $0xd0] sm:$0xff]
      %v2970 = vld [vmem:[#allocation3 + $0xd8] sm:$0xff]
      %v2971 = vld [vmem:[#allocation3 + $0xe0] sm:$0xff]
      %v2972 = vld [vmem:[#allocation3 + $0xe8] sm:$0xff]
      %v2973 = vld [vmem:[#allocation3 + $0xf0] sm:$0xff]
      %v2974 = vld [vmem:[#allocation3 + $0xf8] sm:$0xff]
      %v2975 = vld [vmem:[#allocation3 + $0x100] sm:$0xff]
      %v2976 = vld [vmem:[#allocation3 + $0x108] sm:$0xff]
      %v2977 = vld [vmem:[#allocation3 + $0x110] sm:$0xff]
      %v2978 = vld [vmem:[#allocation3 + $0x118] sm:$0xff]
      %v2979 = vld [vmem:[#allocation3 + $0x120] sm:$0xff]
      %v2980 = vld [vmem:[#allocation3 + $0x128] sm:$0xff]
      %v2981 = vld [vmem:[#allocation3 + $0x130] sm:$0xff]
      %v2982 = vld [vmem:[#allocation3 + $0x138] sm:$0xff]
      %v2983 = vld [vmem:[#allocation3 + $0x140] sm:$0xff]
      %v2984 = vld [vmem:[#allocation3 + $0x148] sm:$0xff]
      %v2985 = vld [vmem:[#allocation3 + $0x150] sm:$0xff]
      %v2986 = vld [vmem:[#allocation3 + $0x158] sm:$0xff]
      %v2987 = vld [vmem:[#allocation3 + $0x160] sm:$0xff]
      %v2988 = vld [vmem:[#allocation3 + $0x168] sm:$0xff]
      %v2989 = vld [vmem:[#allocation3 + $0x170] sm:$0xff]
      %v2990 = vld [vmem:[#allocation3 + $0x178] sm:$0xff]
      %v2991 = vld [vmem:[#allocation3 + $0x180] sm:$0xff]
      %v2992 = vld [vmem:[#allocation3 + $0x188] sm:$0xff]
      %v2993 = vld [vmem:[#allocation3 + $0x190] sm:$0xff]
      %v2994 = vld [vmem:[#allocation3 + $0x198] sm:$0xff]
      %v2995 = vld [vmem:[#allocation3 + $0x1a0] sm:$0xff]
      %v2996 = vld [vmem:[#allocation3 + $0x1a8] sm:$0xff]
      %v2997 = vld [vmem:[#allocation3 + $0x1b0] sm:$0xff]
      %v2998 = vld [vmem:[#allocation3 + $0x1b8] sm:$0xff]
      %v2999 = vld [vmem:[#allocation3 + $0x1c0] sm:$0xff]
      %v3000 = vld [vmem:[#allocation3 + $0x1c8] sm:$0xff]
      %v3001 = vld [vmem:[#allocation3 + $0x1d0] sm:$0xff]
      %v3002 = vld [vmem:[#allocation3 + $0x1d8] sm:$0xff]
      %v3003 = vld [vmem:[#allocation3 + $0x1e0] sm:$0xff]
      %v3004 = vld [vmem:[#allocation3 + $0x1e8] sm:$0xff]
      %v3005 = vld [vmem:[#allocation3 + $0x1f0] sm:$0xff]
      %v3006 = vld [vmem:[#allocation3 + $0x1f8] sm:$0xff]
      %v3007 = vld [vmem:[#allocation3 + $0x200] sm:$0xff]
      %v3008 = vld [vmem:[#allocation3 + $0x208] sm:$0xff]
      %v3009 = vld [vmem:[#allocation3 + $0x210] sm:$0xff]
      %v3010 = vld [vmem:[#allocation3 + $0x218] sm:$0xff]
      %v3011 = vld [vmem:[#allocation3 + $0x220] sm:$0xff]
      %v3012 = vld [vmem:[#allocation3 + $0x228] sm:$0xff]
      %v3013 = vld [vmem:[#allocation3 + $0x230] sm:$0xff]
      %v3014 = vld [vmem:[#allocation3 + $0x238] sm:$0xff]
      %v3015 = vld [vmem:[#allocation3 + $0x240] sm:$0xff]
      %v3016 = vld [vmem:[#allocation3 + $0x248] sm:$0xff]
      %v3017 = vld [vmem:[#allocation3 + $0x250] sm:$0xff]
      %v3018 = vld [vmem:[#allocation3 + $0x258] sm:$0xff]
      %v3019 = vld [vmem:[#allocation3 + $0x260] sm:$0xff]
      %v3020 = vld [vmem:[#allocation3 + $0x268] sm:$0xff]
      %v3021 = vld [vmem:[#allocation3 + $0x270] sm:$0xff]
      %v3022 = vld [vmem:[#allocation3 + $0x278] sm:$0xff]
      %v3023 = vld [vmem:[#allocation3 + $0x280] sm:$0xff]
      %v3024 = vld [vmem:[#allocation3 + $0x288] sm:$0xff]
      %v3025 = vld [vmem:[#allocation3 + $0x290] sm:$0xff]
      %v3026 = vld [vmem:[#allocation3 + $0x298] sm:$0xff]
      %v3027 = vld [vmem:[#allocation3 + $0x2a0] sm:$0xff]
      %v3028 = vld [vmem:[#allocation3 + $0x2a8] sm:$0xff]
      %v3029 = vld [vmem:[#allocation3 + $0x2b0] sm:$0xff]
      %v3030 = vld [vmem:[#allocation3 + $0x2b8] sm:$0xff]
      %v3031 = vld [vmem:[#allocation3 + $0x2c0] sm:$0xff]
      %v3032 = vld [vmem:[#allocation3 + $0x2c8] sm:$0xff]
      %v3033 = vld [vmem:[#allocation3 + $0x2d0] sm:$0xff]
      %v3034 = vld [vmem:[#allocation3 + $0x2d8] sm:$0xff]
      %v3035 = vld [vmem:[#allocation3 + $0x2e0] sm:$0xff]
      %v3036 = vld [vmem:[#allocation3 + $0x2e8] sm:$0xff]
      %v3037 = vld [vmem:[#allocation3 + $0x2f0] sm:$0xff]
      %v3038 = vld [vmem:[#allocation3 + $0x2f8] sm:$0xff]
      %v3039 = vld [vmem:[#allocation3 + $0x300] sm:$0xff]
      %v3040 = vld [vmem:[#allocation3 + $0x308] sm:$0xff]
      %v3041 = vld [vmem:[#allocation3 + $0x310] sm:$0xff]
      %v3042 = vld [vmem:[#allocation3 + $0x318] sm:$0xff]
      %v3043 = vld [vmem:[#allocation3 + $0x320] sm:$0xff]
      %v3044 = vld [vmem:[#allocation3 + $0x328] sm:$0xff]
      %v3045 = vld [vmem:[#allocation3 + $0x330] sm:$0xff]
      %v3046 = vld [vmem:[#allocation3 + $0x338] sm:$0xff]
      %v3047 = vld [vmem:[#allocation3 + $0x340] sm:$0xff]
      %v3048 = vld [vmem:[#allocation3 + $0x348] sm:$0xff]
      %v3049 = vld [vmem:[#allocation3 + $0x350] sm:$0xff]
      %v3050 = vld [vmem:[#allocation3 + $0x358] sm:$0xff]
      %v3051 = vld [vmem:[%s7] sm:$0xff]
      %v3052 = vld [vmem:[%s7 + $0x8] sm:$0xff]
      %3054 = vset.pattern.permute.xlu0 0
      %3055 = vperm.xlu0 %3054, %v3051
      %v3056 = vpop.permute.xlu0 %3055
      %3059 = vset.pattern.permute.xlu0 0
      %3060 = vperm.xlu0 %3059, %v3052
      %v3061 = vpop.permute.xlu0 %3060
      %v3064 = vsel %vm1796, %v2939, 0
      %v3067 = vsel %vm1796, %v2942, 0
      %3069 = vmatprep.subr.mxu0 %v2944
      %3070 = vmatpush1.msra.mxu0 %v2943
      %3071 = vmatprep.subr.mxu0 %v2947
      %3072 = vmatpush1.msra.mxu0 %v2946
      %3073 = vmatprep.subr.mxu0 %v2950
      %3074 = vmatpush1.msra.mxu0 %v2949
      %3075 = vmatprep.subr.mxu0 %v2953
      %3076 = vmatpush1.msra.mxu0 %v2952
      %3077 = vmatprep.subr.mxu0 %v2956
      %3078 = vmatpush1.msra.mxu0 %v2955
      %3079 = vmatprep.subr.mxu0 %v2959
      %3080 = vmatpush1.msra.mxu0 %v2958
      %3081 = vmatprep.subr.mxu0 %v2962
      %3082 = vmatpush1.msra.mxu0 %v2961
      %3083 = vmatprep.subr.mxu0 %v2965
      %3084 = vmatpush1.msra.mxu0 %v2964
      %3085 = vmatprep.subr.mxu0 %v2968
      %3086 = vmatpush1.msra.mxu0 %v2967
      %3087 = vmatprep.subr.mxu0 %v2971
      %3088 = vmatpush1.msra.mxu0 %v2970
      %3089 = vmatprep.subr.mxu0 %v2974
      %3090 = vmatpush1.msra.mxu0 %v2973
      %3091 = vmatprep.subr.mxu0 %v2977
      %3092 = vmatpush1.msra.mxu0 %v2976
      %3093 = vmatprep.subr.mxu0 %v2980
      %3094 = vmatpush1.msra.mxu0 %v2979
      %3095 = vmatprep.subr.mxu0 %v2983
      %3096 = vmatpush1.msra.mxu0 %v2982
      %3097 = vmatprep.subr.mxu0 %v2986
      %3098 = vmatpush1.msra.mxu0 %v2985
      %3099 = vmatprep.subr.mxu0 %v2989
      %3100 = vmatpush1.msra.mxu0 %v2988
      %3101 = vmatprep.subr.mxu0 %v2992
      %3102 = vmatpush1.msra.mxu0 %v2991
      %3103 = vmatprep.subr.mxu0 %v2995
      %3104 = vmatpush1.msra.mxu0 %v2994
      %3105 = vmatprep.subr.mxu0 %v2998
      %3106 = vmatpush1.msra.mxu0 %v2997
      %3107 = vmatprep.subr.mxu0 %v3001
      %3108 = vmatpush1.msra.mxu0 %v3000
      %3109 = vmatprep.subr.mxu0 %v3004
      %3110 = vmatpush1.msra.mxu0 %v3003
      %3111 = vmatprep.subr.mxu0 %v3007
      %3112 = vmatpush1.msra.mxu0 %v3006
      %3113 = vmatprep.subr.mxu0 %v3010
      %3114 = vmatpush1.msra.mxu0 %v3009
      %3115 = vmatprep.subr.mxu0 %v3013
      %3116 = vmatpush1.msra.mxu0 %v3012
      %3117 = vmatprep.subr.mxu0 %v3016
      %3118 = vmatpush1.msra.mxu0 %v3015
      %3119 = vmatprep.subr.mxu0 %v3019
      %3120 = vmatpush1.msra.mxu0 %v3018
      %3121 = vmatprep.subr.mxu0 %v3022
      %3122 = vmatpush1.msra.mxu0 %v3021
      %3123 = vmatprep.subr.mxu0 %v3025
      %3124 = vmatpush1.msra.mxu0 %v3024
      %3125 = vmatprep.subr.mxu0 %v3028
      %3126 = vmatpush1.msra.mxu0 %v3027
      %3127 = vmatprep.subr.mxu0 %v3031
      %3128 = vmatpush1.msra.mxu0 %v3030
      %3129 = vmatprep.subr.mxu0 %v3034
      %3130 = vmatpush1.msra.mxu0 %v3033
      %3131 = vmatprep.subr.mxu0 %v3037
      %3132 = vmatpush1.msra.mxu0 %v3036
      %3133 = vmatprep.mubr.f32.mxu0 %v2938
      %3134 = vmatmul.mubr.f32.gmra.mrb[0].mxu0 %v2937
      %v3135 = vpop.f32.mrb[0].mxu0
      %v3136 = vadd.f32 %v3056, %v3135
      %v3137 = vpop.f32.mrb[0].mxu0
      %v3138 = vadd.f32 %v3056, %v3137
      %3139 = vmatprep.mubr.f32.mxu0 %v2941
      %3140 = vmatmul.mubr.f32.gmra.mrb[0].mxu0 %v2940
      %v3141 = vpop.f32.mrb[0].mxu0
      %v3142 = vadd.f32 %v3061, %v3141
      %v3143 = vpop.f32.mrb[0].mxu0
      %v3144 = vadd.f32 %v3061, %v3143
      %3145 = vdwg.mxu0
      %3146 = vmatprep.subr.mxu0 %v3040
      %3147 = vmatpush1.msra.mxu0 %v3039
      %3148 = vmatprep.subr.mxu0 %v3043
      %3149 = vmatpush1.msra.mxu0 %v3042
      %3150 = vmatprep.subr.mxu0 %v3046
      %3151 = vmatpush1.msra.mxu0 %v3045
      %3152 = vmatprep.subr.mxu0 %v3049
      %3153 = vmatpush1.msra.mxu0 %v3048
      %3154 = vmatprep.subr.mxu0 0.0
      %3155 = vmatpush1.msra.mxu0 0.0
      %3156 = vmatprep.subr.mxu0 0.0
      %3157 = vmatpush1.msra.mxu0 0.0
      %3158 = vmatprep.subr.mxu0 0.0
      %3159 = vmatpush1.msra.mxu0 0.0
      %3160 = vmatprep.subr.mxu0 0.0
      %3161 = vmatpush1.msra.mxu0 0.0
      %3162 = vmatprep.subr.mxu0 0.0
      %3163 = vmatpush1.msra.mxu0 0.0
      %3164 = vmatprep.subr.mxu0 0.0
      %3165 = vmatpush1.msra.mxu0 0.0
      %3166 = vmatprep.subr.mxu0 0.0
      %3167 = vmatpush1.msra.mxu0 0.0
      %3168 = vmatprep.subr.mxu0 0.0
      %3169 = vmatpush1.msra.mxu0 0.0
      %3170 = vmatprep.subr.mxu0 0.0
      %3171 = vmatpush1.msra.mxu0 0.0
      %3172 = vmatprep.subr.mxu0 0.0
      %3173 = vmatpush1.msra.mxu0 0.0
      %3174 = vmatprep.subr.mxu0 0.0
      %3175 = vmatpush1.msra.mxu0 0.0
      %3176 = vmatprep.subr.mxu0 0.0
      %3177 = vmatpush1.msra.mxu0 0.0
      %3178 = vmatprep.subr.mxu0 0.0
      %3179 = vmatpush1.msra.mxu0 0.0
      %3180 = vmatprep.subr.mxu0 0.0
      %3181 = vmatpush1.msra.mxu0 0.0
      %3182 = vmatprep.subr.mxu0 0.0
      %3183 = vmatpush1.msra.mxu0 0.0
      %3184 = vmatprep.subr.mxu0 0.0
      %3185 = vmatpush1.msra.mxu0 0.0
      %3186 = vmatprep.subr.mxu0 0.0
      %3187 = vmatpush1.msra.mxu0 0.0
      %3188 = vmatprep.subr.mxu0 0.0
      %3189 = vmatpush1.msra.mxu0 0.0
      %3190 = vmatprep.subr.mxu0 0.0
      %3191 = vmatpush1.msra.mxu0 0.0
      %3192 = vmatprep.subr.mxu0 0.0
      %3193 = vmatpush1.msra.mxu0 0.0
      %3194 = vmatprep.subr.mxu0 0.0
      %3195 = vmatpush1.msra.mxu0 0.0
      %3196 = vmatprep.subr.mxu0 0.0
      %3197 = vmatpush1.msra.mxu0 0.0
      %3198 = vmatprep.subr.mxu0 0.0
      %3199 = vmatpush1.msra.mxu0 0.0
      %3200 = vmatprep.subr.mxu0 0.0
      %3201 = vmatpush1.msra.mxu0 0.0
      %3202 = vmatprep.subr.mxu0 0.0
      %3203 = vmatpush1.msra.mxu0 0.0
      %3204 = vmatprep.subr.mxu0 0.0
      %3205 = vmatpush1.msra.mxu0 0.0
      %3206 = vmatprep.subr.mxu0 0.0
      %3207 = vmatpush1.msra.mxu0 0.0
      %3208 = vmatprep.subr.mxu0 0.0
      %3209 = vmatpush1.msra.mxu0 0.0
      %3210 = vmatprep.mubr.f32.mxu0 0.0
      %3211 = vmatmul.mubr.f32.gmra.mrb[0].mxu0 %v3064
      %v3212 = vpop.f32.mrb[0].mxu0
      %v3213 = vadd.f32 %v3136, %v3212
      %v3214 = vpop.f32.mrb[0].mxu0
      %v3215 = vadd.f32 %v3138, %v3214
      %3216 = vmatprep.mubr.f32.mxu0 0.0
      %3217 = vmatmul.mubr.f32.gmra.mrb[0].mxu0 %v3067
      %v3218 = vpop.f32.mrb[0].mxu0
      %v3219 = vadd.f32 %v3142, %v3218
      %v3220 = vpop.f32.mrb[0].mxu0
      %v3221 = vadd.f32 %v3144, %v3220
      %3222 = vdwg.mxu0
      %3223 = vmatprep.subr.mxu0 0.0
      %3224 = vmatpush1.msra.mxu0 %v2945
      %3225 = vmatprep.subr.mxu0 0.0
      %3226 = vmatpush1.msra.mxu0 %v2948
      %3227 = vmatprep.subr.mxu0 0.0
      %3228 = vmatpush1.msra.mxu0 %v2951
      %3229 = vmatprep.subr.mxu0 0.0
      %3230 = vmatpush1.msra.mxu0 %v2954
      %3231 = vmatprep.subr.mxu0 0.0
      %3232 = vmatpush1.msra.mxu0 %v2957
      %3233 = vmatprep.subr.mxu0 0.0
      %3234 = vmatpush1.msra.mxu0 %v2960
      %3235 = vmatprep.subr.mxu0 0.0
      %3236 = vmatpush1.msra.mxu0 %v2963
      %3237 = vmatprep.subr.mxu0 0.0
      %3238 = vmatpush1.msra.mxu0 %v2966
      %3239 = vmatprep.subr.mxu0 0.0
      %3240 = vmatpush1.msra.mxu0 %v2969
      %3241 = vmatprep.subr.mxu0 0.0
      %3242 = vmatpush1.msra.mxu0 %v2972
      %3243 = vmatprep.subr.mxu0 0.0
      %3244 = vmatpush1.msra.mxu0 %v2975
      %3245 = vmatprep.subr.mxu0 0.0
      %3246 = vmatpush1.msra.mxu0 %v2978
      %3247 = vmatprep.subr.mxu0 0.0
      %3248 = vmatpush1.msra.mxu0 %v2981
      %3249 = vmatprep.subr.mxu0 0.0
      %3250 = vmatpush1.msra.mxu0 %v2984
      %3251 = vmatprep.subr.mxu0 0.0
      %3252 = vmatpush1.msra.mxu0 %v2987
      %3253 = vmatprep.subr.mxu0 0.0
      %3254 = vmatpush1.msra.mxu0 %v2990
      %3255 = vmatprep.subr.mxu0 0.0
      %3256 = vmatpush1.msra.mxu0 %v2993
      %3257 = vmatprep.subr.mxu0 0.0
      %3258 = vmatpush1.msra.mxu0 %v2996
      %3259 = vmatprep.subr.mxu0 0.0
      %3260 = vmatpush1.msra.mxu0 %v2999
      %3261 = vmatprep.subr.mxu0 0.0
      %3262 = vmatpush1.msra.mxu0 %v3002
      %3263 = vmatprep.subr.mxu0 0.0
      %3264 = vmatpush1.msra.mxu0 %v3005
      %3265 = vmatprep.subr.mxu0 0.0
      %3266 = vmatpush1.msra.mxu0 %v3008
      %3267 = vmatprep.subr.mxu0 0.0
      %3268 = vmatpush1.msra.mxu0 %v3011
      %3269 = vmatprep.subr.mxu0 0.0
      %3270 = vmatpush1.msra.mxu0 %v3014
      %3271 = vmatprep.subr.mxu0 0.0
      %3272 = vmatpush1.msra.mxu0 %v3017
      %3273 = vmatprep.subr.mxu0 0.0
      %3274 = vmatpush1.msra.mxu0 %v3020
      %3275 = vmatprep.subr.mxu0 0.0
      %3276 = vmatpush1.msra.mxu0 %v3023
      %3277 = vmatprep.subr.mxu0 0.0
      %3278 = vmatpush1.msra.mxu0 %v3026
      %3279 = vmatprep.subr.mxu0 0.0
      %3280 = vmatpush1.msra.mxu0 %v3029
      %3281 = vmatprep.subr.mxu0 0.0
      %3282 = vmatpush1.msra.mxu0 %v3032
      %3283 = vmatprep.subr.mxu0 0.0
      %3284 = vmatpush1.msra.mxu0 %v3035
      %3285 = vmatprep.subr.mxu0 0.0
      %3286 = vmatpush1.msra.mxu0 %v3038
      %3287 = vmatprep.mubr.f32.mxu0 %v2938
      %3288 = vmatmul.mubr.f32.gmra.mrb[0].mxu0 %v2937
      %v3289 = vpop.f32.mrb[0].mxu0
      %v3290 = vadd.f32 %v3056, %v3289
      %v3291 = vpop.f32.mrb[0].mxu0
      %3292 = vmatprep.mubr.f32.mxu0 %v2941
      %3293 = vmatmul.mubr.f32.gmra.mrb[0].mxu0 %v2940
      %v3294 = vpop.f32.mrb[0].mxu0
      %v3295 = vadd.f32 %v3061, %v3294
      %v3296 = vpop.f32.mrb[0].mxu0
      %3297 = vdwg.mxu0
      %3298 = vmatprep.subr.mxu0 0.0
      %3299 = vmatpush1.msra.mxu0 %v3041
      %3300 = vmatprep.subr.mxu0 0.0
      %3301 = vmatpush1.msra.mxu0 %v3044
      %3302 = vmatprep.subr.mxu0 0.0
      %3303 = vmatpush1.msra.mxu0 %v3047
      %3304 = vmatprep.subr.mxu0 0.0
      %3305 = vmatpush1.msra.mxu0 %v3050
      %3306 = vmatprep.subr.mxu0 0.0
      %3307 = vmatpush1.msra.mxu0 0.0
      %3308 = vmatprep.subr.mxu0 0.0
      %3309 = vmatpush1.msra.mxu0 0.0
      %3310 = vmatprep.subr.mxu0 0.0
      %3311 = vmatpush1.msra.mxu0 0.0
      %3312 = vmatprep.subr.mxu0 0.0
      %3313 = vmatpush1.msra.mxu0 0.0
      %3314 = vmatprep.subr.mxu0 0.0
      %3315 = vmatpush1.msra.mxu0 0.0
      %3316 = vmatprep.subr.mxu0 0.0
      %3317 = vmatpush1.msra.mxu0 0.0
      %3318 = vmatprep.subr.mxu0 0.0
      %3319 = vmatpush1.msra.mxu0 0.0
      %3320 = vmatprep.subr.mxu0 0.0
      %3321 = vmatpush1.msra.mxu0 0.0
      %3322 = vmatprep.subr.mxu0 0.0
      %3323 = vmatpush1.msra.mxu0 0.0
      %3324 = vmatprep.subr.mxu0 0.0
      %3325 = vmatpush1.msra.mxu0 0.0
      %3326 = vmatprep.subr.mxu0 0.0
      %3327 = vmatpush1.msra.mxu0 0.0
      %3328 = vmatprep.subr.mxu0 0.0
      %3329 = vmatpush1.msra.mxu0 0.0
      %3330 = vmatprep.subr.mxu0 0.0
      %3331 = vmatpush1.msra.mxu0 0.0
      %3332 = vmatprep.subr.mxu0 0.0
      %3333 = vmatpush1.msra.mxu0 0.0
      %3334 = vmatprep.subr.mxu0 0.0
      %3335 = vmatpush1.msra.mxu0 0.0
      %3336 = vmatprep.subr.mxu0 0.0
      %3337 = vmatpush1.msra.mxu0 0.0
      %3338 = vmatprep.subr.mxu0 0.0
      %3339 = vmatpush1.msra.mxu0 0.0
      %3340 = vmatprep.subr.mxu0 0.0
      %3341 = vmatpush1.msra.mxu0 0.0
      %3342 = vmatprep.subr.mxu0 0.0
      %3343 = vmatpush1.msra.mxu0 0.0
      %3344 = vmatprep.subr.mxu0 0.0
      %3345 = vmatpush1.msra.mxu0 0.0
      %3346 = vmatprep.subr.mxu0 0.0
      %3347 = vmatpush1.msra.mxu0 0.0
      %3348 = vmatprep.subr.mxu0 0.0
      %3349 = vmatpush1.msra.mxu0 0.0
      %3350 = vmatprep.subr.mxu0 0.0
      %3351 = vmatpush1.msra.mxu0 0.0
      %3352 = vmatprep.subr.mxu0 0.0
      %3353 = vmatpush1.msra.mxu0 0.0
      %3354 = vmatprep.subr.mxu0 0.0
      %3355 = vmatpush1.msra.mxu0 0.0
      %3356 = vmatprep.subr.mxu0 0.0
      %3357 = vmatpush1.msra.mxu0 0.0
      %3358 = vmatprep.subr.mxu0 0.0
      %3359 = vmatpush1.msra.mxu0 0.0
      %3360 = vmatprep.subr.mxu0 0.0
      %3361 = vmatpush1.msra.mxu0 0.0
      %3362 = vmatprep.mubr.f32.mxu0 0.0
      %3363 = vmatmul.mubr.f32.gmra.mrb[0].mxu0 %v3064
      %v3364 = vpop.f32.mrb[0].mxu0
      %v3365 = vadd.f32 %v3290, %v3364
      %v3366 = vpop.f32.mrb[0].mxu0
      %3367 = vmatprep.mubr.f32.mxu0 0.0
      %3368 = vmatmul.mubr.f32.gmra.mrb[0].mxu0 %v3067
      %v3369 = vpop.f32.mrb[0].mxu0
      %v3370 = vadd.f32 %v3295, %v3369
      %v3371 = vpop.f32.mrb[0].mxu0
      %3372 = vdwg.mxu0
      %v3373 = vmax.f32 %v3213, 0.0
      %v3374 = vmax.f32 %v3215, 0.0
      %v3375 = vmax.f32 %v3365, 0.0
      %v3376 = vmax.f32 %v3219, 0.0
      %v3377 = vmax.f32 %v3221, 0.0
      %v3378 = vmax.f32 %v3370, 0.0
      %v3379 = vmul.f32 %v3373, %v871
      %v3380 = vmul.f32 %v3374, %v875
      %v3381 = vmul.f32 %v3375, %v879
      %v3382 = vmul.f32 %v3376, %v871
      %v3383 = vmul.f32 %v3377, %v875
      %v3384 = vmul.f32 %v3378, %v879
      %3385 = vst [vmem:[#allocation2 + $0x8] sm:$0xff] %v3379
      %3386 = vst [vmem:[#allocation2 + $0x10] sm:$0xff] %v3380
      %3387 = vst.msk [vmem:[#allocation2 + $0x18] sm:$0xff] %vm897, %v3381
      %3388 = vst [vmem:[#allocation2 + $0x28] sm:$0xff] %v3382
      %3389 = vst [vmem:[#allocation2 + $0x30] sm:$0xff] %v3383
      %3390 = vst.msk [vmem:[#allocation2 + $0x38] sm:$0xff] %vm897, %v3384
      %v3391 = vld [vmem:[#allocation2] sm:$0xff]
      %v3392 = vld [vmem:[#allocation2 + $0x8] sm:$0xff]
      %v3393 = vld [vmem:[#allocation2 + $0x10] sm:$0xff]
      %v3394 = vld [vmem:[#allocation2 + $0x18] sm:$0xff]
      %v3395 = vld [vmem:[#allocation2 + $0x20] sm:$0xff]
      %v3396 = vld [vmem:[#allocation2 + $0x28] sm:$0xff]
      %v3397 = vld [vmem:[#allocation2 + $0x30] sm:$0xff]
      %v3398 = vld [vmem:[#allocation2 + $0x38] sm:$0xff]
      %3407 = vrot.lane.b32.xlu0 %v3391, 19
      %v3408 = vpop.permute.xlu0 %3407
      %3409 = vrot.lane.b32.xlu0 %v3392, 19
      %v3410 = vpop.permute.xlu0 %3409
      %3411 = vrot.lane.b32.xlu0 %v3393, 19
      %v3412 = vpop.permute.xlu0 %3411
      %3413 = vrot.lane.b32.xlu0 %v3394, 19
      %v3414 = vpop.permute.xlu0 %3413
      %3415 = vrot.lane.b32.xlu0 %v3395, 19
      %v3416 = vpop.permute.xlu0 %3415
      %3417 = vrot.lane.b32.xlu0 %v3396, 19
      %v3418 = vpop.permute.xlu0 %3417
      %3419 = vrot.lane.b32.xlu0 %v3397, 19
      %v3420 = vpop.permute.xlu0 %3419
      %3421 = vrot.lane.b32.xlu0 %v3398, 19
      %v3422 = vpop.permute.xlu0 %3421
      %v3423 = vsel %vm395, %v3408, %v3410
      %v3424 = vsel %vm395, %v3410, %v3412
      %v3425 = vsel %vm395, %v3412, %v3414
      %v3426 = vsel %vm395, %v3416, %v3418
      %v3427 = vsel %vm395, %v3418, %v3420
      %v3428 = vsel %vm395, %v3420, %v3422
      %3435 = vst [vmem:[#allocation3] sm:$0xff] %v3423
      %3436 = vst [vmem:[#allocation3 + $0x8] sm:$0xff] %v3424
      %3437 = vst.msk [vmem:[#allocation3 + $0x10] sm:$0xff] %vm897, %v3425
      %3438 = vst [vmem:[#allocation3 + $0x18] sm:$0xff] %v3426
      %3439 = vst [vmem:[#allocation3 + $0x20] sm:$0xff] %v3427
      %3440 = vst.msk [vmem:[#allocation3 + $0x28] sm:$0xff] %vm897, %v3428
      %v3441 = vld [vmem:[#allocation2] sm:$0xff]
      %v3442 = vld [vmem:[#allocation2 + $0x8] sm:$0xff]
      %v3443 = vld [vmem:[#allocation2 + $0x10] sm:$0xff]
      %v3444 = vld [vmem:[#allocation2 + $0x18] sm:$0xff]
      %v3445 = vld [vmem:[#allocation2 + $0x20] sm:$0xff]
      %v3446 = vld [vmem:[#allocation2 + $0x28] sm:$0xff]
      %v3447 = vld [vmem:[#allocation2 + $0x30] sm:$0xff]
      %v3448 = vld [vmem:[#allocation2 + $0x38] sm:$0xff]
      %3457 = vrot.lane.b32.xlu0 %v3441, 18
      %v3458 = vpop.permute.xlu0 %3457
      %3459 = vrot.lane.b32.xlu0 %v3442, 18
      %v3460 = vpop.permute.xlu0 %3459
      %3461 = vrot.lane.b32.xlu0 %v3443, 18
      %v3462 = vpop.permute.xlu0 %3461
      %3463 = vrot.lane.b32.xlu0 %v3444, 18
      %v3464 = vpop.permute.xlu0 %3463
      %3465 = vrot.lane.b32.xlu0 %v3445, 18
      %v3466 = vpop.permute.xlu0 %3465
      %3467 = vrot.lane.b32.xlu0 %v3446, 18
      %v3468 = vpop.permute.xlu0 %3467
      %3469 = vrot.lane.b32.xlu0 %v3447, 18
      %v3470 = vpop.permute.xlu0 %3469
      %3471 = vrot.lane.b32.xlu0 %v3448, 18
      %v3472 = vpop.permute.xlu0 %3471
      %v3473 = vsel %vm425, %v3458, %v3460
      %v3474 = vsel %vm425, %v3460, %v3462
      %v3475 = vsel %vm425, %v3462, %v3464
      %v3476 = vsel %vm425, %v3466, %v3468
      %v3477 = vsel %vm425, %v3468, %v3470
      %v3478 = vsel %vm425, %v3470, %v3472
      %3485 = vst [vmem:[#allocation3 + $0x30] sm:$0xff] %v3473
      %3486 = vst [vmem:[#allocation3 + $0x38] sm:$0xff] %v3474
      %3487 = vst.msk [vmem:[#allocation3 + $0x40] sm:$0xff] %vm897, %v3475
      %3488 = vst [vmem:[#allocation3 + $0x48] sm:$0xff] %v3476
      %3489 = vst [vmem:[#allocation3 + $0x50] sm:$0xff] %v3477
      %3490 = vst.msk [vmem:[#allocation3 + $0x58] sm:$0xff] %vm897, %v3478
      %v3491 = vld [vmem:[#allocation2] sm:$0xff]
      %v3492 = vld [vmem:[#allocation2 + $0x8] sm:$0xff]
      %v3493 = vld [vmem:[#allocation2 + $0x10] sm:$0xff]
      %v3494 = vld [vmem:[#allocation2 + $0x18] sm:$0xff]
      %v3495 = vld [vmem:[#allocation2 + $0x20] sm:$0xff]
      %v3496 = vld [vmem:[#allocation2 + $0x28] sm:$0xff]
      %v3497 = vld [vmem:[#allocation2 + $0x30] sm:$0xff]
      %v3498 = vld [vmem:[#allocation2 + $0x38] sm:$0xff]
      %3507 = vrot.lane.b32.xlu0 %v3491, 17
      %v3508 = vpop.permute.xlu0 %3507
      %3509 = vrot.lane.b32.xlu0 %v3492, 17
      %v3510 = vpop.permute.xlu0 %3509
      %3511 = vrot.lane.b32.xlu0 %v3493, 17
      %v3512 = vpop.permute.xlu0 %3511
      %3513 = vrot.lane.b32.xlu0 %v3494, 17
      %v3514 = vpop.permute.xlu0 %3513
      %3515 = vrot.lane.b32.xlu0 %v3495, 17
      %v3516 = vpop.permute.xlu0 %3515
      %3517 = vrot.lane.b32.xlu0 %v3496, 17
      %v3518 = vpop.permute.xlu0 %3517
      %3519 = vrot.lane.b32.xlu0 %v3497, 17
      %v3520 = vpop.permute.xlu0 %3519
      %3521 = vrot.lane.b32.xlu0 %v3498, 17
      %v3522 = vpop.permute.xlu0 %3521
      %v3523 = vsel %vm456, %v3508, %v3510
      %v3524 = vsel %vm456, %v3510, %v3512
      %v3525 = vsel %vm456, %v3512, %v3514
      %v3526 = vsel %vm456, %v3516, %v3518
      %v3527 = vsel %vm456, %v3518, %v3520
      %v3528 = vsel %vm456, %v3520, %v3522
      %3535 = vst [vmem:[#allocation3 + $0x60] sm:$0xff] %v3523
      %3536 = vst [vmem:[#allocation3 + $0x68] sm:$0xff] %v3524
      %3537 = vst.msk [vmem:[#allocation3 + $0x70] sm:$0xff] %vm897, %v3525
      %3538 = vst [vmem:[#allocation3 + $0x78] sm:$0xff] %v3526
      %3539 = vst [vmem:[#allocation3 + $0x80] sm:$0xff] %v3527
      %3540 = vst.msk [vmem:[#allocation3 + $0x88] sm:$0xff] %vm897, %v3528
      %v3541 = vld [vmem:[#allocation2] sm:$0xff]
      %v3542 = vld [vmem:[#allocation2 + $0x8] sm:$0xff]
      %v3543 = vld [vmem:[#allocation2 + $0x10] sm:$0xff]
      %v3544 = vld [vmem:[#allocation2 + $0x18] sm:$0xff]
      %v3545 = vld [vmem:[#allocation2 + $0x20] sm:$0xff]
      %v3546 = vld [vmem:[#allocation2 + $0x28] sm:$0xff]
      %v3547 = vld [vmem:[#allocation2 + $0x30] sm:$0xff]
      %v3548 = vld [vmem:[#allocation2 + $0x38] sm:$0xff]
      %3557 = vrot.lane.b32.xlu0 %v3541, 1
      %v3558 = vpop.permute.xlu0 %3557
      %3559 = vrot.lane.b32.xlu0 %v3542, 1
      %v3560 = vpop.permute.xlu0 %3559
      %3561 = vrot.lane.b32.xlu0 %v3543, 1
      %v3562 = vpop.permute.xlu0 %3561
      %3563 = vrot.lane.b32.xlu0 %v3544, 1
      %v3564 = vpop.permute.xlu0 %3563
      %3565 = vrot.lane.b32.xlu0 %v3545, 1
      %v3566 = vpop.permute.xlu0 %3565
      %3567 = vrot.lane.b32.xlu0 %v3546, 1
      %v3568 = vpop.permute.xlu0 %3567
      %3569 = vrot.lane.b32.xlu0 %v3547, 1
      %v3570 = vpop.permute.xlu0 %3569
      %3571 = vrot.lane.b32.xlu0 %v3548, 1
      %v3572 = vpop.permute.xlu0 %3571
      %v3573 = vsel %vm491, %v3558, %v3560
      %v3574 = vsel %vm491, %v3560, %v3562
      %v3575 = vsel %vm491, %v3562, %v3564
      %v3576 = vsel %vm491, %v3566, %v3568
      %v3577 = vsel %vm491, %v3568, %v3570
      %v3578 = vsel %vm491, %v3570, %v3572
      %3585 = vst [vmem:[#allocation3 + $0x90] sm:$0xff] %v3573
      %3586 = vst [vmem:[#allocation3 + $0x98] sm:$0xff] %v3574
      %3587 = vst.msk [vmem:[#allocation3 + $0xa0] sm:$0xff] %vm897, %v3575
      %3588 = vst [vmem:[#allocation3 + $0xa8] sm:$0xff] %v3576
      %3589 = vst [vmem:[#allocation3 + $0xb0] sm:$0xff] %v3577
      %3590 = vst.msk [vmem:[#allocation3 + $0xb8] sm:$0xff] %vm897, %v3578
      %v3591 = vld [vmem:[#allocation2 + $0x8] sm:$0xff]
      %v3592 = vld [vmem:[#allocation2 + $0x10] sm:$0xff]
      %v3593 = vld [vmem:[#allocation2 + $0x18] sm:$0xff]
      %v3594 = vld [vmem:[#allocation2 + $0x28] sm:$0xff]
      %v3595 = vld [vmem:[#allocation2 + $0x30] sm:$0xff]
      %v3596 = vld [vmem:[#allocation2 + $0x38] sm:$0xff]
      %3597 = vst [vmem:[#allocation3 + $0xc0] sm:$0xff] %v3591
      %3598 = vst [vmem:[#allocation3 + $0xc8] sm:$0xff] %v3592
      %3599 = vst.msk [vmem:[#allocation3 + $0xd0] sm:$0xff] %vm897, %v3593
      %3600 = vst [vmem:[#allocation3 + $0xd8] sm:$0xff] %v3594
      %3601 = vst [vmem:[#allocation3 + $0xe0] sm:$0xff] %v3595
      %3602 = vst.msk [vmem:[#allocation3 + $0xe8] sm:$0xff] %vm897, %v3596
      %v3603 = vld [vmem:[#allocation2 + $0x8] sm:$0xff]
      %v3604 = vld [vmem:[#allocation2 + $0x10] sm:$0xff]
      %v3605 = vld [vmem:[#allocation2 + $0x18] sm:$0xff]
      %v3606 = vld [vmem:[#allocation2 + $0x28] sm:$0xff]
      %v3607 = vld [vmem:[#allocation2 + $0x30] sm:$0xff]
      %v3608 = vld [vmem:[#allocation2 + $0x38] sm:$0xff]
      %3615 = vrot.lane.b32.xlu0 %v3603, 127
      %v3616 = vpop.permute.xlu0 %3615
      %3617 = vrot.lane.b32.xlu0 %v3604, 127
      %v3618 = vpop.permute.xlu0 %3617
      %3619 = vrot.lane.b32.xlu0 %v3605, 127
      %v3620 = vpop.permute.xlu0 %3619
      %3621 = vrot.lane.b32.xlu0 %v3606, 127
      %v3622 = vpop.permute.xlu0 %3621
      %3623 = vrot.lane.b32.xlu0 %v3607, 127
      %v3624 = vpop.permute.xlu0 %3623
      %3625 = vrot.lane.b32.xlu0 %v3608, 127
      %v3626 = vpop.permute.xlu0 %3625
      %v3627 = vsel %vm533, %v3616, %v3618
      %v3628 = vsel %vm533, %v3618, %v3620
      %v3629 = vsel %vm533, %v3622, %v3624
      %v3630 = vsel %vm533, %v3624, %v3626
      %3637 = vst [vmem:[#allocation3 + $0xf0] sm:$0xff] %v3627
      %3638 = vst [vmem:[#allocation3 + $0xf8] sm:$0xff] %v3628
      %3639 = vst.msk [vmem:[#allocation3 + $0x100] sm:$0xff] %vm897, %v3620
      %3640 = vst [vmem:[#allocation3 + $0x108] sm:$0xff] %v3629
      %3641 = vst [vmem:[#allocation3 + $0x110] sm:$0xff] %v3630
      %3642 = vst.msk [vmem:[#allocation3 + $0x118] sm:$0xff] %vm897, %v3626
      %v3643 = vld [vmem:[#allocation2 + $0x8] sm:$0xff]
      %v3644 = vld [vmem:[#allocation2 + $0x10] sm:$0xff]
      %v3645 = vld [vmem:[#allocation2 + $0x18] sm:$0xff]
      %v3646 = vld [vmem:[#allocation2 + $0x28] sm:$0xff]
      %v3647 = vld [vmem:[#allocation2 + $0x30] sm:$0xff]
      %v3648 = vld [vmem:[#allocation2 + $0x38] sm:$0xff]
      %3655 = vrot.lane.b32.xlu0 %v3643, 111
      %v3656 = vpop.permute.xlu0 %3655
      %3657 = vrot.lane.b32.xlu0 %v3644, 111
      %v3658 = vpop.permute.xlu0 %3657
      %3659 = vrot.lane.b32.xlu0 %v3645, 111
      %v3660 = vpop.permute.xlu0 %3659
      %3661 = vrot.lane.b32.xlu0 %v3646, 111
      %v3662 = vpop.permute.xlu0 %3661
      %3663 = vrot.lane.b32.xlu0 %v3647, 111
      %v3664 = vpop.permute.xlu0 %3663
      %3665 = vrot.lane.b32.xlu0 %v3648, 111
      %v3666 = vpop.permute.xlu0 %3665
      %v3667 = vsel %vm562, %v3656, %v3658
      %v3668 = vsel %vm562, %v3658, %v3660
      %v3669 = vsel %vm562, %v3662, %v3664
      %v3670 = vsel %vm562, %v3664, %v3666
      %3677 = vst [vmem:[#allocation3 + $0x120] sm:$0xff] %v3667
      %3678 = vst [vmem:[#allocation3 + $0x128] sm:$0xff] %v3668
      %3679 = vst.msk [vmem:[#allocation3 + $0x130] sm:$0xff] %vm897, %v3660
      %3680 = vst [vmem:[#allocation3 + $0x138] sm:$0xff] %v3669
      %3681 = vst [vmem:[#allocation3 + $0x140] sm:$0xff] %v3670
      %3682 = vst.msk [vmem:[#allocation3 + $0x148] sm:$0xff] %vm897, %v3666
      %v3683 = vld [vmem:[#allocation2 + $0x8] sm:$0xff]
      %v3684 = vld [vmem:[#allocation2 + $0x10] sm:$0xff]
      %v3685 = vld [vmem:[#allocation2 + $0x18] sm:$0xff]
      %v3686 = vld [vmem:[#allocation2 + $0x28] sm:$0xff]
      %v3687 = vld [vmem:[#allocation2 + $0x30] sm:$0xff]
      %v3688 = vld [vmem:[#allocation2 + $0x38] sm:$0xff]
      %3695 = vrot.lane.b32.xlu0 %v3683, 110
      %v3696 = vpop.permute.xlu0 %3695
      %3697 = vrot.lane.b32.xlu0 %v3684, 110
      %v3698 = vpop.permute.xlu0 %3697
      %3699 = vrot.lane.b32.xlu0 %v3685, 110
      %v3700 = vpop.permute.xlu0 %3699
      %3701 = vrot.lane.b32.xlu0 %v3686, 110
      %v3702 = vpop.permute.xlu0 %3701
      %3703 = vrot.lane.b32.xlu0 %v3687, 110
      %v3704 = vpop.permute.xlu0 %3703
      %3705 = vrot.lane.b32.xlu0 %v3688, 110
      %v3706 = vpop.permute.xlu0 %3705
      %v3707 = vsel %vm587, %v3696, %v3698
      %v3708 = vsel %vm587, %v3698, %v3700
      %v3709 = vsel %vm587, %v3702, %v3704
      %v3710 = vsel %vm587, %v3704, %v3706
      %3717 = vst [vmem:[#allocation3 + $0x150] sm:$0xff] %v3707
      %3718 = vst [vmem:[#allocation3 + $0x158] sm:$0xff] %v3708
      %3719 = vst.msk [vmem:[#allocation3 + $0x160] sm:$0xff] %vm897, %v3700
      %3720 = vst [vmem:[#allocation3 + $0x168] sm:$0xff] %v3709
      %3721 = vst [vmem:[#allocation3 + $0x170] sm:$0xff] %v3710
      %3722 = vst.msk [vmem:[#allocation3 + $0x178] sm:$0xff] %vm897, %v3706
      %v3723 = vld [vmem:[#allocation2 + $0x8] sm:$0xff]
      %v3724 = vld [vmem:[#allocation2 + $0x10] sm:$0xff]
      %v3725 = vld [vmem:[#allocation2 + $0x18] sm:$0xff]
      %v3726 = vld [vmem:[#allocation2 + $0x28] sm:$0xff]
      %v3727 = vld [vmem:[#allocation2 + $0x30] sm:$0xff]
      %v3728 = vld [vmem:[#allocation2 + $0x38] sm:$0xff]
      %3735 = vrot.lane.b32.xlu0 %v3723, 109
      %v3736 = vpop.permute.xlu0 %3735
      %3737 = vrot.lane.b32.xlu0 %v3724, 109
      %v3738 = vpop.permute.xlu0 %3737
      %3739 = vrot.lane.b32.xlu0 %v3725, 109
      %v3740 = vpop.permute.xlu0 %3739
      %3741 = vrot.lane.b32.xlu0 %v3726, 109
      %v3742 = vpop.permute.xlu0 %3741
      %3743 = vrot.lane.b32.xlu0 %v3727, 109
      %v3744 = vpop.permute.xlu0 %3743
      %3745 = vrot.lane.b32.xlu0 %v3728, 109
      %v3746 = vpop.permute.xlu0 %3745
      %v3747 = vsel %vm609, %v3736, %v3738
      %v3748 = vsel %vm609, %v3738, %v3740
      %v3749 = vsel %vm609, %v3742, %v3744
      %v3750 = vsel %vm609, %v3744, %v3746
      %3757 = vst [vmem:[#allocation3 + $0x180] sm:$0xff] %v3747
      %3758 = vst [vmem:[#allocation3 + $0x188] sm:$0xff] %v3748
      %3759 = vst.msk [vmem:[#allocation3 + $0x190] sm:$0xff] %vm897, %v3740
      %3760 = vst [vmem:[#allocation3 + $0x198] sm:$0xff] %v3749
      %3761 = vst [vmem:[#allocation3 + $0x1a0] sm:$0xff] %v3750
      %3762 = vst.msk [vmem:[#allocation3 + $0x1a8] sm:$0xff] %vm897, %v3746
      %v3763 = vld [vmem:[%s8] sm:$0x77]
      %v3764 = vld [vmem:[#allocation3] sm:$0xff]
      %v3765 = vld [vmem:[#allocation3 + $0x8] sm:$0xff]
      %v3766 = vld [vmem:[#allocation3 + $0x10] sm:$0xff]
      %v3767 = vld [vmem:[#allocation3 + $0x18] sm:$0xff]
      %v3768 = vld [vmem:[#allocation3 + $0x20] sm:$0xff]
      %v3769 = vld [vmem:[#allocation3 + $0x28] sm:$0xff]
      %v3770 = vld [vmem:[#allocation3 + $0x30] sm:$0xff]
      %v3771 = vld [vmem:[#allocation3 + $0x38] sm:$0xff]
      %v3772 = vld [vmem:[#allocation3 + $0x40] sm:$0xff]
      %v3773 = vld [vmem:[#allocation3 + $0x48] sm:$0xff]
      %v3774 = vld [vmem:[#allocation3 + $0x50] sm:$0xff]
      %v3775 = vld [vmem:[#allocation3 + $0x58] sm:$0xff]
      %v3776 = vld [vmem:[#allocation3 + $0x60] sm:$0xff]
      %v3777 = vld [vmem:[#allocation3 + $0x68] sm:$0xff]
      %v3778 = vld [vmem:[#allocation3 + $0x70] sm:$0xff]
      %v3779 = vld [vmem:[#allocation3 + $0x78] sm:$0xff]
      %v3780 = vld [vmem:[#allocation3 + $0x80] sm:$0xff]
      %v3781 = vld [vmem:[#allocation3 + $0x88] sm:$0xff]
      %v3782 = vld [vmem:[#allocation3 + $0x90] sm:$0xff]
      %v3783 = vld [vmem:[#allocation3 + $0x98] sm:$0xff]
      %v3784 = vld [vmem:[#allocation3 + $0xa0] sm:$0xff]
      %v3785 = vld [vmem:[#allocation3 + $0xa8] sm:$0xff]
      %v3786 = vld [vmem:[#allocation3 + $0xb0] sm:$0xff]
      %v3787 = vld [vmem:[#allocation3 + $0xb8] sm:$0xff]
      %v3788 = vld [vmem:[#allocation3 + $0xc0] sm:$0xff]
      %v3789 = vld [vmem:[#allocation3 + $0xc8] sm:$0xff]
      %v3790 = vld [vmem:[#allocation3 + $0xd0] sm:$0xff]
      %v3791 = vld [vmem:[#allocation3 + $0xd8] sm:$0xff]
      %v3792 = vld [vmem:[#allocation3 + $0xe0] sm:$0xff]
      %v3793 = vld [vmem:[#allocation3 + $0xe8] sm:$0xff]
      %v3794 = vld [vmem:[#allocation3 + $0xf0] sm:$0xff]
      %v3795 = vld [vmem:[#allocation3 + $0xf8] sm:$0xff]
      %v3796 = vld [vmem:[#allocation3 + $0x100] sm:$0xff]
      %v3797 = vld [vmem:[#allocation3 + $0x108] sm:$0xff]
      %v3798 = vld [vmem:[#allocation3 + $0x110] sm:$0xff]
      %v3799 = vld [vmem:[#allocation3 + $0x118] sm:$0xff]
      %v3800 = vld [vmem:[#allocation3 + $0x120] sm:$0xff]
      %v3801 = vld [vmem:[#allocation3 + $0x128] sm:$0xff]
      %v3802 = vld [vmem:[#allocation3 + $0x130] sm:$0xff]
      %v3803 = vld [vmem:[#allocation3 + $0x138] sm:$0xff]
      %v3804 = vld [vmem:[#allocation3 + $0x140] sm:$0xff]
      %v3805 = vld [vmem:[#allocation3 + $0x148] sm:$0xff]
      %v3806 = vld [vmem:[#allocation3 + $0x150] sm:$0xff]
      %v3807 = vld [vmem:[#allocation3 + $0x158] sm:$0xff]
      %v3808 = vld [vmem:[#allocation3 + $0x160] sm:$0xff]
      %v3809 = vld [vmem:[#allocation3 + $0x168] sm:$0xff]
      %v3810 = vld [vmem:[#allocation3 + $0x170] sm:$0xff]
      %v3811 = vld [vmem:[#allocation3 + $0x178] sm:$0xff]
      %v3812 = vld [vmem:[#allocation3 + $0x180] sm:$0xff]
      %v3813 = vld [vmem:[#allocation3 + $0x188] sm:$0xff]
      %v3814 = vld [vmem:[#allocation3 + $0x190] sm:$0xff]
      %v3815 = vld [vmem:[#allocation3 + $0x198] sm:$0xff]
      %v3816 = vld [vmem:[#allocation3 + $0x1a0] sm:$0xff]
      %v3817 = vld [vmem:[#allocation3 + $0x1a8] sm:$0xff]
      %v3818 = vld [vmem:[%s9] sm:$0x7]
      %3820 = vset.pattern.permute.xlu0 0
      %3821 = vperm.xlu0 %3820, %v3818
      %v3822 = vpop.permute.xlu0 %3821
      %v3825 = vcombine.high %v3763, %v3763
      %vm3826 = vcmask 130048
      %v3827 = vsel %vm3826, %v3825, 0
      %3829 = vmatprep.subr.mxu0 %v3765
      %3830 = vmatpush1.msra.mxu0 %v3764
      %3831 = vmatprep.subr.mxu0 %v3768
      %3832 = vmatpush1.msra.mxu0 %v3767
      %3833 = vmatprep.subr.mxu0 %v3771
      %3834 = vmatpush1.msra.mxu0 %v3770
      %3835 = vmatprep.subr.mxu0 %v3774
      %3836 = vmatpush1.msra.mxu0 %v3773
      %3837 = vmatprep.subr.mxu0 %v3777
      %3838 = vmatpush1.msra.mxu0 %v3776
      %3839 = vmatprep.subr.mxu0 %v3780
      %3840 = vmatpush1.msra.mxu0 %v3779
      %3841 = vmatprep.subr.mxu0 %v3783
      %3842 = vmatpush1.msra.mxu0 %v3782
      %3843 = vmatprep.subr.mxu0 %v3786
      %3844 = vmatpush1.msra.mxu0 %v3785
      %3845 = vmatprep.subr.mxu0 %v3789
      %3846 = vmatpush1.msra.mxu0 %v3788
      %3847 = vmatprep.subr.mxu0 %v3792
      %3848 = vmatpush1.msra.mxu0 %v3791
      %3849 = vmatprep.subr.mxu0 %v3795
      %3850 = vmatpush1.msra.mxu0 %v3794
      %3851 = vmatprep.subr.mxu0 %v3798
      %3852 = vmatpush1.msra.mxu0 %v3797
      %3853 = vmatprep.subr.mxu0 %v3801
      %3854 = vmatpush1.msra.mxu0 %v3800
      %3855 = vmatprep.subr.mxu0 %v3804
      %3856 = vmatpush1.msra.mxu0 %v3803
      %3857 = vmatprep.subr.mxu0 %v3807
      %3858 = vmatpush1.msra.mxu0 %v3806
      %3859 = vmatprep.subr.mxu0 %v3810
      %3860 = vmatpush1.msra.mxu0 %v3809
      %3861 = vmatprep.subr.mxu0 %v3813
      %3862 = vmatpush1.msra.mxu0 %v3812
      %3863 = vmatprep.subr.mxu0 %v3816
      %3864 = vmatpush1.msra.mxu0 %v3815
      %3865 = vmatprep.subr.mxu0 0.0
      %3866 = vmatpush1.msra.mxu0 0.0
      %3867 = vmatprep.subr.mxu0 0.0
      %3868 = vmatpush1.msra.mxu0 0.0
      %3869 = vmatprep.subr.mxu0 0.0
      %3870 = vmatpush1.msra.mxu0 0.0
      %3871 = vmatprep.subr.mxu0 0.0
      %3872 = vmatpush1.msra.mxu0 0.0
      %3873 = vmatprep.subr.mxu0 0.0
      %3874 = vmatpush1.msra.mxu0 0.0
      %3875 = vmatprep.subr.mxu0 0.0
      %3876 = vmatpush1.msra.mxu0 0.0
      %3877 = vmatprep.subr.mxu0 0.0
      %3878 = vmatpush1.msra.mxu0 0.0
      %3879 = vmatprep.subr.mxu0 0.0
      %3880 = vmatpush1.msra.mxu0 0.0
      %3881 = vmatprep.subr.mxu0 0.0
      %3882 = vmatpush1.msra.mxu0 0.0
      %3883 = vmatprep.subr.mxu0 0.0
      %3884 = vmatpush1.msra.mxu0 0.0
      %3885 = vmatprep.subr.mxu0 0.0
      %3886 = vmatpush1.msra.mxu0 0.0
      %3887 = vmatprep.subr.mxu0 0.0
      %3888 = vmatpush1.msra.mxu0 0.0
      %3889 = vmatprep.subr.mxu0 0.0
      %3890 = vmatpush1.msra.mxu0 0.0
      %3891 = vmatprep.subr.mxu0 0.0
      %3892 = vmatpush1.msra.mxu0 0.0
      %3893 = vmatprep.mubr.f32.mxu0 %v3827
      %3894 = vmatmul.mubr.f32.gmra.mrb[0].mxu0 %v3763
      %v3895 = vpop.f32.mrb[0].mxu0
      %v3896 = vadd.f32 %v3822, %v3895
      %v3897 = vpop.f32.mrb[0].mxu0
      %v3898 = vadd.f32 %v3822, %v3897
      %3899 = vdwg.mxu0
      %3900 = vmatprep.subr.mxu0 0.0
      %3901 = vmatpush1.msra.mxu0 %v3766
      %3902 = vmatprep.subr.mxu0 0.0
      %3903 = vmatpush1.msra.mxu0 %v3769
      %3904 = vmatprep.subr.mxu0 0.0
      %3905 = vmatpush1.msra.mxu0 %v3772
      %3906 = vmatprep.subr.mxu0 0.0
      %3907 = vmatpush1.msra.mxu0 %v3775
      %3908 = vmatprep.subr.mxu0 0.0
      %3909 = vmatpush1.msra.mxu0 %v3778
      %3910 = vmatprep.subr.mxu0 0.0
      %3911 = vmatpush1.msra.mxu0 %v3781
      %3912 = vmatprep.subr.mxu0 0.0
      %3913 = vmatpush1.msra.mxu0 %v3784
      %3914 = vmatprep.subr.mxu0 0.0
      %3915 = vmatpush1.msra.mxu0 %v3787
      %3916 = vmatprep.subr.mxu0 0.0
      %3917 = vmatpush1.msra.mxu0 %v3790
      %3918 = vmatprep.subr.mxu0 0.0
      %3919 = vmatpush1.msra.mxu0 %v3793
      %3920 = vmatprep.subr.mxu0 0.0
      %3921 = vmatpush1.msra.mxu0 %v3796
      %3922 = vmatprep.subr.mxu0 0.0
      %3923 = vmatpush1.msra.mxu0 %v3799
      %3924 = vmatprep.subr.mxu0 0.0
      %3925 = vmatpush1.msra.mxu0 %v3802
      %3926 = vmatprep.subr.mxu0 0.0
      %3927 = vmatpush1.msra.mxu0 %v3805
      %3928 = vmatprep.subr.mxu0 0.0
      %3929 = vmatpush1.msra.mxu0 %v3808
      %3930 = vmatprep.subr.mxu0 0.0
      %3931 = vmatpush1.msra.mxu0 %v3811
      %3932 = vmatprep.subr.mxu0 0.0
      %3933 = vmatpush1.msra.mxu0 %v3814
      %3934 = vmatprep.subr.mxu0 0.0
      %3935 = vmatpush1.msra.mxu0 %v3817
      %3936 = vmatprep.subr.mxu0 0.0
      %3937 = vmatpush1.msra.mxu0 0.0
      %3938 = vmatprep.subr.mxu0 0.0
      %3939 = vmatpush1.msra.mxu0 0.0
      %3940 = vmatprep.subr.mxu0 0.0
      %3941 = vmatpush1.msra.mxu0 0.0
      %3942 = vmatprep.subr.mxu0 0.0
      %3943 = vmatpush1.msra.mxu0 0.0
      %3944 = vmatprep.subr.mxu0 0.0
      %3945 = vmatpush1.msra.mxu0 0.0
      %3946 = vmatprep.subr.mxu0 0.0
      %3947 = vmatpush1.msra.mxu0 0.0
      %3948 = vmatprep.subr.mxu0 0.0
      %3949 = vmatpush1.msra.mxu0 0.0
      %3950 = vmatprep.subr.mxu0 0.0
      %3951 = vmatpush1.msra.mxu0 0.0
      %3952 = vmatprep.subr.mxu0 0.0
      %3953 = vmatpush1.msra.mxu0 0.0
      %3954 = vmatprep.subr.mxu0 0.0
      %3955 = vmatpush1.msra.mxu0 0.0
      %3956 = vmatprep.subr.mxu0 0.0
      %3957 = vmatpush1.msra.mxu0 0.0
      %3958 = vmatprep.subr.mxu0 0.0
      %3959 = vmatpush1.msra.mxu0 0.0
      %3960 = vmatprep.subr.mxu0 0.0
      %3961 = vmatpush1.msra.mxu0 0.0
      %3962 = vmatprep.subr.mxu0 0.0
      %3963 = vmatpush1.msra.mxu0 0.0
      %3964 = vmatprep.mubr.f32.mxu0 %v3827
      %3965 = vmatmul.mubr.f32.gmra.mrb[0].mxu0 %v3763
      %v3966 = vpop.f32.mrb[0].mxu0
      %v3967 = vadd.f32 %v3822, %v3966
      %v3968 = vpop.f32.mrb[0].mxu0
      %3969 = vdwg.mxu0
      %v3970 = vsub.f32 0.0, %v3896
      %v3971 = vsub.f32 0.0, %v3898
      %v3972 = vsub.f32 0.0, %v3967
      %v3973 = vmul.f32 %v3970, 1.442695
      %v3974 = vpow.pop %v3973
      %v3975 = vmul.f32 %v3971, 1.442695
      %v3976 = vpow.pop %v3975
      %v3977 = vmul.f32 %v3972, 1.442695
      %v3978 = vpow.pop %v3977
      %v3979 = vadd.f32 %v3974, 1.0
      %v3980 = vadd.f32 %v3976, 1.0
      %v3981 = vadd.f32 %v3978, 1.0
      %v3982 = vrcp.pop %v3979
      %v3983 = vmul.f32 1.0, %v3982
      %v3984 = vrcp.pop %v3980
      %v3985 = vmul.f32 1.0, %v3984
      %v3986 = vrcp.pop %v3981
      %v3987 = vmul.f32 1.0, %v3986
      %v3990 = vcombine.low %v3983, %v3985
      %3992 = vst [vmem:[%s359] sm:$0x77] %v3990
      %3993 = vst.msk [vmem:[%s359 + $0x8] sm:$0x7] %vm377, %v3987
      %p3994 = scmp.lt.s32.totalorder %s21, 1
      %s3995 = scalar_select %p3994, %s21, 1
      %s3996 = smul.addr %s3995, 3
      %s3997 = smul.addr %s3996, 4
      %s3998 = scalar_lea.vmem %s10, %s3997
      // Predicated region
      $region61: #{image_enhancement_nn.1} parent=59 // pred_check
        %p3999 = pneg %p254
      $region62: #{image_enhancement_nn.1} parent=59 // pred_check_branch
        %4001 = sbr.rel (%p3999) target = $region64
      $region63: #{image_enhancement_nn.1} parent=59 // pred_region
        _
      $region64: #{image_enhancement_nn.1} parent=59 // pred_fallthru
        _
    $region60: #{image_enhancement_nn.1} parent=5 // pred_fallthru
      _
    %p4002 = scmp.le.s32.totalorder 2, %s16
    // Predicated region
    $region65: #{image_enhancement_nn.1} parent=5 // pred_check
      %p4003 = pneg %p4002
    $region66: #{image_enhancement_nn.1} parent=5 // pred_check_branch
      %4005 = sbr.rel (%p4003) target = $region68
    $region67: #{image_enhancement_nn.1} parent=5 // pred_region
      %s4006 = ssub.s32 %s16, 2
      // Predicated region
      $region69: #{image_enhancement_nn.1} parent=67 // pred_check
        %p4007 = pneg %p260
      $region70: #{image_enhancement_nn.1} parent=67 // pred_check_branch
        %4009 = sbr.rel (%p4007) target = $region72
      $region71: #{image_enhancement_nn.1} parent=67 // pred_region
        %p4010 = scmp.lt.s32.totalorder %s22, 1
        %s4011 = scalar_select %p4010, %s22, 1
        %s4012 = smul.addr %s4011, 3
        %s4013 = smul.addr %s4012, 4
        %s4014 = scalar_lea.vmem %s10, %s4013
      $region72: #{image_enhancement_nn.1} parent=67 // pred_fallthru
        _
    $region68: #{image_enhancement_nn.1} parent=5 // pred_fallthru
      _
  $region6: #{image_enhancement_nn.1} parent=0 // loop_footer
    %s20 = sadd.s32 1, %s16
  $region7: #{image_enhancement_nn.1} parent=0 // loop_footer_branch
    %15 = sbr.rel target = $region3
  $region8: #{image_enhancement_nn.1} parent=0 // loop_exit
    _

</llo_original>
